<compile_context>
chip_gen: v7x
topology: tpu7x:2x2x1
jax: 0.10.0
libtpu: 0.0.40
codegen_flags: <defaults>
</compile_context>

<pallas_src>
import functools
import math

import jax
import jax.numpy as jnp
from jax import lax
from jax.experimental import pallas as pl
from jax.experimental.pallas import tpu as pltpu

_LN_EPS = 1e-5  # torch.nn.LayerNorm default


def _layernorm(z, g, b):
    mu = jnp.mean(z, axis=-1, keepdims=True)
    var = jnp.mean((z - mu) * (z - mu), axis=-1, keepdims=True)
    return (z - mu) * lax.rsqrt(var + _LN_EPS) * g + b


def _encoder_layer_kernel(
    x_ref,
    wq_ref, wk_ref, wv_ref, bq_ref, bk_ref, bv_ref,
    wo_ref, bo_ref,
    g1_ref, b1_ref, w1_ref, bb1_ref, w2_ref, bb2_ref, g2_ref, b2_ref,
    *refs, n_head, with_att,
):
    if with_att:
        y_ref, att_ref, kh_ref, vh_ref = refs
    else:
        y_ref, kh_ref, vh_ref = refs
        att_ref = None

    qi = pl.program_id(1)
    _, S, D = x_ref.shape          # full sequence block, resident across qi
    TQ = y_ref.shape[1]
    hd = D // n_head

    # ---- K/V projection + head relayout: once per batch row, cached in VMEM ----
    @pl.when(qi == 0)
    def _():
        xs = x_ref[0]                                                # (S, D)
        xs_b = xs if xs.dtype == jnp.bfloat16 else xs.astype(jnp.bfloat16)
        k = jnp.dot(xs_b, wk_ref[...], preferred_element_type=jnp.float32) + bk_ref[...]
        v = jnp.dot(xs_b, wv_ref[...], preferred_element_type=jnp.float32) + bv_ref[...]
        kh_ref[...] = jnp.swapaxes(k.astype(jnp.bfloat16).reshape(S, n_head, hd), 0, 1)
        vh_ref[...] = jnp.swapaxes(v.astype(jnp.bfloat16).reshape(S, n_head, hd), 0, 1)

    # ---- query rows of this tile, sliced from the resident full-seq block -----
    row0 = pl.multiple_of(qi * TQ, TQ)
    xq = x_ref[0, pl.ds(row0, TQ), :]                                # (TQ, D)
    xq_f = xq if xq.dtype == jnp.float32 else xq.astype(jnp.float32)   # residual
    xq_b = xq if xq.dtype == jnp.bfloat16 else xq.astype(jnp.bfloat16)  # MXU operand

    # 1/sqrt(hd) is folded into wq / bq on the host.
    q = jnp.dot(xq_b, wq_ref[...], preferred_element_type=jnp.float32) + bq_ref[...]
    qh = jnp.swapaxes(q.astype(jnp.bfloat16).reshape(TQ, n_head, hd), 0, 1)  # (H,TQ,hd)

    kh = kh_ref[...]                                                 # (H, S, hd) bf16
    vh = vh_ref[...]

    s = jnp.einsum("hqd,hkd->hqk", qh, kh, preferred_element_type=jnp.float32)
    s = s - jnp.max(s, axis=-1, keepdims=True)
    p = jnp.exp(s)                                                   # f32
    inv = pl.reciprocal(jnp.sum(p, axis=-1, keepdims=True), approx=True)
    p_b = p.astype(jnp.bfloat16) * inv.astype(jnp.bfloat16)          # normalized, bf16

    if with_att:
        att_ref[0] = p_b.astype(att_ref.dtype)   # only when requested (att_map=True)

    ctx = jnp.einsum("hqk,hkd->hqd", p_b, vh, preferred_element_type=jnp.float32)
    ctx = jnp.swapaxes(ctx, 0, 1).reshape(TQ, D)

    attn_out = jnp.dot(ctx.astype(jnp.bfloat16), wo_ref[...],
                       preferred_element_type=jnp.float32) + bo_ref[...]

    # dropout1 -> identity (eval); residual + LayerNorm1 (f32)
    x1 = _layernorm(attn_out + xq_f, g1_ref[...], b1_ref[...])

    # --- PositionwiseFeedForward: linear1 -> GELU(tanh) -> (dropout=id) -> linear2
    h1 = jnp.dot(x1.astype(jnp.bfloat16), w1_ref[...],
                 preferred_element_type=jnp.float32) + bb1_ref[...]
    h1 = jax.nn.gelu(h1, approximate=True)       # tanh GELU -> EUP slot
    h2 = jnp.dot(h1.astype(jnp.bfloat16), w2_ref[...],
                 preferred_element_type=jnp.float32) + bb2_ref[...]

    # dropout2 -> identity; residual + LayerNorm2
    y = _layernorm(h2 + x1, g2_ref[...], b2_ref[...])
    y_ref[0] = y.astype(y_ref.dtype)


def _vmem_capacity_bytes():
    try:
        return int(pltpu.get_tpu_info().vmem_capacity_bytes)
    except Exception:
        return 64 * 1024 * 1024   # conservative (v7x-sized) default


def _auto_q_tile(vmem_cap):
    try:
        kind = jax.devices()[0].device_kind.lower()
    except Exception:
        kind = ""
    # v6e-class: 128 MiB VMEM and 256-wide MXU -> 256-row tiles fill the M axis.
    # v5e keeps 128 (4x128^2 MXU); v7x keeps 128 (64 MiB VMEM is the binding limit).
    if vmem_cap >= (96 << 20) and "v5" not in kind:
        return 256
    return 128


def _weight_spec(a, single_buffer):
    nd = a.ndim
    idx = lambda b, qi: (0,) * nd
    if single_buffer and hasattr(pl, "Buffered"):
        try:
            # Constant index_map: double-buffering buys nothing -> single-buffer.
            return pl.BlockSpec(a.shape, idx, pipeline_mode=pl.Buffered(1))
        except TypeError:
            pass
    return pl.BlockSpec(a.shape, idx)


def encoder_layer(x, params, n_head, *, return_att=False, q_tile=None,
                  att_dtype=jnp.bfloat16, single_buffer_weights=True):
    """EncoderLayer.forward.  Returns y (B,S,D); with return_att=True also returns
    att (B, n_head, S, S) (need_weights=True, average_attn_weights=False)."""
    B, S, D = x.shape
    assert D % n_head == 0
    hd = D // n_head
    scale = 1.0 / math.sqrt(hd)

    # glue: torch (out,in) weights -> (in,out) bf16 for the MXU; biases / LN f32 (1,N).
    in_w = params["in_proj_weight"]
    in_b = params["in_proj_bias"]
    wq = (in_w[0:D].T * scale).astype(jnp.bfloat16)        # 1/sqrt(hd) folded in
    wk = in_w[D:2 * D].T.astype(jnp.bfloat16)
    wv = in_w[2 * D:3 * D].T.astype(jnp.bfloat16)
    bq = (in_b[0:D] * scale)[None, :].astype(jnp.float32)
    bk = in_b[D:2 * D][None, :].astype(jnp.float32)
    bv = in_b[2 * D:3 * D][None, :].astype(jnp.float32)
    wo = params["out_proj_weight"].T.astype(jnp.bfloat16)
    bo = params["out_proj_bias"][None, :].astype(jnp.float32)
    g1 = params["ln1_gamma"][None, :].astype(jnp.float32)
    b1 = params["ln1_beta"][None, :].astype(jnp.float32)
    w1 = params["ffn_w1"].T.astype(jnp.bfloat16)
    bb1 = params["ffn_b1"][None, :].astype(jnp.float32)
    w2 = params["ffn_w2"].T.astype(jnp.bfloat16)
    bb2 = params["ffn_b2"][None, :].astype(jnp.float32)
    g2 = params["ln2_gamma"][None, :].astype(jnp.float32)
    b2 = params["ln2_beta"][None, :].astype(jnp.float32)
    hid = w1.shape[1]

    vmem_cap = _vmem_capacity_bytes()
    if q_tile is None:
        q_tile = _auto_q_tile(vmem_cap)
    # grid = (B, S // TQ); qi is "arbitrary" so the K/V cache is reused across tiles.
    # TODO(synk): flash-style K/V inner loop for very long S (bounds the (H,TQ,S)
    # scores and the (H,S,hd) cache within v7x's 64 MiB VMEM).
    TQ = q_tile if (S > q_tile and S % q_tile == 0) else S
    n_q = S // TQ

    weights = [wq, wk, wv, bq, bk, bv, wo, bo, g1, b1, w1, bb1, w2, bb2, g2, b2]

    in_specs = [pl.BlockSpec((1, S, D), lambda b, qi: (b, 0, 0))]   # resident per b
    in_specs += [_weight_spec(a, single_buffer_weights) for a in weights]

    out_shapes = [jax.ShapeDtypeStruct((B, S, D), x.dtype)]
    out_specs = [pl.BlockSpec((1, TQ, D), lambda b, qi: (b, qi, 0))]
    if return_att:
        out_shapes.append(jax.ShapeDtypeStruct((B, n_head, S, S), att_dtype))
        out_specs.append(pl.BlockSpec((1, n_head, TQ, S), lambda b, qi: (b, 0, qi, 0)))

    scratch_shapes = [pltpu.VMEM((n_head, S, hd), jnp.bfloat16),    # K cache (head-major)
                      pltpu.VMEM((n_head, S, hd), jnp.bfloat16)]    # V cache

    # VMEM budget: pipeline buffers + resident weights + K/V cache + live f32
    # intermediates, with headroom, capped at 85% of the chip's physical VMEM.
    x_isz = x.dtype.itemsize
    att_isz = jnp.dtype(att_dtype).itemsize
    blk_x = 2 * S * D * x_isz                                       # double-buffered
    blk_w = sum(int(a.size) * a.dtype.itemsize for a in weights)
    if not single_buffer_weights:
        blk_w *= 2
    blk_y = 2 * TQ * D * x_isz
    blk_att = 2 * n_head * TQ * S * att_isz if return_att else 0
    kv_cache = 2 * n_head * S * hd * 2                              # bf16 scratch
    live = 4 * (2 * S * D + 2 * n_head * TQ * S + 2 * TQ * hid + 8 * TQ * D)
    live += 2 * (n_head * TQ * S + 2 * S * D)                       # bf16 copies
    need = blk_x + blk_w + blk_y + blk_att + kv_cache + live
    vmem_limit = int(min(max(int(need * 1.25), 32 << 20), int(0.85 * vmem_cap)))
    vmem_limit = max(vmem_limit, 16 << 20)

    kernel = functools.partial(_encoder_layer_kernel, n_head=n_head,
                               with_att=return_att)
    outs = pl.pallas_call(
        kernel,
        out_shape=tuple(out_shapes),
        grid_spec=pltpu.PrefetchScalarGridSpec(
            num_scalar_prefetch=0,
            grid=(B, n_q),
            in_specs=in_specs,
            out_specs=tuple(out_specs),
            scratch_shapes=scratch_shapes,
        ),
        compiler_params=pltpu.CompilerParams(
            # b is the megacore axis; qi must stay "arbitrary" for the K/V cache.
            # TODO(synk): if B == 1 on v7x (2 TCs), add a head-group parallel axis.
            dimension_semantics=("parallel", "arbitrary"),
            vmem_limit_bytes=vmem_limit,
        ),
    )(x, *weights)

    if return_att:
        return outs[0], outs[1]
    return outs[0]


def init_params(key, d_model, ffn_hidden):
    ks = jax.random.split(key, 7)
    s = 0.02
    f32 = jnp.float32
    return {
        # nn.MultiheadAttention
        "in_proj_weight": jax.random.normal(ks[0], (3 * d_model, d_model), f32) * s,
        "in_proj_bias": jax.random.normal(ks[1], (3 * d_model,), f32) * s,
        "out_proj_weight": jax.random.normal(ks[2], (d_model, d_model), f32) * s,
        "out_proj_bias": jnp.zeros((d_model,), f32),
        # LayerNorms
        "ln1_gamma": jnp.ones((d_model,), f32),
        "ln1_beta": jnp.zeros((d_model,), f32),
        "ln2_gamma": jnp.ones((d_model,), f32),
        "ln2_beta": jnp.zeros((d_model,), f32),
        # PositionwiseFeedForward (torch nn.Linear layout: (out, in))
        "ffn_w1": jax.random.normal(ks[3], (ffn_hidden, d_model), f32) * s,
        "ffn_b1": jax.random.normal(ks[4], (ffn_hidden,), f32) * s,
        "ffn_w2": jax.random.normal(ks[5], (d_model, ffn_hidden), f32) * s,
        "ffn_b2": jax.random.normal(ks[6], (d_model,), f32) * s,
    }


if __name__ == "__main__":
    B, S, D, H, HID = 2, 8, 32, 4, 64     # batch, seq, d_model, n_head, ffn_hidden
    key = jax.random.PRNGKey(0)
    kx, kp = jax.random.split(key)
    x = jax.random.normal(kx, (B, S, D), jnp.float32)
    params = init_params(kp, D, HID)

    def run(**kw):
        try:
            return encoder_layer(x, params, n_head=H, **kw)
        except Exception:
            # Compatibility fallback: retry with default double-buffered weights
            # if this JAX build rejects single-buffered (Buffered(1)) BlockSpecs.
            return encoder_layer(x, params, n_head=H, single_buffer_weights=False, **kw)

    # hot path: EncoderLayer.forward(x, att_map=False) -> y only (no att HBM write)
    y = run()
    # att_map=True path -> (y, att)
    y_att, att = run(return_att=True)

    jax.block_until_ready((y, y_att, att))
    assert y.shape == (B, S, D)
    assert y_att.shape == (B, S, D)
    assert att.shape == (B, H, S, S)
    assert bool(jnp.all(jnp.isfinite(y)))
    assert bool(jnp.all(jnp.isfinite(att.astype(jnp.float32))))
    print("KERNEL_OK")
</pallas_src>

<mosaic_0001>
module attributes {stable_mosaic.version = 11 : i64} {
  func.func @_encoder_layer_kernel(%arg0: i32, %arg1: i32, %arg2: memref<1x8x32xf32, #tpu.memory_space<vmem>>, %arg3: memref<32x32xbf16, #tpu.memory_space<vmem>>, %arg4: memref<32x32xbf16, #tpu.memory_space<vmem>>, %arg5: memref<32x32xbf16, #tpu.memory_space<vmem>>, %arg6: memref<1x32xf32, #tpu.memory_space<vmem>>, %arg7: memref<1x32xf32, #tpu.memory_space<vmem>>, %arg8: memref<1x32xf32, #tpu.memory_space<vmem>>, %arg9: memref<32x32xbf16, #tpu.memory_space<vmem>>, %arg10: memref<1x32xf32, #tpu.memory_space<vmem>>, %arg11: memref<1x32xf32, #tpu.memory_space<vmem>>, %arg12: memref<1x32xf32, #tpu.memory_space<vmem>>, %arg13: memref<32x64xbf16, #tpu.memory_space<vmem>>, %arg14: memref<1x64xf32, #tpu.memory_space<vmem>>, %arg15: memref<64x32xbf16, #tpu.memory_space<vmem>>, %arg16: memref<1x32xf32, #tpu.memory_space<vmem>>, %arg17: memref<1x32xf32, #tpu.memory_space<vmem>>, %arg18: memref<1x32xf32, #tpu.memory_space<vmem>>, %arg19: memref<1x8x32xf32, #tpu.memory_space<vmem>>, %arg20: memref<4x8x8xbf16, #tpu.memory_space<vmem>>, %arg21: memref<4x8x8xbf16, #tpu.memory_space<vmem>>) attributes {dimension_semantics = [#tpu.dimension_semantics<parallel>, #tpu.dimension_semantics<arbitrary>], iteration_bounds = array<i64: 2, 1>, scalar_prefetch = 0 : i64, scratch_operands = 2 : i64, tpu.core_type = #tpu.core_type<tc>, window_params = [{transform_indices = @transform_0, window_bounds = array<i64: 1, 8, 32>}, {pipeline_mode = #tpu.pipeline_mode<synchronous>, transform_indices = @transform_1, window_bounds = array<i64: 32, 32>}, {pipeline_mode = #tpu.pipeline_mode<synchronous>, transform_indices = @transform_2, window_bounds = array<i64: 32, 32>}, {pipeline_mode = #tpu.pipeline_mode<synchronous>, transform_indices = @transform_3, window_bounds = array<i64: 32, 32>}, {pipeline_mode = #tpu.pipeline_mode<synchronous>, transform_indices = @transform_4, window_bounds = array<i64: 1, 32>}, {pipeline_mode = #tpu.pipeline_mode<synchronous>, transform_indices = @transform_5, window_bounds = array<i64: 1, 32>}, {pipeline_mode = #tpu.pipeline_mode<synchronous>, transform_indices = @transform_6, window_bounds = array<i64: 1, 32>}, {pipeline_mode = #tpu.pipeline_mode<synchronous>, transform_indices = @transform_7, window_bounds = array<i64: 32, 32>}, {pipeline_mode = #tpu.pipeline_mode<synchronous>, transform_indices = @transform_8, window_bounds = array<i64: 1, 32>}, {pipeline_mode = #tpu.pipeline_mode<synchronous>, transform_indices = @transform_9, window_bounds = array<i64: 1, 32>}, {pipeline_mode = #tpu.pipeline_mode<synchronous>, transform_indices = @transform_10, window_bounds = array<i64: 1, 32>}, {pipeline_mode = #tpu.pipeline_mode<synchronous>, transform_indices = @transform_11, window_bounds = array<i64: 32, 64>}, {pipeline_mode = #tpu.pipeline_mode<synchronous>, transform_indices = @transform_12, window_bounds = array<i64: 1, 64>}, {pipeline_mode = #tpu.pipeline_mode<synchronous>, transform_indices = @transform_13, window_bounds = array<i64: 64, 32>}, {pipeline_mode = #tpu.pipeline_mode<synchronous>, transform_indices = @transform_14, window_bounds = array<i64: 1, 32>}, {pipeline_mode = #tpu.pipeline_mode<synchronous>, transform_indices = @transform_15, window_bounds = array<i64: 1, 32>}, {pipeline_mode = #tpu.pipeline_mode<synchronous>, transform_indices = @transform_16, window_bounds = array<i64: 1, 32>}, {transform_indices = @transform_17, window_bounds = array<i64: 1, 8, 32>}]} {
    %c0_i32 = arith.constant 0 : i32
    %0 = arith.cmpi eq, %arg1, %c0_i32 : i32
    %1 = arith.extui %0 : i1 to i32
    %c0_i32_0 = arith.constant 0 : i32
    %2 = arith.cmpi ne, %1, %c0_i32_0 : i32
    scf.if %2 {
      %c0_56 = arith.constant 0 : index
      %c0_57 = arith.constant 0 : index
      %c0_58 = arith.constant 0 : index
      %123 = vector.load %arg2[%c0_56, %c0_57, %c0_58] : memref<1x8x32xf32, #tpu.memory_space<vmem>>, vector<1x8x32xf32>
      %124 = vector.shape_cast %123 : vector<1x8x32xf32> to vector<8x32xf32>
      %125 = arith.truncf %124 : vector<8x32xf32> to vector<8x32xbf16>
      %c0_59 = arith.constant 0 : index
      %c0_60 = arith.constant 0 : index
      %126 = vector.load %arg4[%c0_59, %c0_60] : memref<32x32xbf16, #tpu.memory_space<vmem>>, vector<32x32xbf16>
      %cst_61 = arith.constant dense<0.000000e+00> : vector<8x32xf32>
      %127 = tpu.matmul %125, %126, %cst_61 {dimension_numbers = #tpu.dot_dimension_numbers<[1], [0], [0], [1], [0, 0, 1, 1], [], []>} : vector<8x32xbf16>, vector<32x32xbf16>, vector<8x32xf32> -> vector<8x32xf32>
      %c0_62 = arith.constant 0 : index
      %c0_63 = arith.constant 0 : index
      %128 = vector.load %arg7[%c0_62, %c0_63] : memref<1x32xf32, #tpu.memory_space<vmem>>, vector<1x32xf32>
      %129 = vector.broadcast %128 : vector<1x32xf32> to vector<8x32xf32>
      %130 = arith.addf %127, %129 : vector<8x32xf32>
      %c0_64 = arith.constant 0 : index
      %c0_65 = arith.constant 0 : index
      %131 = vector.load %arg5[%c0_64, %c0_65] : memref<32x32xbf16, #tpu.memory_space<vmem>>, vector<32x32xbf16>
      %cst_66 = arith.constant dense<0.000000e+00> : vector<8x32xf32>
      %132 = tpu.matmul %125, %131, %cst_66 {dimension_numbers = #tpu.dot_dimension_numbers<[1], [0], [0], [1], [0, 0, 1, 1], [], []>} : vector<8x32xbf16>, vector<32x32xbf16>, vector<8x32xf32> -> vector<8x32xf32>
      %c0_67 = arith.constant 0 : index
      %c0_68 = arith.constant 0 : index
      %133 = vector.load %arg8[%c0_67, %c0_68] : memref<1x32xf32, #tpu.memory_space<vmem>>, vector<1x32xf32>
      %134 = vector.broadcast %133 : vector<1x32xf32> to vector<8x32xf32>
      %135 = arith.addf %132, %134 : vector<8x32xf32>
      %136 = arith.truncf %130 : vector<8x32xf32> to vector<8x32xbf16>
      %137 = vector.shape_cast %136 : vector<8x32xbf16> to vector<8x4x8xbf16>
      %138 = tpu.transpose %137, [1, 0, 2] : vector<8x4x8xbf16> -> vector<4x8x8xbf16>
      %c0_69 = arith.constant 0 : index
      %c0_70 = arith.constant 0 : index
      %c0_71 = arith.constant 0 : index
      %139 = vector.load %arg20[%c0_69, %c0_70, %c0_71] : memref<4x8x8xbf16, #tpu.memory_space<vmem>>, vector<4x8x8xbf16>
      tpu.vector_store %arg20[%c0_69, %c0_70, %c0_71], %138 {strides = array<i32>} : memref<4x8x8xbf16, #tpu.memory_space<vmem>>, vector<4x8x8xbf16>,
      %140 = arith.truncf %135 : vector<8x32xf32> to vector<8x32xbf16>
      %141 = vector.shape_cast %140 : vector<8x32xbf16> to vector<8x4x8xbf16>
      %142 = tpu.transpose %141, [1, 0, 2] : vector<8x4x8xbf16> -> vector<4x8x8xbf16>
      %c0_72 = arith.constant 0 : index
      %c0_73 = arith.constant 0 : index
      %c0_74 = arith.constant 0 : index
      %143 = vector.load %arg21[%c0_72, %c0_73, %c0_74] : memref<4x8x8xbf16, #tpu.memory_space<vmem>>, vector<4x8x8xbf16>
      tpu.vector_store %arg21[%c0_72, %c0_73, %c0_74], %142 {strides = array<i32>} : memref<4x8x8xbf16, #tpu.memory_space<vmem>>, vector<4x8x8xbf16>,
    } else {
    }
    %c8_i32 = arith.constant 8 : i32
    %3 = arith.muli %arg1, %c8_i32 : i32
    %4 = tpu.assume_multiple %3, 8 : i32
    %c0 = arith.constant 0 : index
    %5 = arith.index_cast %4 : i32 to index
    %c0_1 = arith.constant 0 : index
    %6 = vector.load %arg2[%c0, %5, %c0_1] : memref<1x8x32xf32, #tpu.memory_space<vmem>>, vector<1x8x32xf32>
    %7 = vector.shape_cast %6 : vector<1x8x32xf32> to vector<8x32xf32>
    %8 = arith.truncf %7 : vector<8x32xf32> to vector<8x32xbf16>
    %c0_2 = arith.constant 0 : index
    %c0_3 = arith.constant 0 : index
    %9 = vector.load %arg3[%c0_2, %c0_3] : memref<32x32xbf16, #tpu.memory_space<vmem>>, vector<32x32xbf16>
    %cst = arith.constant dense<0.000000e+00> : vector<8x32xf32>
    %10 = tpu.matmul %8, %9, %cst {dimension_numbers = #tpu.dot_dimension_numbers<[1], [0], [0], [1], [0, 0, 1, 1], [], []>} : vector<8x32xbf16>, vector<32x32xbf16>, vector<8x32xf32> -> vector<8x32xf32>
    %c0_4 = arith.constant 0 : index
    %c0_5 = arith.constant 0 : index
    %11 = vector.load %arg6[%c0_4, %c0_5] : memref<1x32xf32, #tpu.memory_space<vmem>>, vector<1x32xf32>
    %12 = vector.broadcast %11 : vector<1x32xf32> to vector<8x32xf32>
    %13 = arith.addf %10, %12 : vector<8x32xf32>
    %14 = arith.truncf %13 : vector<8x32xf32> to vector<8x32xbf16>
    %15 = vector.shape_cast %14 : vector<8x32xbf16> to vector<8x4x8xbf16>
    %16 = tpu.transpose %15, [1, 0, 2] : vector<8x4x8xbf16> -> vector<4x8x8xbf16>
    %c0_6 = arith.constant 0 : index
    %c0_7 = arith.constant 0 : index
    %c0_8 = arith.constant 0 : index
    %17 = vector.load %arg20[%c0_6, %c0_7, %c0_8] : memref<4x8x8xbf16, #tpu.memory_space<vmem>>, vector<4x8x8xbf16>
    %c0_9 = arith.constant 0 : index
    %c0_10 = arith.constant 0 : index
    %c0_11 = arith.constant 0 : index
    %18 = vector.load %arg21[%c0_9, %c0_10, %c0_11] : memref<4x8x8xbf16, #tpu.memory_space<vmem>>, vector<4x8x8xbf16>
    "tpu.trace_start"() <{level = 10 : i32, message = "hqd,hkd->hqk"}> : () -> ()
    %cst_12 = arith.constant dense<0.000000e+00> : vector<4x8x8xf32>
    %19 = tpu.matmul %16, %17, %cst_12 {dimension_numbers = #tpu.dot_dimension_numbers<[2], [2], [1], [1], [0, 0, 0, 1, 1, 1], [0], [0]>} : vector<4x8x8xbf16>, vector<4x8x8xbf16>, vector<4x8x8xf32> -> vector<4x8x8xf32>
    "tpu.trace_stop"() : () -> ()
    %cst_13 = arith.constant dense<0xFF800000> : vector<4x8xf32>
    %20 = vector.multi_reduction <maximumf>, %19, %cst_13 [2] : vector<4x8x8xf32> to vector<4x8xf32>
    %21 = vector.shape_cast %20 : vector<4x8xf32> to vector<4x8x1xf32>
    %22 = vector.broadcast %21 : vector<4x8x1xf32> to vector<4x8x8xf32>
    %23 = arith.subf %19, %22 : vector<4x8x8xf32>
    %24 = math.exp %23 : vector<4x8x8xf32>
    %cst_14 = arith.constant dense<0.000000e+00> : vector<4x8xf32>
    %25 = vector.multi_reduction <add>, %24, %cst_14 [2] : vector<4x8x8xf32> to vector<4x8xf32>
    %26 = vector.shape_cast %25 : vector<4x8xf32> to vector<4x8x1xf32>
    %27 = tpu.reciprocal %26 {approx = true} : vector<4x8x1xf32> -> vector<4x8x1xf32>
    %28 = arith.truncf %24 : vector<4x8x8xf32> to vector<4x8x8xbf16>
    %29 = arith.truncf %27 : vector<4x8x1xf32> to vector<4x8x1xbf16>
    %30 = vector.broadcast %29 : vector<4x8x1xbf16> to vector<4x8x8xbf16>
    %31 = arith.mulf %28, %30 : vector<4x8x8xbf16>
    "tpu.trace_start"() <{level = 10 : i32, message = "hqk,hkd->hqd"}> : () -> ()
    %cst_15 = arith.constant dense<0.000000e+00> : vector<4x8x8xf32>
    %32 = tpu.matmul %31, %18, %cst_15 {dimension_numbers = #tpu.dot_dimension_numbers<[2], [1], [1], [2], [0, 0, 0, 1, 1, 2], [0], [0]>} : vector<4x8x8xbf16>, vector<4x8x8xbf16>, vector<4x8x8xf32> -> vector<4x8x8xf32>
    "tpu.trace_stop"() : () -> ()
    %33 = tpu.transpose %32, [1, 0, 2] : vector<4x8x8xf32> -> vector<8x4x8xf32>
    %34 = vector.shape_cast %33 : vector<8x4x8xf32> to vector<8x32xf32>
    %35 = arith.truncf %34 : vector<8x32xf32> to vector<8x32xbf16>
    %c0_16 = arith.constant 0 : index
    %c0_17 = arith.constant 0 : index
    %36 = vector.load %arg9[%c0_16, %c0_17] : memref<32x32xbf16, #tpu.memory_space<vmem>>, vector<32x32xbf16>
    %cst_18 = arith.constant dense<0.000000e+00> : vector<8x32xf32>
    %37 = tpu.matmul %35, %36, %cst_18 {dimension_numbers = #tpu.dot_dimension_numbers<[1], [0], [0], [1], [0, 0, 1, 1], [], []>} : vector<8x32xbf16>, vector<32x32xbf16>, vector<8x32xf32> -> vector<8x32xf32>
    %c0_19 = arith.constant 0 : index
    %c0_20 = arith.constant 0 : index
    %38 = vector.load %arg10[%c0_19, %c0_20] : memref<1x32xf32, #tpu.memory_space<vmem>>, vector<1x32xf32>
    %39 = vector.broadcast %38 : vector<1x32xf32> to vector<8x32xf32>
    %40 = arith.addf %37, %39 : vector<8x32xf32>
    %41 = arith.addf %40, %7 : vector<8x32xf32>
    %c0_21 = arith.constant 0 : index
    %c0_22 = arith.constant 0 : index
    %42 = vector.load %arg11[%c0_21, %c0_22] : memref<1x32xf32, #tpu.memory_space<vmem>>, vector<1x32xf32>
    %c0_23 = arith.constant 0 : index
    %c0_24 = arith.constant 0 : index
    %43 = vector.load %arg12[%c0_23, %c0_24] : memref<1x32xf32, #tpu.memory_space<vmem>>, vector<1x32xf32>
    %cst_25 = arith.constant dense<0.000000e+00> : vector<8xf32>
    %44 = vector.multi_reduction <add>, %41, %cst_25 [1] : vector<8x32xf32> to vector<8xf32>
    %45 = vector.shape_cast %44 : vector<8xf32> to vector<8x1xf32>
    %cst_26 = arith.constant 3.200000e+01 : f32
    %46 = vector.broadcast %cst_26 : f32 to vector<8x1xf32>
    %47 = arith.divf %45, %46 : vector<8x1xf32>
    %48 = vector.broadcast %47 : vector<8x1xf32> to vector<8x32xf32>
    %49 = arith.subf %41, %48 : vector<8x32xf32>
    %50 = vector.broadcast %47 : vector<8x1xf32> to vector<8x32xf32>
    %51 = arith.subf %41, %50 : vector<8x32xf32>
    %52 = arith.mulf %49, %51 : vector<8x32xf32>
    %cst_27 = arith.constant dense<0.000000e+00> : vector<8xf32>
    %53 = vector.multi_reduction <add>, %52, %cst_27 [1] : vector<8x32xf32> to vector<8xf32>
    %54 = vector.shape_cast %53 : vector<8xf32> to vector<8x1xf32>
    %cst_28 = arith.constant 3.200000e+01 : f32
    %55 = vector.broadcast %cst_28 : f32 to vector<8x1xf32>
    %56 = arith.divf %54, %55 : vector<8x1xf32>
    %57 = vector.broadcast %47 : vector<8x1xf32> to vector<8x32xf32>
    %58 = arith.subf %41, %57 : vector<8x32xf32>
    %cst_29 = arith.constant 9.99999974E-6 : f32
    %59 = vector.broadcast %cst_29 : f32 to vector<8x1xf32>
    %60 = arith.addf %56, %59 : vector<8x1xf32>
    %61 = math.rsqrt %60 : vector<8x1xf32>
    %62 = vector.broadcast %61 : vector<8x1xf32> to vector<8x32xf32>
    %63 = arith.mulf %58, %62 : vector<8x32xf32>
    %64 = vector.broadcast %42 : vector<1x32xf32> to vector<8x32xf32>
    %65 = arith.mulf %63, %64 : vector<8x32xf32>
    %66 = vector.broadcast %43 : vector<1x32xf32> to vector<8x32xf32>
    %67 = arith.addf %65, %66 : vector<8x32xf32>
    %68 = arith.truncf %67 : vector<8x32xf32> to vector<8x32xbf16>
    %c0_30 = arith.constant 0 : index
    %c0_31 = arith.constant 0 : index
    %69 = vector.load %arg13[%c0_30, %c0_31] : memref<32x64xbf16, #tpu.memory_space<vmem>>, vector<32x64xbf16>
    %cst_32 = arith.constant dense<0.000000e+00> : vector<8x64xf32>
    %70 = tpu.matmul %68, %69, %cst_32 {dimension_numbers = #tpu.dot_dimension_numbers<[1], [0], [0], [1], [0, 0, 1, 1], [], []>} : vector<8x32xbf16>, vector<32x64xbf16>, vector<8x64xf32> -> vector<8x64xf32>
    %c0_33 = arith.constant 0 : index
    %c0_34 = arith.constant 0 : index
    %71 = vector.load %arg14[%c0_33, %c0_34] : memref<1x64xf32, #tpu.memory_space<vmem>>, vector<1x64xf32>
    %72 = vector.broadcast %71 : vector<1x64xf32> to vector<8x64xf32>
    %73 = arith.addf %70, %72 : vector<8x64xf32>
    %74 = arith.mulf %73, %73 : vector<8x64xf32>
    %75 = arith.mulf %73, %74 : vector<8x64xf32>
    %cst_35 = arith.constant 4.471500e-02 : f32
    %76 = vector.broadcast %cst_35 : f32 to vector<8x64xf32>
    %77 = arith.mulf %76, %75 : vector<8x64xf32>
    %78 = arith.addf %73, %77 : vector<8x64xf32>
    %cst_36 = arith.constant 0.797884583 : f32
    %79 = vector.broadcast %cst_36 : f32 to vector<8x64xf32>
    %80 = arith.mulf %79, %78 : vector<8x64xf32>
    %81 = math.tanh %80 : vector<8x64xf32>
    %cst_37 = arith.constant 1.000000e+00 : f32
    %82 = vector.broadcast %cst_37 : f32 to vector<8x64xf32>
    %83 = arith.addf %82, %81 : vector<8x64xf32>
    %cst_38 = arith.constant 5.000000e-01 : f32
    %84 = vector.broadcast %cst_38 : f32 to vector<8x64xf32>
    %85 = arith.mulf %84, %83 : vector<8x64xf32>
    %86 = arith.mulf %73, %85 : vector<8x64xf32>
    %87 = arith.truncf %86 : vector<8x64xf32> to vector<8x64xbf16>
    %c0_39 = arith.constant 0 : index
    %c0_40 = arith.constant 0 : index
    %88 = vector.load %arg15[%c0_39, %c0_40] : memref<64x32xbf16, #tpu.memory_space<vmem>>, vector<64x32xbf16>
    %cst_41 = arith.constant dense<0.000000e+00> : vector<8x32xf32>
    %89 = tpu.matmul %87, %88, %cst_41 {dimension_numbers = #tpu.dot_dimension_numbers<[1], [0], [0], [1], [0, 0, 1, 1], [], []>} : vector<8x64xbf16>, vector<64x32xbf16>, vector<8x32xf32> -> vector<8x32xf32>
    %c0_42 = arith.constant 0 : index
    %c0_43 = arith.constant 0 : index
    %90 = vector.load %arg16[%c0_42, %c0_43] : memref<1x32xf32, #tpu.memory_space<vmem>>, vector<1x32xf32>
    %91 = vector.broadcast %90 : vector<1x32xf32> to vector<8x32xf32>
    %92 = arith.addf %89, %91 : vector<8x32xf32>
    %93 = arith.addf %92, %67 : vector<8x32xf32>
    %c0_44 = arith.constant 0 : index
    %c0_45 = arith.constant 0 : index
    %94 = vector.load %arg17[%c0_44, %c0_45] : memref<1x32xf32, #tpu.memory_space<vmem>>, vector<1x32xf32>
    %c0_46 = arith.constant 0 : index
    %c0_47 = arith.constant 0 : index
    %95 = vector.load %arg18[%c0_46, %c0_47] : memref<1x32xf32, #tpu.memory_space<vmem>>, vector<1x32xf32>
    %cst_48 = arith.constant dense<0.000000e+00> : vector<8xf32>
    %96 = vector.multi_reduction <add>, %93, %cst_48 [1] : vector<8x32xf32> to vector<8xf32>
    %97 = vector.shape_cast %96 : vector<8xf32> to vector<8x1xf32>
    %cst_49 = arith.constant 3.200000e+01 : f32
    %98 = vector.broadcast %cst_49 : f32 to vector<8x1xf32>
    %99 = arith.divf %97, %98 : vector<8x1xf32>
    %100 = vector.broadcast %99 : vector<8x1xf32> to vector<8x32xf32>
    %101 = arith.subf %93, %100 : vector<8x32xf32>
    %102 = vector.broadcast %99 : vector<8x1xf32> to vector<8x32xf32>
    %103 = arith.subf %93, %102 : vector<8x32xf32>
    %104 = arith.mulf %101, %103 : vector<8x32xf32>
    %cst_50 = arith.constant dense<0.000000e+00> : vector<8xf32>
    %105 = vector.multi_reduction <add>, %104, %cst_50 [1] : vector<8x32xf32> to vector<8xf32>
    %106 = vector.shape_cast %105 : vector<8xf32> to vector<8x1xf32>
    %cst_51 = arith.constant 3.200000e+01 : f32
    %107 = vector.broadcast %cst_51 : f32 to vector<8x1xf32>
    %108 = arith.divf %106, %107 : vector<8x1xf32>
    %109 = vector.broadcast %99 : vector<8x1xf32> to vector<8x32xf32>
    %110 = arith.subf %93, %109 : vector<8x32xf32>
    %cst_52 = arith.constant 9.99999974E-6 : f32
    %111 = vector.broadcast %cst_52 : f32 to vector<8x1xf32>
    %112 = arith.addf %108, %111 : vector<8x1xf32>
    %113 = math.rsqrt %112 : vector<8x1xf32>
    %114 = vector.broadcast %113 : vector<8x1xf32> to vector<8x32xf32>
    %115 = arith.mulf %110, %114 : vector<8x32xf32>
    %116 = vector.broadcast %94 : vector<1x32xf32> to vector<8x32xf32>
    %117 = arith.mulf %115, %116 : vector<8x32xf32>
    %118 = vector.broadcast %95 : vector<1x32xf32> to vector<8x32xf32>
    %119 = arith.addf %117, %118 : vector<8x32xf32>
    %c0_53 = arith.constant 0 : index
    %c0_54 = arith.constant 0 : index
    %c0_55 = arith.constant 0 : index
    %120 = vector.load %arg19[%c0_53, %c0_54, %c0_55] : memref<1x8x32xf32, #tpu.memory_space<vmem>>, vector<1x8x32xf32>
    %121 = vector.shape_cast %120 : vector<1x8x32xf32> to vector<8x32xf32>
    %122 = vector.shape_cast %119 : vector<8x32xf32> to vector<1x8x32xf32>
    tpu.vector_store %arg19[%c0_53, %c0_54, %c0_55], %122 {strides = array<i32>} : memref<1x8x32xf32, #tpu.memory_space<vmem>>, vector<1x8x32xf32>,
    return
  }
  func.func @transform_0(%arg0: i32, %arg1: i32) -> (i32, i32, i32) {
    %c0_i32 = arith.constant 0 : i32
    %c0_i32_0 = arith.constant 0 : i32
    %c0_i32_1 = arith.constant 0 : i32
    return %arg0, %c0_i32, %c0_i32_0 : i32, i32, i32
  }
  func.func @transform_1(%arg0: i32, %arg1: i32) -> (i32, i32) {
    %c0_i32 = arith.constant 0 : i32
    %c0_i32_0 = arith.constant 0 : i32
    %c0_i32_1 = arith.constant 0 : i32
    return %c0_i32, %c0_i32_0 : i32, i32
  }
  func.func @transform_2(%arg0: i32, %arg1: i32) -> (i32, i32) {
    %c0_i32 = arith.constant 0 : i32
    %c0_i32_0 = arith.constant 0 : i32
    %c0_i32_1 = arith.constant 0 : i32
    return %c0_i32, %c0_i32_0 : i32, i32
  }
  func.func @transform_3(%arg0: i32, %arg1: i32) -> (i32, i32) {
    %c0_i32 = arith.constant 0 : i32
    %c0_i32_0 = arith.constant 0 : i32
    %c0_i32_1 = arith.constant 0 : i32
    return %c0_i32, %c0_i32_0 : i32, i32
  }
  func.func @transform_4(%arg0: i32, %arg1: i32) -> (i32, i32) {
    %c0_i32 = arith.constant 0 : i32
    %c0_i32_0 = arith.constant 0 : i32
    %c0_i32_1 = arith.constant 0 : i32
    return %c0_i32, %c0_i32_0 : i32, i32
  }
  func.func @transform_5(%arg0: i32, %arg1: i32) -> (i32, i32) {
    %c0_i32 = arith.constant 0 : i32
    %c0_i32_0 = arith.constant 0 : i32
    %c0_i32_1 = arith.constant 0 : i32
    return %c0_i32, %c0_i32_0 : i32, i32
  }
  func.func @transform_6(%arg0: i32, %arg1: i32) -> (i32, i32) {
    %c0_i32 = arith.constant 0 : i32
    %c0_i32_0 = arith.constant 0 : i32
    %c0_i32_1 = arith.constant 0 : i32
    return %c0_i32, %c0_i32_0 : i32, i32
  }
  func.func @transform_7(%arg0: i32, %arg1: i32) -> (i32, i32) {
    %c0_i32 = arith.constant 0 : i32
    %c0_i32_0 = arith.constant 0 : i32
    %c0_i32_1 = arith.constant 0 : i32
    return %c0_i32, %c0_i32_0 : i32, i32
  }
  func.func @transform_8(%arg0: i32, %arg1: i32) -> (i32, i32) {
    %c0_i32 = arith.constant 0 : i32
    %c0_i32_0 = arith.constant 0 : i32
    %c0_i32_1 = arith.constant 0 : i32
    return %c0_i32, %c0_i32_0 : i32, i32
  }
  func.func @transform_9(%arg0: i32, %arg1: i32) -> (i32, i32) {
    %c0_i32 = arith.constant 0 : i32
    %c0_i32_0 = arith.constant 0 : i32
    %c0_i32_1 = arith.constant 0 : i32
    return %c0_i32, %c0_i32_0 : i32, i32
  }
  func.func @transform_10(%arg0: i32, %arg1: i32) -> (i32, i32) {
    %c0_i32 = arith.constant 0 : i32
    %c0_i32_0 = arith.constant 0 : i32
    %c0_i32_1 = arith.constant 0 : i32
    return %c0_i32, %c0_i32_0 : i32, i32
  }
  func.func @transform_11(%arg0: i32, %arg1: i32) -> (i32, i32) {
    %c0_i32 = arith.constant 0 : i32
    %c0_i32_0 = arith.constant 0 : i32
    %c0_i32_1 = arith.constant 0 : i32
    return %c0_i32, %c0_i32_0 : i32, i32
  }
  func.func @transform_12(%arg0: i32, %arg1: i32) -> (i32, i32) {
    %c0_i32 = arith.constant 0 : i32
    %c0_i32_0 = arith.constant 0 : i32
    %c0_i32_1 = arith.constant 0 : i32
    return %c0_i32, %c0_i32_0 : i32, i32
  }
  func.func @transform_13(%arg0: i32, %arg1: i32) -> (i32, i32) {
    %c0_i32 = arith.constant 0 : i32
    %c0_i32_0 = arith.constant 0 : i32
    %c0_i32_1 = arith.constant 0 : i32
    return %c0_i32, %c0_i32_0 : i32, i32
  }
  func.func @transform_14(%arg0: i32, %arg1: i32) -> (i32, i32) {
    %c0_i32 = arith.constant 0 : i32
    %c0_i32_0 = arith.constant 0 : i32
    %c0_i32_1 = arith.constant 0 : i32
    return %c0_i32, %c0_i32_0 : i32, i32
  }
  func.func @transform_15(%arg0: i32, %arg1: i32) -> (i32, i32) {
    %c0_i32 = arith.constant 0 : i32
    %c0_i32_0 = arith.constant 0 : i32
    %c0_i32_1 = arith.constant 0 : i32
    return %c0_i32, %c0_i32_0 : i32, i32
  }
  func.func @transform_16(%arg0: i32, %arg1: i32) -> (i32, i32) {
    %c0_i32 = arith.constant 0 : i32
    %c0_i32_0 = arith.constant 0 : i32
    %c0_i32_1 = arith.constant 0 : i32
    return %c0_i32, %c0_i32_0 : i32, i32
  }
  func.func @transform_17(%arg0: i32, %arg1: i32) -> (i32, i32, i32) {
    %c0_i32 = arith.constant 0 : i32
    %c0_i32_0 = arith.constant 0 : i32
    return %arg0, %arg1, %c0_i32 : i32, i32, i32
  }
}

module attributes {stable_mosaic.version = 11 : i64} {
  func.func @_encoder_layer_kernel(%arg0: i32, %arg1: i32, %arg2: memref<1x8x32xf32, #tpu.memory_space<vmem>>, %arg3: memref<32x32xbf16, #tpu.memory_space<vmem>>, %arg4: memref<32x32xbf16, #tpu.memory_space<vmem>>, %arg5: memref<32x32xbf16, #tpu.memory_space<vmem>>, %arg6: memref<1x32xf32, #tpu.memory_space<vmem>>, %arg7: memref<1x32xf32, #tpu.memory_space<vmem>>, %arg8: memref<1x32xf32, #tpu.memory_space<vmem>>, %arg9: memref<32x32xbf16, #tpu.memory_space<vmem>>, %arg10: memref<1x32xf32, #tpu.memory_space<vmem>>, %arg11: memref<1x32xf32, #tpu.memory_space<vmem>>, %arg12: memref<1x32xf32, #tpu.memory_space<vmem>>, %arg13: memref<32x64xbf16, #tpu.memory_space<vmem>>, %arg14: memref<1x64xf32, #tpu.memory_space<vmem>>, %arg15: memref<64x32xbf16, #tpu.memory_space<vmem>>, %arg16: memref<1x32xf32, #tpu.memory_space<vmem>>, %arg17: memref<1x32xf32, #tpu.memory_space<vmem>>, %arg18: memref<1x32xf32, #tpu.memory_space<vmem>>, %arg19: memref<1x8x32xf32, #tpu.memory_space<vmem>>, %arg20: memref<4x8x8xbf16, #tpu.memory_space<vmem>>, %arg21: memref<4x8x8xbf16, #tpu.memory_space<vmem>>) attributes {dimension_semantics = [#tpu.dimension_semantics<parallel>, #tpu.dimension_semantics<arbitrary>], iteration_bounds = array<i64: 2, 1>, scalar_prefetch = 0 : i64, scratch_operands = 2 : i64, tpu.core_type = #tpu.core_type<tc>, window_params = [{transform_indices = @transform_0, window_bounds = array<i64: 1, 8, 32>}, {pipeline_mode = #tpu.pipeline_mode<synchronous>, transform_indices = @transform_1, window_bounds = array<i64: 32, 32>}, {pipeline_mode = #tpu.pipeline_mode<synchronous>, transform_indices = @transform_2, window_bounds = array<i64: 32, 32>}, {pipeline_mode = #tpu.pipeline_mode<synchronous>, transform_indices = @transform_3, window_bounds = array<i64: 32, 32>}, {pipeline_mode = #tpu.pipeline_mode<synchronous>, transform_indices = @transform_4, window_bounds = array<i64: 1, 32>}, {pipeline_mode = #tpu.pipeline_mode<synchronous>, transform_indices = @transform_5, window_bounds = array<i64: 1, 32>}, {pipeline_mode = #tpu.pipeline_mode<synchronous>, transform_indices = @transform_6, window_bounds = array<i64: 1, 32>}, {pipeline_mode = #tpu.pipeline_mode<synchronous>, transform_indices = @transform_7, window_bounds = array<i64: 32, 32>}, {pipeline_mode = #tpu.pipeline_mode<synchronous>, transform_indices = @transform_8, window_bounds = array<i64: 1, 32>}, {pipeline_mode = #tpu.pipeline_mode<synchronous>, transform_indices = @transform_9, window_bounds = array<i64: 1, 32>}, {pipeline_mode = #tpu.pipeline_mode<synchronous>, transform_indices = @transform_10, window_bounds = array<i64: 1, 32>}, {pipeline_mode = #tpu.pipeline_mode<synchronous>, transform_indices = @transform_11, window_bounds = array<i64: 32, 64>}, {pipeline_mode = #tpu.pipeline_mode<synchronous>, transform_indices = @transform_12, window_bounds = array<i64: 1, 64>}, {pipeline_mode = #tpu.pipeline_mode<synchronous>, transform_indices = @transform_13, window_bounds = array<i64: 64, 32>}, {pipeline_mode = #tpu.pipeline_mode<synchronous>, transform_indices = @transform_14, window_bounds = array<i64: 1, 32>}, {pipeline_mode = #tpu.pipeline_mode<synchronous>, transform_indices = @transform_15, window_bounds = array<i64: 1, 32>}, {pipeline_mode = #tpu.pipeline_mode<synchronous>, transform_indices = @transform_16, window_bounds = array<i64: 1, 32>}, {transform_indices = @transform_17, window_bounds = array<i64: 1, 8, 32>}]} {
    %c0_i32 = arith.constant 0 : i32
    %0 = arith.cmpi eq, %arg1, %c0_i32 : i32
    %1 = arith.extui %0 : i1 to i32
    %c0_i32_0 = arith.constant 0 : i32
    %2 = arith.cmpi ne, %1, %c0_i32_0 : i32
    scf.if %2 {
      %c0_56 = arith.constant 0 : index
      %c0_57 = arith.constant 0 : index
      %c0_58 = arith.constant 0 : index
      %123 = vector.load %arg2[%c0_56, %c0_57, %c0_58] : memref<1x8x32xf32, #tpu.memory_space<vmem>>, vector<1x8x32xf32>
      %124 = vector.shape_cast %123 : vector<1x8x32xf32> to vector<8x32xf32>
      %125 = arith.truncf %124 : vector<8x32xf32> to vector<8x32xbf16>
      %c0_59 = arith.constant 0 : index
      %c0_60 = arith.constant 0 : index
      %126 = vector.load %arg4[%c0_59, %c0_60] : memref<32x32xbf16, #tpu.memory_space<vmem>>, vector<32x32xbf16>
      %cst_61 = arith.constant dense<0.000000e+00> : vector<8x32xf32>
      %127 = tpu.matmul %125, %126, %cst_61 {dimension_numbers = #tpu.dot_dimension_numbers<[1], [0], [0], [1], [0, 0, 1, 1], [], []>} : vector<8x32xbf16>, vector<32x32xbf16>, vector<8x32xf32> -> vector<8x32xf32>
      %c0_62 = arith.constant 0 : index
      %c0_63 = arith.constant 0 : index
      %128 = vector.load %arg7[%c0_62, %c0_63] : memref<1x32xf32, #tpu.memory_space<vmem>>, vector<1x32xf32>
      %129 = vector.broadcast %128 : vector<1x32xf32> to vector<8x32xf32>
      %130 = arith.addf %127, %129 : vector<8x32xf32>
      %c0_64 = arith.constant 0 : index
      %c0_65 = arith.constant 0 : index
      %131 = vector.load %arg5[%c0_64, %c0_65] : memref<32x32xbf16, #tpu.memory_space<vmem>>, vector<32x32xbf16>
      %cst_66 = arith.constant dense<0.000000e+00> : vector<8x32xf32>
      %132 = tpu.matmul %125, %131, %cst_66 {dimension_numbers = #tpu.dot_dimension_numbers<[1], [0], [0], [1], [0, 0, 1, 1], [], []>} : vector<8x32xbf16>, vector<32x32xbf16>, vector<8x32xf32> -> vector<8x32xf32>
      %c0_67 = arith.constant 0 : index
      %c0_68 = arith.constant 0 : index
      %133 = vector.load %arg8[%c0_67, %c0_68] : memref<1x32xf32, #tpu.memory_space<vmem>>, vector<1x32xf32>
      %134 = vector.broadcast %133 : vector<1x32xf32> to vector<8x32xf32>
      %135 = arith.addf %132, %134 : vector<8x32xf32>
      %136 = arith.truncf %130 : vector<8x32xf32> to vector<8x32xbf16>
      %137 = vector.shape_cast %136 : vector<8x32xbf16> to vector<8x4x8xbf16>
      %138 = tpu.transpose %137, [1, 0, 2] : vector<8x4x8xbf16> -> vector<4x8x8xbf16>
      %c0_69 = arith.constant 0 : index
      %c0_70 = arith.constant 0 : index
      %c0_71 = arith.constant 0 : index
      %139 = vector.load %arg20[%c0_69, %c0_70, %c0_71] : memref<4x8x8xbf16, #tpu.memory_space<vmem>>, vector<4x8x8xbf16>
      tpu.vector_store %arg20[%c0_69, %c0_70, %c0_71], %138 {strides = array<i32>} : memref<4x8x8xbf16, #tpu.memory_space<vmem>>, vector<4x8x8xbf16>,
      %140 = arith.truncf %135 : vector<8x32xf32> to vector<8x32xbf16>
      %141 = vector.shape_cast %140 : vector<8x32xbf16> to vector<8x4x8xbf16>
      %142 = tpu.transpose %141, [1, 0, 2] : vector<8x4x8xbf16> -> vector<4x8x8xbf16>
      %c0_72 = arith.constant 0 : index
      %c0_73 = arith.constant 0 : index
      %c0_74 = arith.constant 0 : index
      %143 = vector.load %arg21[%c0_72, %c0_73, %c0_74] : memref<4x8x8xbf16, #tpu.memory_space<vmem>>, vector<4x8x8xbf16>
      tpu.vector_store %arg21[%c0_72, %c0_73, %c0_74], %142 {strides = array<i32>} : memref<4x8x8xbf16, #tpu.memory_space<vmem>>, vector<4x8x8xbf16>,
    } else {
    }
    %c8_i32 = arith.constant 8 : i32
    %3 = arith.muli %arg1, %c8_i32 : i32
    %4 = tpu.assume_multiple %3, 8 : i32
    %c0 = arith.constant 0 : index
    %5 = arith.index_cast %4 : i32 to index
    %c0_1 = arith.constant 0 : index
    %6 = vector.load %arg2[%c0, %5, %c0_1] : memref<1x8x32xf32, #tpu.memory_space<vmem>>, vector<1x8x32xf32>
    %7 = vector.shape_cast %6 : vector<1x8x32xf32> to vector<8x32xf32>
    %8 = arith.truncf %7 : vector<8x32xf32> to vector<8x32xbf16>
    %c0_2 = arith.constant 0 : index
    %c0_3 = arith.constant 0 : index
    %9 = vector.load %arg3[%c0_2, %c0_3] : memref<32x32xbf16, #tpu.memory_space<vmem>>, vector<32x32xbf16>
    %cst = arith.constant dense<0.000000e+00> : vector<8x32xf32>
    %10 = tpu.matmul %8, %9, %cst {dimension_numbers = #tpu.dot_dimension_numbers<[1], [0], [0], [1], [0, 0, 1, 1], [], []>} : vector<8x32xbf16>, vector<32x32xbf16>, vector<8x32xf32> -> vector<8x32xf32>
    %c0_4 = arith.constant 0 : index
    %c0_5 = arith.constant 0 : index
    %11 = vector.load %arg6[%c0_4, %c0_5] : memref<1x32xf32, #tpu.memory_space<vmem>>, vector<1x32xf32>
    %12 = vector.broadcast %11 : vector<1x32xf32> to vector<8x32xf32>
    %13 = arith.addf %10, %12 : vector<8x32xf32>
    %14 = arith.truncf %13 : vector<8x32xf32> to vector<8x32xbf16>
    %15 = vector.shape_cast %14 : vector<8x32xbf16> to vector<8x4x8xbf16>
    %16 = tpu.transpose %15, [1, 0, 2] : vector<8x4x8xbf16> -> vector<4x8x8xbf16>
    %c0_6 = arith.constant 0 : index
    %c0_7 = arith.constant 0 : index
    %c0_8 = arith.constant 0 : index
    %17 = vector.load %arg20[%c0_6, %c0_7, %c0_8] : memref<4x8x8xbf16, #tpu.memory_space<vmem>>, vector<4x8x8xbf16>
    %c0_9 = arith.constant 0 : index
    %c0_10 = arith.constant 0 : index
    %c0_11 = arith.constant 0 : index
    %18 = vector.load %arg21[%c0_9, %c0_10, %c0_11] : memref<4x8x8xbf16, #tpu.memory_space<vmem>>, vector<4x8x8xbf16>
    "tpu.trace_start"() <{level = 10 : i32, message = "hqd,hkd->hqk"}> : () -> ()
    %cst_12 = arith.constant dense<0.000000e+00> : vector<4x8x8xf32>
    %19 = tpu.matmul %16, %17, %cst_12 {dimension_numbers = #tpu.dot_dimension_numbers<[2], [2], [1], [1], [0, 0, 0, 1, 1, 1], [0], [0]>} : vector<4x8x8xbf16>, vector<4x8x8xbf16>, vector<4x8x8xf32> -> vector<4x8x8xf32>
    "tpu.trace_stop"() : () -> ()
    %cst_13 = arith.constant dense<0xFF800000> : vector<4x8xf32>
    %20 = vector.multi_reduction <maximumf>, %19, %cst_13 [2] : vector<4x8x8xf32> to vector<4x8xf32>
    %21 = vector.shape_cast %20 : vector<4x8xf32> to vector<4x8x1xf32>
    %22 = vector.broadcast %21 : vector<4x8x1xf32> to vector<4x8x8xf32>
    %23 = arith.subf %19, %22 : vector<4x8x8xf32>
    %24 = math.exp %23 : vector<4x8x8xf32>
    %cst_14 = arith.constant dense<0.000000e+00> : vector<4x8xf32>
    %25 = vector.multi_reduction <add>, %24, %cst_14 [2] : vector<4x8x8xf32> to vector<4x8xf32>
    %26 = vector.shape_cast %25 : vector<4x8xf32> to vector<4x8x1xf32>
    %27 = tpu.reciprocal %26 {approx = true} : vector<4x8x1xf32> -> vector<4x8x1xf32>
    %28 = arith.truncf %24 : vector<4x8x8xf32> to vector<4x8x8xbf16>
    %29 = arith.truncf %27 : vector<4x8x1xf32> to vector<4x8x1xbf16>
    %30 = vector.broadcast %29 : vector<4x8x1xbf16> to vector<4x8x8xbf16>
    %31 = arith.mulf %28, %30 : vector<4x8x8xbf16>
    "tpu.trace_start"() <{level = 10 : i32, message = "hqk,hkd->hqd"}> : () -> ()
    %cst_15 = arith.constant dense<0.000000e+00> : vector<4x8x8xf32>
    %32 = tpu.matmul %31, %18, %cst_15 {dimension_numbers = #tpu.dot_dimension_numbers<[2], [1], [1], [2], [0, 0, 0, 1, 1, 2], [0], [0]>} : vector<4x8x8xbf16>, vector<4x8x8xbf16>, vector<4x8x8xf32> -> vector<4x8x8xf32>
    "tpu.trace_stop"() : () -> ()
    %33 = tpu.transpose %32, [1, 0, 2] : vector<4x8x8xf32> -> vector<8x4x8xf32>
    %34 = vector.shape_cast %33 : vector<8x4x8xf32> to vector<8x32xf32>
    %35 = arith.truncf %34 : vector<8x32xf32> to vector<8x32xbf16>
    %c0_16 = arith.constant 0 : index
    %c0_17 = arith.constant 0 : index
    %36 = vector.load %arg9[%c0_16, %c0_17] : memref<32x32xbf16, #tpu.memory_space<vmem>>, vector<32x32xbf16>
    %cst_18 = arith.constant dense<0.000000e+00> : vector<8x32xf32>
    %37 = tpu.matmul %35, %36, %cst_18 {dimension_numbers = #tpu.dot_dimension_numbers<[1], [0], [0], [1], [0, 0, 1, 1], [], []>} : vector<8x32xbf16>, vector<32x32xbf16>, vector<8x32xf32> -> vector<8x32xf32>
    %c0_19 = arith.constant 0 : index
    %c0_20 = arith.constant 0 : index
    %38 = vector.load %arg10[%c0_19, %c0_20] : memref<1x32xf32, #tpu.memory_space<vmem>>, vector<1x32xf32>
    %39 = vector.broadcast %38 : vector<1x32xf32> to vector<8x32xf32>
    %40 = arith.addf %37, %39 : vector<8x32xf32>
    %41 = arith.addf %40, %7 : vector<8x32xf32>
    %c0_21 = arith.constant 0 : index
    %c0_22 = arith.constant 0 : index
    %42 = vector.load %arg11[%c0_21, %c0_22] : memref<1x32xf32, #tpu.memory_space<vmem>>, vector<1x32xf32>
    %c0_23 = arith.constant 0 : index
    %c0_24 = arith.constant 0 : index
    %43 = vector.load %arg12[%c0_23, %c0_24] : memref<1x32xf32, #tpu.memory_space<vmem>>, vector<1x32xf32>
    %cst_25 = arith.constant dense<0.000000e+00> : vector<8xf32>
    %44 = vector.multi_reduction <add>, %41, %cst_25 [1] : vector<8x32xf32> to vector<8xf32>
    %45 = vector.shape_cast %44 : vector<8xf32> to vector<8x1xf32>
    %cst_26 = arith.constant 3.200000e+01 : f32
    %46 = vector.broadcast %cst_26 : f32 to vector<8x1xf32>
    %47 = arith.divf %45, %46 : vector<8x1xf32>
    %48 = vector.broadcast %47 : vector<8x1xf32> to vector<8x32xf32>
    %49 = arith.subf %41, %48 : vector<8x32xf32>
    %50 = vector.broadcast %47 : vector<8x1xf32> to vector<8x32xf32>
    %51 = arith.subf %41, %50 : vector<8x32xf32>
    %52 = arith.mulf %49, %51 : vector<8x32xf32>
    %cst_27 = arith.constant dense<0.000000e+00> : vector<8xf32>
    %53 = vector.multi_reduction <add>, %52, %cst_27 [1] : vector<8x32xf32> to vector<8xf32>
    %54 = vector.shape_cast %53 : vector<8xf32> to vector<8x1xf32>
    %cst_28 = arith.constant 3.200000e+01 : f32
    %55 = vector.broadcast %cst_28 : f32 to vector<8x1xf32>
    %56 = arith.divf %54, %55 : vector<8x1xf32>
    %57 = vector.broadcast %47 : vector<8x1xf32> to vector<8x32xf32>
    %58 = arith.subf %41, %57 : vector<8x32xf32>
    %cst_29 = arith.constant 9.99999974E-6 : f32
    %59 = vector.broadcast %cst_29 : f32 to vector<8x1xf32>
    %60 = arith.addf %56, %59 : vector<8x1xf32>
    %61 = math.rsqrt %60 : vector<8x1xf32>
    %62 = vector.broadcast %61 : vector<8x1xf32> to vector<8x32xf32>
    %63 = arith.mulf %58, %62 : vector<8x32xf32>
    %64 = vector.broadcast %42 : vector<1x32xf32> to vector<8x32xf32>
    %65 = arith.mulf %63, %64 : vector<8x32xf32>
    %66 = vector.broadcast %43 : vector<1x32xf32> to vector<8x32xf32>
    %67 = arith.addf %65, %66 : vector<8x32xf32>
    %68 = arith.truncf %67 : vector<8x32xf32> to vector<8x32xbf16>
    %c0_30 = arith.constant 0 : index
    %c0_31 = arith.constant 0 : index
    %69 = vector.load %arg13[%c0_30, %c0_31] : memref<32x64xbf16, #tpu.memory_space<vmem>>, vector<32x64xbf16>
    %cst_32 = arith.constant dense<0.000000e+00> : vector<8x64xf32>
    %70 = tpu.matmul %68, %69, %cst_32 {dimension_numbers = #tpu.dot_dimension_numbers<[1], [0], [0], [1], [0, 0, 1, 1], [], []>} : vector<8x32xbf16>, vector<32x64xbf16>, vector<8x64xf32> -> vector<8x64xf32>
    %c0_33 = arith.constant 0 : index
    %c0_34 = arith.constant 0 : index
    %71 = vector.load %arg14[%c0_33, %c0_34] : memref<1x64xf32, #tpu.memory_space<vmem>>, vector<1x64xf32>
    %72 = vector.broadcast %71 : vector<1x64xf32> to vector<8x64xf32>
    %73 = arith.addf %70, %72 : vector<8x64xf32>
    %74 = arith.mulf %73, %73 : vector<8x64xf32>
    %75 = arith.mulf %73, %74 : vector<8x64xf32>
    %cst_35 = arith.constant 4.471500e-02 : f32
    %76 = vector.broadcast %cst_35 : f32 to vector<8x64xf32>
    %77 = arith.mulf %76, %75 : vector<8x64xf32>
    %78 = arith.addf %73, %77 : vector<8x64xf32>
    %cst_36 = arith.constant 0.797884583 : f32
    %79 = vector.broadcast %cst_36 : f32 to vector<8x64xf32>
    %80 = arith.mulf %79, %78 : vector<8x64xf32>
    %81 = math.tanh %80 : vector<8x64xf32>
    %cst_37 = arith.constant 1.000000e+00 : f32
    %82 = vector.broadcast %cst_37 : f32 to vector<8x64xf32>
    %83 = arith.addf %82, %81 : vector<8x64xf32>
    %cst_38 = arith.constant 5.000000e-01 : f32
    %84 = vector.broadcast %cst_38 : f32 to vector<8x64xf32>
    %85 = arith.mulf %84, %83 : vector<8x64xf32>
    %86 = arith.mulf %73, %85 : vector<8x64xf32>
    %87 = arith.truncf %86 : vector<8x64xf32> to vector<8x64xbf16>
    %c0_39 = arith.constant 0 : index
    %c0_40 = arith.constant 0 : index
    %88 = vector.load %arg15[%c0_39, %c0_40] : memref<64x32xbf16, #tpu.memory_space<vmem>>, vector<64x32xbf16>
    %cst_41 = arith.constant dense<0.000000e+00> : vector<8x32xf32>
    %89 = tpu.matmul %87, %88, %cst_41 {dimension_numbers = #tpu.dot_dimension_numbers<[1], [0], [0], [1], [0, 0, 1, 1], [], []>} : vector<8x64xbf16>, vector<64x32xbf16>, vector<8x32xf32> -> vector<8x32xf32>
    %c0_42 = arith.constant 0 : index
    %c0_43 = arith.constant 0 : index
    %90 = vector.load %arg16[%c0_42, %c0_43] : memref<1x32xf32, #tpu.memory_space<vmem>>, vector<1x32xf32>
    %91 = vector.broadcast %90 : vector<1x32xf32> to vector<8x32xf32>
    %92 = arith.addf %89, %91 : vector<8x32xf32>
    %93 = arith.addf %92, %67 : vector<8x32xf32>
    %c0_44 = arith.constant 0 : index
    %c0_45 = arith.constant 0 : index
    %94 = vector.load %arg17[%c0_44, %c0_45] : memref<1x32xf32, #tpu.memory_space<vmem>>, vector<1x32xf32>
    %c0_46 = arith.constant 0 : index
    %c0_47 = arith.constant 0 : index
    %95 = vector.load %arg18[%c0_46, %c0_47] : memref<1x32xf32, #tpu.memory_space<vmem>>, vector<1x32xf32>
    %cst_48 = arith.constant dense<0.000000e+00> : vector<8xf32>
    %96 = vector.multi_reduction <add>, %93, %cst_48 [1] : vector<8x32xf32> to vector<8xf32>
    %97 = vector.shape_cast %96 : vector<8xf32> to vector<8x1xf32>
    %cst_49 = arith.constant 3.200000e+01 : f32
    %98 = vector.broadcast %cst_49 : f32 to vector<8x1xf32>
    %99 = arith.divf %97, %98 : vector<8x1xf32>
    %100 = vector.broadcast %99 : vector<8x1xf32> to vector<8x32xf32>
    %101 = arith.subf %93, %100 : vector<8x32xf32>
    %102 = vector.broadcast %99 : vector<8x1xf32> to vector<8x32xf32>
    %103 = arith.subf %93, %102 : vector<8x32xf32>
    %104 = arith.mulf %101, %103 : vector<8x32xf32>
    %cst_50 = arith.constant dense<0.000000e+00> : vector<8xf32>
    %105 = vector.multi_reduction <add>, %104, %cst_50 [1] : vector<8x32xf32> to vector<8xf32>
    %106 = vector.shape_cast %105 : vector<8xf32> to vector<8x1xf32>
    %cst_51 = arith.constant 3.200000e+01 : f32
    %107 = vector.broadcast %cst_51 : f32 to vector<8x1xf32>
    %108 = arith.divf %106, %107 : vector<8x1xf32>
    %109 = vector.broadcast %99 : vector<8x1xf32> to vector<8x32xf32>
    %110 = arith.subf %93, %109 : vector<8x32xf32>
    %cst_52 = arith.constant 9.99999974E-6 : f32
    %111 = vector.broadcast %cst_52 : f32 to vector<8x1xf32>
    %112 = arith.addf %108, %111 : vector<8x1xf32>
    %113 = math.rsqrt %112 : vector<8x1xf32>
    %114 = vector.broadcast %113 : vector<8x1xf32> to vector<8x32xf32>
    %115 = arith.mulf %110, %114 : vector<8x32xf32>
    %116 = vector.broadcast %94 : vector<1x32xf32> to vector<8x32xf32>
    %117 = arith.mulf %115, %116 : vector<8x32xf32>
    %118 = vector.broadcast %95 : vector<1x32xf32> to vector<8x32xf32>
    %119 = arith.addf %117, %118 : vector<8x32xf32>
    %c0_53 = arith.constant 0 : index
    %c0_54 = arith.constant 0 : index
    %c0_55 = arith.constant 0 : index
    %120 = vector.load %arg19[%c0_53, %c0_54, %c0_55] : memref<1x8x32xf32, #tpu.memory_space<vmem>>, vector<1x8x32xf32>
    %121 = vector.shape_cast %120 : vector<1x8x32xf32> to vector<8x32xf32>
    %122 = vector.shape_cast %119 : vector<8x32xf32> to vector<1x8x32xf32>
    tpu.vector_store %arg19[%c0_53, %c0_54, %c0_55], %122 {strides = array<i32>} : memref<1x8x32xf32, #tpu.memory_space<vmem>>, vector<1x8x32xf32>,
    return
  }
  func.func @transform_0(%arg0: i32, %arg1: i32) -> (i32, i32, i32) {
    %c0_i32 = arith.constant 0 : i32
    %c0_i32_0 = arith.constant 0 : i32
    %c0_i32_1 = arith.constant 0 : i32
    return %arg0, %c0_i32, %c0_i32_0 : i32, i32, i32
  }
  func.func @transform_1(%arg0: i32, %arg1: i32) -> (i32, i32) {
    %c0_i32 = arith.constant 0 : i32
    %c0_i32_0 = arith.constant 0 : i32
    %c0_i32_1 = arith.constant 0 : i32
    return %c0_i32, %c0_i32_0 : i32, i32
  }
  func.func @transform_2(%arg0: i32, %arg1: i32) -> (i32, i32) {
    %c0_i32 = arith.constant 0 : i32
    %c0_i32_0 = arith.constant 0 : i32
    %c0_i32_1 = arith.constant 0 : i32
    return %c0_i32, %c0_i32_0 : i32, i32
  }
  func.func @transform_3(%arg0: i32, %arg1: i32) -> (i32, i32) {
    %c0_i32 = arith.constant 0 : i32
    %c0_i32_0 = arith.constant 0 : i32
    %c0_i32_1 = arith.constant 0 : i32
    return %c0_i32, %c0_i32_0 : i32, i32
  }
  func.func @transform_4(%arg0: i32, %arg1: i32) -> (i32, i32) {
    %c0_i32 = arith.constant 0 : i32
    %c0_i32_0 = arith.constant 0 : i32
    %c0_i32_1 = arith.constant 0 : i32
    return %c0_i32, %c0_i32_0 : i32, i32
  }
  func.func @transform_5(%arg0: i32, %arg1: i32) -> (i32, i32) {
    %c0_i32 = arith.constant 0 : i32
    %c0_i32_0 = arith.constant 0 : i32
    %c0_i32_1 = arith.constant 0 : i32
    return %c0_i32, %c0_i32_0 : i32, i32
  }
  func.func @transform_6(%arg0: i32, %arg1: i32) -> (i32, i32) {
    %c0_i32 = arith.constant 0 : i32
    %c0_i32_0 = arith.constant 0 : i32
    %c0_i32_1 = arith.constant 0 : i32
    return %c0_i32, %c0_i32_0 : i32, i32
  }
  func.func @transform_7(%arg0: i32, %arg1: i32) -> (i32, i32) {
    %c0_i32 = arith.constant 0 : i32
    %c0_i32_0 = arith.constant 0 : i32
    %c0_i32_1 = arith.constant 0 : i32
    return %c0_i32, %c0_i32_0 : i32, i32
  }
  func.func @transform_8(%arg0: i32, %arg1: i32) -> (i32, i32) {
    %c0_i32 = arith.constant 0 : i32
    %c0_i32_0 = arith.constant 0 : i32
    %c0_i32_1 = arith.constant 0 : i32
    return %c0_i32, %c0_i32_0 : i32, i32
  }
  func.func @transform_9(%arg0: i32, %arg1: i32) -> (i32, i32) {
    %c0_i32 = arith.constant 0 : i32
    %c0_i32_0 = arith.constant 0 : i32
    %c0_i32_1 = arith.constant 0 : i32
    return %c0_i32, %c0_i32_0 : i32, i32
  }
  func.func @transform_10(%arg0: i32, %arg1: i32) -> (i32, i32) {
    %c0_i32 = arith.constant 0 : i32
    %c0_i32_0 = arith.constant 0 : i32
    %c0_i32_1 = arith.constant 0 : i32
    return %c0_i32, %c0_i32_0 : i32, i32
  }
  func.func @transform_11(%arg0: i32, %arg1: i32) -> (i32, i32) {
    %c0_i32 = arith.constant 0 : i32
    %c0_i32_0 = arith.constant 0 : i32
    %c0_i32_1 = arith.constant 0 : i32
    return %c0_i32, %c0_i32_0 : i32, i32
  }
  func.func @transform_12(%arg0: i32, %arg1: i32) -> (i32, i32) {
    %c0_i32 = arith.constant 0 : i32
    %c0_i32_0 = arith.constant 0 : i32
    %c0_i32_1 = arith.constant 0 : i32
    return %c0_i32, %c0_i32_0 : i32, i32
  }
  func.func @transform_13(%arg0: i32, %arg1: i32) -> (i32, i32) {
    %c0_i32 = arith.constant 0 : i32
    %c0_i32_0 = arith.constant 0 : i32
    %c0_i32_1 = arith.constant 0 : i32
    return %c0_i32, %c0_i32_0 : i32, i32
  }
  func.func @transform_14(%arg0: i32, %arg1: i32) -> (i32, i32) {
    %c0_i32 = arith.constant 0 : i32
    %c0_i32_0 = arith.constant 0 : i32
    %c0_i32_1 = arith.constant 0 : i32
    return %c0_i32, %c0_i32_0 : i32, i32
  }
  func.func @transform_15(%arg0: i32, %arg1: i32) -> (i32, i32) {
    %c0_i32 = arith.constant 0 : i32
    %c0_i32_0 = arith.constant 0 : i32
    %c0_i32_1 = arith.constant 0 : i32
    return %c0_i32, %c0_i32_0 : i32, i32
  }
  func.func @transform_16(%arg0: i32, %arg1: i32) -> (i32, i32) {
    %c0_i32 = arith.constant 0 : i32
    %c0_i32_0 = arith.constant 0 : i32
    %c0_i32_1 = arith.constant 0 : i32
    return %c0_i32, %c0_i32_0 : i32, i32
  }
  func.func @transform_17(%arg0: i32, %arg1: i32) -> (i32, i32, i32) {
    %c0_i32 = arith.constant 0 : i32
    %c0_i32_0 = arith.constant 0 : i32
    return %arg0, %arg1, %c0_i32 : i32, i32, i32
  }
}

</mosaic_0001>

<llo_original>
// kernel: tpu_custom_call.1
$region0: #{tpu_custom_call.1}
  #allocation0 [shape = 'u32[]', space=smem, size = 0x4, offset = 0x4, fixed_abs, tag = 'smem constant byte address 0x4 - core index']
  #allocation1 [shape = 'u32[144,128]{1,0:T(1,128)}', space=vmem, size = 0x12000, scoped, tag = 'internal scratch']
  #allocation2 [shape = 'bf16[4,8,8]{2,1,0:T(8,128)(2,1)}', space=vmem, size = 0x2000, scoped, tag = 'scratch operand']
  #allocation3 [shape = 'bf16[4,8,8]{2,1,0:T(8,128)(2,1)}', space=vmem, size = 0x2000, scoped, tag = 'scratch operand']
  %s0 = inlined_call_operand.vmem [shape: f32[2,8,32], index: 0, kind: input, shape index: {}]
  %s1 = inlined_call_operand.vmem [shape: bf16[32,32], index: 1, kind: input, shape index: {}]
  %s2 = inlined_call_operand.vmem [shape: bf16[32,32], index: 2, kind: input, shape index: {}]
  %s3 = inlined_call_operand.hbm [shape: bf16[32,32], index: 3, kind: input, shape index: {}]
  %s4 = inlined_call_operand.vmem [shape: f32[1,32], index: 4, kind: input, shape index: {}]
  %s5 = inlined_call_operand.vmem [shape: f32[1,32], index: 5, kind: input, shape index: {}]
  %s6 = inlined_call_operand.hbm [shape: f32[1,32], index: 6, kind: input, shape index: {}]
  %s7 = inlined_call_operand.hbm [shape: bf16[32,32], index: 7, kind: input, shape index: {}]
  %s8 = inlined_call_operand.hbm [shape: f32[1,32], index: 8, kind: input, shape index: {}]
  %s9 = inlined_call_operand.hbm [shape: f32[1,32], index: 9, kind: input, shape index: {}]
  %s10 = inlined_call_operand.vmem [shape: f32[1,32], index: 10, kind: input, shape index: {}]
  %s11 = inlined_call_operand.vmem [shape: bf16[32,64], index: 11, kind: input, shape index: {}]
  %s12 = inlined_call_operand.vmem [shape: f32[1,64], index: 12, kind: input, shape index: {}]
  %s13 = inlined_call_operand.vmem [shape: bf16[64,32], index: 13, kind: input, shape index: {}]
  %s14 = inlined_call_operand.vmem [shape: f32[1,32], index: 14, kind: input, shape index: {}]
  %s15 = inlined_call_operand.vmem [shape: f32[1,32], index: 15, kind: input, shape index: {}]
  %s16 = inlined_call_operand.vmem [shape: f32[1,32], index: 16, kind: input, shape index: {}]
  %s17 = inlined_call_operand.hbm [shape: f32[2,8,32], index: 17, kind: output, shape index: {}]
  %s18 = sld [smem:[#allocation0]]
  $region125: #{tpu_custom_call.1} parent=0
    _
  %s20 = ssub.s32 1, %s18
  %s21 = scalar_select 0, %s20, %s18
  $region1: #{tpu_custom_call.1} parent=0
    #allocation4 [shape = 'u8[8192]{0}', space=vmem, size = 0x2000, scoped, tag = 'input window, operand 3, single buffered']
    #allocation5 [shape = 's32[2]{0}', space=sflag, size = 0x8, scoped, tag = 'scoped memory for tpu_custom_call.1']
    #allocation6 [shape = 's32[2]{0}', space=sflag, size = 0x8, scoped, tag = 'scoped memory for tpu_custom_call.1']
    #allocation7 [shape = 'u8[512]{0}', space=vmem, size = 0x400, scoped, tag = 'input window, operand 6, single buffered']
    #allocation8 [shape = 's32[1]{0}', space=sflag, size = 0x4, scoped, tag = 'scoped memory for tpu_custom_call.1']
    #allocation9 [shape = 'u8[8192]{0}', space=vmem, size = 0x2000, scoped, tag = 'input window, operand 7, single buffered']
    #allocation10 [shape = 'u8[512]{0}', space=vmem, size = 0x400, scoped, tag = 'input window, operand 8, single buffered']
    #allocation11 [shape = 's32[1]{0}', space=sflag, size = 0x4, scoped, tag = 'scoped memory for tpu_custom_call.1']
    #allocation12 [shape = 'u8[512]{0}', space=vmem, size = 0x400, scoped, tag = 'input window, operand 9, single buffered']
    #allocation13 [shape = 'u8[8192]{0}', space=vmem, size = 0x2000, scoped, tag = 'output window, operand 0']
    %22 = vsyncpa [#allocation5], 0
    %23 = vsyncpa [#allocation8], 0
    %24 = vsyncpa [#allocation11], 0
    %25 = vsyncpa [#allocation6], 0
    %s26 = scalar_lea.sflag [#allocation6], 1
    %27 = vsyncpa %s26, 0
    loop: start=0, step=1, limit=4
    $region2: #{tpu_custom_call.1} parent=1 // loop_pre_header
      _
    $region3: #{tpu_custom_call.1} parent=1 // loop_header
      %s29 = sphi 0, %s33
      %p30 = scmp.ge.s32.totalorder %s29, 4
      %s36 = sphi 0, %s48
      %s37 = sphi 0, %s44
      %s38 = sphi 0, %s36
      %s39 = sphi 0, %s37
      %s40 = sphi 0, %s38
      %s41 = sphi 0, %s39
      %s51 = sphi 0, %s53
      %s54 = sphi 0, %s51
      %s55 = sphi 0, %s54
      %s71 = sphi 0, %s55
      %s75 = sphi 0, %s75
      %s77 = sphi 0, %s75
      %s78 = sphi 0, %s77
      %s92 = sphi 0, %s78
      %s96 = sphi 0, %s96
      %s98 = sphi 0, %s96
      %s99 = sphi 0, %s98
      %s113 = sphi 0, %s99
      %s117 = sphi 0, %s117
      %s119 = sphi 0, %s117
      %s120 = sphi 0, %s119
      %s134 = sphi 0, %s120
      %s138 = sphi 0, %s138
      %s140 = sphi 0, %s138
      %s141 = sphi 0, %s140
      %s155 = sphi 0, %s141
      %s159 = sphi 0, %s159
      %s161 = sphi 0, %s159
      %s162 = sphi 0, %s161
      %s176 = sphi 0, %s162
      %s180 = sphi 0, %s180
      %s182 = sphi 0, %s180
      %s183 = sphi 0, %s182
      %s197 = sphi 0, %s183
      %s201 = sphi 0, %s201
      %s203 = sphi 0, %s201
      %s204 = sphi 0, %s203
      %s218 = sphi 0, %s204
      %s222 = sphi 0, %s222
      %s224 = sphi 0, %s222
      %s225 = sphi 0, %s224
      %s239 = sphi 0, %s225
      %s243 = sphi 0, %s243
      %s245 = sphi 0, %s243
      %s246 = sphi 0, %s245
      %s260 = sphi 0, %s246
      %s264 = sphi 0, %s264
      %s266 = sphi 0, %s264
      %s267 = sphi 0, %s266
      %s281 = sphi 0, %s267
      %s285 = sphi 0, %s285
      %s287 = sphi 0, %s285
      %s288 = sphi 0, %s287
      %s302 = sphi 0, %s288
      %s306 = sphi 0, %s306
      %s308 = sphi 0, %s306
      %s309 = sphi 0, %s308
      %s323 = sphi 0, %s309
      %s327 = sphi 0, %s327
      %s329 = sphi 0, %s327
      %s330 = sphi 0, %s329
      %s344 = sphi 0, %s330
      %s348 = sphi 0, %s348
      %s350 = sphi 0, %s348
      %s351 = sphi 0, %s350
      %s365 = sphi 0, %s351
      %s369 = sphi 0, %s369
      %s371 = sphi 0, %s369
      %s372 = sphi 0, %s371
      %s386 = sphi 0, %s372
      %s390 = sphi 0, %s390
      %s392 = sphi 0, %s390
      %s393 = sphi 0, %s392
      %s407 = sphi 0, %s393
      %s415 = sphi 0, %s417
      %s418 = sphi 0, %s415
      %s419 = sphi 0, %s418
      %s435 = sphi 0, %s419
    $region4: #{tpu_custom_call.1} parent=1 // loop_header_branch
      %32 = sbr.rel (%p30) target = $region8
    $region5: #{tpu_custom_call.1} parent=1 // loop_body
      %s34 = ssub.s32 %s29, 1
      %s35 = ssub.s32 %s29, 2
      %s42 = sadd.s32 1, %s37
      %p43 = scmp.ge.s32.totalorder %s42, 1
      %s44 = scalar_select %p43, 0, %s42
      %s45 = sadd.s32 1, %s36
      %s46 = scalar_select %p43, %s45, %s36
      %p47 = scmp.ge.s32.totalorder %s46, 2
      %s48 = scalar_select %p47, 0, %s46
      %s49 = ssub.s32 %s36, %s48
      %p50 = scmp.eq.s32.totalorder %s49, 0
      %s52 = sadd.s32 %s51, 1
      %s53 = scalar_select %p50, %s51, %s52
      %p56 = pneg %p50
      %p57 = scmp.eq.s32.totalorder %s29, 1
      %p58 = por %p56, %p57
      %p59 = scmp.ne.s32.totalorder %s51, %s54
      %p60 = scmp.eq.s32.totalorder %s29, 0
      %p61 = por %p59, %p60
      %p62 = scmp.ne.s32.totalorder %s51, %s54
      %p63 = scmp.eq.s32.totalorder %s34, 1
      %p64 = por %p62, %p63
      %p65 = scmp.ne.s32.totalorder %s54, %s55
      %p66 = scmp.eq.s32.totalorder %s34, 0
      %p67 = por %p65, %p66
      %p68 = scmp.ne.s32.totalorder %s54, %s55
      %p69 = scmp.eq.s32.totalorder %s35, 1
      %p70 = por %p68, %p69
      %p72 = scmp.ne.s32.totalorder %s55, %s71
      %p73 = scmp.eq.s32.totalorder %s35, 0
      %p74 = por %p72, %p73
      %s76 = sadd.s32 %s75, 1
      %p79 = scmp.eq.s32.totalorder %s29, 1
      %p80 = scmp.ne.s32.totalorder %s75, %s77
      %p81 = scmp.eq.s32.totalorder %s29, 0
      %p82 = por %p80, %p81
      %p83 = scmp.ne.s32.totalorder %s75, %s77
      %p84 = scmp.eq.s32.totalorder %s34, 1
      %p85 = por %p83, %p84
      %p86 = scmp.ne.s32.totalorder %s77, %s78
      %p87 = scmp.eq.s32.totalorder %s34, 0
      %p88 = por %p86, %p87
      %p89 = scmp.ne.s32.totalorder %s77, %s78
      %p90 = scmp.eq.s32.totalorder %s35, 1
      %p91 = por %p89, %p90
      %p93 = scmp.ne.s32.totalorder %s78, %s92
      %p94 = scmp.eq.s32.totalorder %s35, 0
      %p95 = por %p93, %p94
      %s97 = sadd.s32 %s96, 1
      %p100 = scmp.eq.s32.totalorder %s29, 1
      %p101 = scmp.ne.s32.totalorder %s96, %s98
      %p102 = scmp.eq.s32.totalorder %s29, 0
      %p103 = por %p101, %p102
      %p104 = scmp.ne.s32.totalorder %s96, %s98
      %p105 = scmp.eq.s32.totalorder %s34, 1
      %p106 = por %p104, %p105
      %p107 = scmp.ne.s32.totalorder %s98, %s99
      %p108 = scmp.eq.s32.totalorder %s34, 0
      %p109 = por %p107, %p108
      %p110 = scmp.ne.s32.totalorder %s98, %s99
      %p111 = scmp.eq.s32.totalorder %s35, 1
      %p112 = por %p110, %p111
      %p114 = scmp.ne.s32.totalorder %s99, %s113
      %p115 = scmp.eq.s32.totalorder %s35, 0
      %p116 = por %p114, %p115
      %s118 = sadd.s32 %s117, 1
      %p121 = scmp.eq.s32.totalorder %s29, 1
      %p122 = scmp.ne.s32.totalorder %s117, %s119
      %p123 = scmp.eq.s32.totalorder %s29, 0
      %p124 = por %p122, %p123
      %p125 = scmp.ne.s32.totalorder %s117, %s119
      %p126 = scmp.eq.s32.totalorder %s34, 1
      %p127 = por %p125, %p126
      %p128 = scmp.ne.s32.totalorder %s119, %s120
      %p129 = scmp.eq.s32.totalorder %s34, 0
      %p130 = por %p128, %p129
      %p131 = scmp.ne.s32.totalorder %s119, %s120
      %p132 = scmp.eq.s32.totalorder %s35, 1
      %p133 = por %p131, %p132
      %p135 = scmp.ne.s32.totalorder %s120, %s134
      %p136 = scmp.eq.s32.totalorder %s35, 0
      %p137 = por %p135, %p136
      %s139 = sadd.s32 %s138, 1
      %p142 = scmp.eq.s32.totalorder %s29, 1
      %p143 = scmp.ne.s32.totalorder %s138, %s140
      %p144 = scmp.eq.s32.totalorder %s29, 0
      %p145 = por %p143, %p144
      %p146 = scmp.ne.s32.totalorder %s138, %s140
      %p147 = scmp.eq.s32.totalorder %s34, 1
      %p148 = por %p146, %p147
      %p149 = scmp.ne.s32.totalorder %s140, %s141
      %p150 = scmp.eq.s32.totalorder %s34, 0
      %p151 = por %p149, %p150
      %p152 = scmp.ne.s32.totalorder %s140, %s141
      %p153 = scmp.eq.s32.totalorder %s35, 1
      %p154 = por %p152, %p153
      %p156 = scmp.ne.s32.totalorder %s141, %s155
      %p157 = scmp.eq.s32.totalorder %s35, 0
      %p158 = por %p156, %p157
      %s160 = sadd.s32 %s159, 1
      %p163 = scmp.eq.s32.totalorder %s29, 1
      %p164 = scmp.ne.s32.totalorder %s159, %s161
      %p165 = scmp.eq.s32.totalorder %s29, 0
      %p166 = por %p164, %p165
      %p167 = scmp.ne.s32.totalorder %s159, %s161
      %p168 = scmp.eq.s32.totalorder %s34, 1
      %p169 = por %p167, %p168
      %p170 = scmp.ne.s32.totalorder %s161, %s162
      %p171 = scmp.eq.s32.totalorder %s34, 0
      %p172 = por %p170, %p171
      %p173 = scmp.ne.s32.totalorder %s161, %s162
      %p174 = scmp.eq.s32.totalorder %s35, 1
      %p175 = por %p173, %p174
      %p177 = scmp.ne.s32.totalorder %s162, %s176
      %p178 = scmp.eq.s32.totalorder %s35, 0
      %p179 = por %p177, %p178
      %s181 = sadd.s32 %s180, 1
      %p184 = scmp.eq.s32.totalorder %s29, 1
      %p185 = scmp.ne.s32.totalorder %s180, %s182
      %p186 = scmp.eq.s32.totalorder %s29, 0
      %p187 = por %p185, %p186
      %p188 = scmp.ne.s32.totalorder %s180, %s182
      %p189 = scmp.eq.s32.totalorder %s34, 1
      %p190 = por %p188, %p189
      %p191 = scmp.ne.s32.totalorder %s182, %s183
      %p192 = scmp.eq.s32.totalorder %s34, 0
      %p193 = por %p191, %p192
      %p194 = scmp.ne.s32.totalorder %s182, %s183
      %p195 = scmp.eq.s32.totalorder %s35, 1
      %p196 = por %p194, %p195
      %p198 = scmp.ne.s32.totalorder %s183, %s197
      %p199 = scmp.eq.s32.totalorder %s35, 0
      %p200 = por %p198, %p199
      %s202 = sadd.s32 %s201, 1
      %p205 = scmp.eq.s32.totalorder %s29, 1
      %p206 = scmp.ne.s32.totalorder %s201, %s203
      %p207 = scmp.eq.s32.totalorder %s29, 0
      %p208 = por %p206, %p207
      %p209 = scmp.ne.s32.totalorder %s201, %s203
      %p210 = scmp.eq.s32.totalorder %s34, 1
      %p211 = por %p209, %p210
      %p212 = scmp.ne.s32.totalorder %s203, %s204
      %p213 = scmp.eq.s32.totalorder %s34, 0
      %p214 = por %p212, %p213
      %p215 = scmp.ne.s32.totalorder %s203, %s204
      %p216 = scmp.eq.s32.totalorder %s35, 1
      %p217 = por %p215, %p216
      %p219 = scmp.ne.s32.totalorder %s204, %s218
      %p220 = scmp.eq.s32.totalorder %s35, 0
      %p221 = por %p219, %p220
      %s223 = sadd.s32 %s222, 1
      %p226 = scmp.eq.s32.totalorder %s29, 1
      %p227 = scmp.ne.s32.totalorder %s222, %s224
      %p228 = scmp.eq.s32.totalorder %s29, 0
      %p229 = por %p227, %p228
      %p230 = scmp.ne.s32.totalorder %s222, %s224
      %p231 = scmp.eq.s32.totalorder %s34, 1
      %p232 = por %p230, %p231
      %p233 = scmp.ne.s32.totalorder %s224, %s225
      %p234 = scmp.eq.s32.totalorder %s34, 0
      %p235 = por %p233, %p234
      %p236 = scmp.ne.s32.totalorder %s224, %s225
      %p237 = scmp.eq.s32.totalorder %s35, 1
      %p238 = por %p236, %p237
      %p240 = scmp.ne.s32.totalorder %s225, %s239
      %p241 = scmp.eq.s32.totalorder %s35, 0
      %p242 = por %p240, %p241
      %s244 = sadd.s32 %s243, 1
      %p247 = scmp.eq.s32.totalorder %s29, 1
      %p248 = scmp.ne.s32.totalorder %s243, %s245
      %p249 = scmp.eq.s32.totalorder %s29, 0
      %p250 = por %p248, %p249
      %p251 = scmp.ne.s32.totalorder %s243, %s245
      %p252 = scmp.eq.s32.totalorder %s34, 1
      %p253 = por %p251, %p252
      %p254 = scmp.ne.s32.totalorder %s245, %s246
      %p255 = scmp.eq.s32.totalorder %s34, 0
      %p256 = por %p254, %p255
      %p257 = scmp.ne.s32.totalorder %s245, %s246
      %p258 = scmp.eq.s32.totalorder %s35, 1
      %p259 = por %p257, %p258
      %p261 = scmp.ne.s32.totalorder %s246, %s260
      %p262 = scmp.eq.s32.totalorder %s35, 0
      %p263 = por %p261, %p262
      %s265 = sadd.s32 %s264, 1
      %p268 = scmp.eq.s32.totalorder %s29, 1
      %p269 = scmp.ne.s32.totalorder %s264, %s266
      %p270 = scmp.eq.s32.totalorder %s29, 0
      %p271 = por %p269, %p270
      %p272 = scmp.ne.s32.totalorder %s264, %s266
      %p273 = scmp.eq.s32.totalorder %s34, 1
      %p274 = por %p272, %p273
      %p275 = scmp.ne.s32.totalorder %s266, %s267
      %p276 = scmp.eq.s32.totalorder %s34, 0
      %p277 = por %p275, %p276
      %p278 = scmp.ne.s32.totalorder %s266, %s267
      %p279 = scmp.eq.s32.totalorder %s35, 1
      %p280 = por %p278, %p279
      %p282 = scmp.ne.s32.totalorder %s267, %s281
      %p283 = scmp.eq.s32.totalorder %s35, 0
      %p284 = por %p282, %p283
      %s286 = sadd.s32 %s285, 1
      %p289 = scmp.eq.s32.totalorder %s29, 1
      %p290 = scmp.ne.s32.totalorder %s285, %s287
      %p291 = scmp.eq.s32.totalorder %s29, 0
      %p292 = por %p290, %p291
      %p293 = scmp.ne.s32.totalorder %s285, %s287
      %p294 = scmp.eq.s32.totalorder %s34, 1
      %p295 = por %p293, %p294
      %p296 = scmp.ne.s32.totalorder %s287, %s288
      %p297 = scmp.eq.s32.totalorder %s34, 0
      %p298 = por %p296, %p297
      %p299 = scmp.ne.s32.totalorder %s287, %s288
      %p300 = scmp.eq.s32.totalorder %s35, 1
      %p301 = por %p299, %p300
      %p303 = scmp.ne.s32.totalorder %s288, %s302
      %p304 = scmp.eq.s32.totalorder %s35, 0
      %p305 = por %p303, %p304
      %s307 = sadd.s32 %s306, 1
      %p310 = scmp.eq.s32.totalorder %s29, 1
      %p311 = scmp.ne.s32.totalorder %s306, %s308
      %p312 = scmp.eq.s32.totalorder %s29, 0
      %p313 = por %p311, %p312
      %p314 = scmp.ne.s32.totalorder %s306, %s308
      %p315 = scmp.eq.s32.totalorder %s34, 1
      %p316 = por %p314, %p315
      %p317 = scmp.ne.s32.totalorder %s308, %s309
      %p318 = scmp.eq.s32.totalorder %s34, 0
      %p319 = por %p317, %p318
      %p320 = scmp.ne.s32.totalorder %s308, %s309
      %p321 = scmp.eq.s32.totalorder %s35, 1
      %p322 = por %p320, %p321
      %p324 = scmp.ne.s32.totalorder %s309, %s323
      %p325 = scmp.eq.s32.totalorder %s35, 0
      %p326 = por %p324, %p325
      %s328 = sadd.s32 %s327, 1
      %p331 = scmp.eq.s32.totalorder %s29, 1
      %p332 = scmp.ne.s32.totalorder %s327, %s329
      %p333 = scmp.eq.s32.totalorder %s29, 0
      %p334 = por %p332, %p333
      %p335 = scmp.ne.s32.totalorder %s327, %s329
      %p336 = scmp.eq.s32.totalorder %s34, 1
      %p337 = por %p335, %p336
      %p338 = scmp.ne.s32.totalorder %s329, %s330
      %p339 = scmp.eq.s32.totalorder %s34, 0
      %p340 = por %p338, %p339
      %p341 = scmp.ne.s32.totalorder %s329, %s330
      %p342 = scmp.eq.s32.totalorder %s35, 1
      %p343 = por %p341, %p342
      %p345 = scmp.ne.s32.totalorder %s330, %s344
      %p346 = scmp.eq.s32.totalorder %s35, 0
      %p347 = por %p345, %p346
      %s349 = sadd.s32 %s348, 1
      %p352 = scmp.eq.s32.totalorder %s29, 1
      %p353 = scmp.ne.s32.totalorder %s348, %s350
      %p354 = scmp.eq.s32.totalorder %s29, 0
      %p355 = por %p353, %p354
      %p356 = scmp.ne.s32.totalorder %s348, %s350
      %p357 = scmp.eq.s32.totalorder %s34, 1
      %p358 = por %p356, %p357
      %p359 = scmp.ne.s32.totalorder %s350, %s351
      %p360 = scmp.eq.s32.totalorder %s34, 0
      %p361 = por %p359, %p360
      %p362 = scmp.ne.s32.totalorder %s350, %s351
      %p363 = scmp.eq.s32.totalorder %s35, 1
      %p364 = por %p362, %p363
      %p366 = scmp.ne.s32.totalorder %s351, %s365
      %p367 = scmp.eq.s32.totalorder %s35, 0
      %p368 = por %p366, %p367
      %s370 = sadd.s32 %s369, 1
      %p373 = scmp.eq.s32.totalorder %s29, 1
      %p374 = scmp.ne.s32.totalorder %s369, %s371
      %p375 = scmp.eq.s32.totalorder %s29, 0
      %p376 = por %p374, %p375
      %p377 = scmp.ne.s32.totalorder %s369, %s371
      %p378 = scmp.eq.s32.totalorder %s34, 1
      %p379 = por %p377, %p378
      %p380 = scmp.ne.s32.totalorder %s371, %s372
      %p381 = scmp.eq.s32.totalorder %s34, 0
      %p382 = por %p380, %p381
      %p383 = scmp.ne.s32.totalorder %s371, %s372
      %p384 = scmp.eq.s32.totalorder %s35, 1
      %p385 = por %p383, %p384
      %p387 = scmp.ne.s32.totalorder %s372, %s386
      %p388 = scmp.eq.s32.totalorder %s35, 0
      %p389 = por %p387, %p388
      %s391 = sadd.s32 %s390, 1
      %p394 = scmp.eq.s32.totalorder %s29, 1
      %p395 = scmp.ne.s32.totalorder %s390, %s392
      %p396 = scmp.eq.s32.totalorder %s29, 0
      %p397 = por %p395, %p396
      %p398 = scmp.ne.s32.totalorder %s390, %s392
      %p399 = scmp.eq.s32.totalorder %s34, 1
      %p400 = por %p398, %p399
      %p401 = scmp.ne.s32.totalorder %s392, %s393
      %p402 = scmp.eq.s32.totalorder %s34, 0
      %p403 = por %p401, %p402
      %p404 = scmp.ne.s32.totalorder %s392, %s393
      %p405 = scmp.eq.s32.totalorder %s35, 1
      %p406 = por %p404, %p405
      %p408 = scmp.ne.s32.totalorder %s393, %s407
      %p409 = scmp.eq.s32.totalorder %s35, 0
      %p410 = por %p408, %p409
      %s411 = ssub.s32 %s36, %s48
      %s412 = ssub.s32 %s37, %s44
      %s413 = sor.u32 %s411, %s412
      %p414 = scmp.eq.s32.totalorder %s413, 0
      %s416 = sadd.s32 %s415, 1
      %s417 = scalar_select %p414, %s415, %s416
      %p420 = pneg %p414
      %p421 = scmp.eq.s32.totalorder %s29, 1
      %p422 = por %p420, %p421
      %p423 = scmp.ne.s32.totalorder %s415, %s418
      %p424 = scmp.eq.s32.totalorder %s29, 0
      %p425 = por %p423, %p424
      %p426 = scmp.ne.s32.totalorder %s415, %s418
      %p427 = scmp.eq.s32.totalorder %s34, 1
      %p428 = por %p426, %p427
      %p429 = scmp.ne.s32.totalorder %s418, %s419
      %p430 = scmp.eq.s32.totalorder %s34, 0
      %p431 = por %p429, %p430
      %p432 = scmp.ne.s32.totalorder %s418, %s419
      %p433 = scmp.eq.s32.totalorder %s35, 1
      %p434 = por %p432, %p433
      %p436 = scmp.ne.s32.totalorder %s419, %s435
      %p437 = scmp.eq.s32.totalorder %s35, 0
      %p438 = por %p436, %p437
      %p439 = scmp.le.s32.totalorder 1, %s29
      %p440 = scmp.lt.s32.totalorder %s29, 3
      %p441 = pnand %p439, %p440
      %p442 = pneg %p441
      // Predicated region
      $region9: #{tpu_custom_call.1} parent=5 // pred_check
        _
      $region10: #{tpu_custom_call.1} parent=5 // pred_check_branch
        %444 = sbr.rel (%p441) target = $region12
      $region11: #{tpu_custom_call.1} parent=5 // pred_region
        %s445 = ssub.s32 %s29, 1
        // Predicated region
        $region13: #{tpu_custom_call.1} parent=11 // pred_check
          %p446 = pneg %p88
        $region14: #{tpu_custom_call.1} parent=11 // pred_check_branch
          %448 = sbr.rel (%p446) target = $region16
        $region15: #{tpu_custom_call.1} parent=11 // pred_region
          _
        $region16: #{tpu_custom_call.1} parent=11 // pred_fallthru
          _
        // Predicated region
        $region17: #{tpu_custom_call.1} parent=11 // pred_check
          %p449 = pneg %p109
        $region18: #{tpu_custom_call.1} parent=11 // pred_check_branch
          %451 = sbr.rel (%p449) target = $region20
        $region19: #{tpu_custom_call.1} parent=11 // pred_region
          _
        $region20: #{tpu_custom_call.1} parent=11 // pred_fallthru
          _
        // Predicated region
        $region21: #{tpu_custom_call.1} parent=11 // pred_check
          %p452 = pneg %p130
        $region22: #{tpu_custom_call.1} parent=11 // pred_check_branch
          %454 = sbr.rel (%p452) target = $region24
        $region23: #{tpu_custom_call.1} parent=11 // pred_region
          %s456 = ssub.s32 256, 256
          %457 = vsyncadd [#allocation5], %s456
          %s458 = sshll.u32 [#allocation4], 4
          %s459 = int_to_ptr.vmem [resolvable:$true] %s458
          %464 = dma.hbm_to_vmem [thread:$0]  %s3, 256, %s459, [#allocation5], 64, 64, 4
        $region24: #{tpu_custom_call.1} parent=11 // pred_fallthru
          _
        // Predicated region
        $region25: #{tpu_custom_call.1} parent=11 // pred_check
          %p465 = pneg %p151
        $region26: #{tpu_custom_call.1} parent=11 // pred_check_branch
          %467 = sbr.rel (%p465) target = $region28
        $region27: #{tpu_custom_call.1} parent=11 // pred_region
          _
        $region28: #{tpu_custom_call.1} parent=11 // pred_fallthru
          _
        // Predicated region
        $region29: #{tpu_custom_call.1} parent=11 // pred_check
          %p468 = pneg %p172
        $region30: #{tpu_custom_call.1} parent=11 // pred_check_branch
          %470 = sbr.rel (%p468) target = $region32
        $region31: #{tpu_custom_call.1} parent=11 // pred_region
          _
        $region32: #{tpu_custom_call.1} parent=11 // pred_fallthru
          _
        // Predicated region
        $region33: #{tpu_custom_call.1} parent=11 // pred_check
          %p471 = pneg %p193
        $region34: #{tpu_custom_call.1} parent=11 // pred_check_branch
          %473 = sbr.rel (%p471) target = $region36
        $region35: #{tpu_custom_call.1} parent=11 // pred_region
          %s475 = ssub.s32 16, 16
          %476 = vsyncadd [#allocation8], %s475
          %s478 = sshll.u32 [#allocation7], 4
          %s479 = int_to_ptr.vmem [resolvable:$true] %s478
          %481 = dma.hbm_to_vmem [thread:$0]  %s6, 16, %s479, [#allocation8]
        $region36: #{tpu_custom_call.1} parent=11 // pred_fallthru
          _
        // Predicated region
        $region37: #{tpu_custom_call.1} parent=11 // pred_check
          %p482 = pneg %p214
        $region38: #{tpu_custom_call.1} parent=11 // pred_check_branch
          %484 = sbr.rel (%p482) target = $region40
        $region39: #{tpu_custom_call.1} parent=11 // pred_region
          %s486 = ssub.s32 256, 256
          %487 = vsyncadd [#allocation8], %s486
          %s488 = sshll.u32 [#allocation9], 4
          %s489 = int_to_ptr.vmem [resolvable:$true] %s488
          %494 = dma.hbm_to_vmem [thread:$0]  %s7, 256, %s489, [#allocation8], 64, 64, 4
        $region40: #{tpu_custom_call.1} parent=11 // pred_fallthru
          _
        // Predicated region
        $region41: #{tpu_custom_call.1} parent=11 // pred_check
          %p495 = pneg %p235
        $region42: #{tpu_custom_call.1} parent=11 // pred_check_branch
          %497 = sbr.rel (%p495) target = $region44
        $region43: #{tpu_custom_call.1} parent=11 // pred_region
          %s499 = ssub.s32 16, 16
          %500 = vsyncadd [#allocation11], %s499
          %s502 = sshll.u32 [#allocation10], 4
          %s503 = int_to_ptr.vmem [resolvable:$true] %s502
          %505 = dma.hbm_to_vmem [thread:$0]  %s8, 16, %s503, [#allocation11]
        $region44: #{tpu_custom_call.1} parent=11 // pred_fallthru
          _
        // Predicated region
        $region45: #{tpu_custom_call.1} parent=11 // pred_check
          %p506 = pneg %p256
        $region46: #{tpu_custom_call.1} parent=11 // pred_check_branch
          %508 = sbr.rel (%p506) target = $region48
        $region47: #{tpu_custom_call.1} parent=11 // pred_region
          %s510 = ssub.s32 16, 16
          %511 = vsyncadd [#allocation11], %s510
          %s513 = sshll.u32 [#allocation12], 4
          %s514 = int_to_ptr.vmem [resolvable:$true] %s513
          %516 = dma.hbm_to_vmem [thread:$0]  %s9, 16, %s514, [#allocation11]
        $region48: #{tpu_custom_call.1} parent=11 // pred_fallthru
          _
        // Predicated region
        $region49: #{tpu_custom_call.1} parent=11 // pred_check
          %p517 = pneg %p277
        $region50: #{tpu_custom_call.1} parent=11 // pred_check_branch
          %519 = sbr.rel (%p517) target = $region52
        $region51: #{tpu_custom_call.1} parent=11 // pred_region
          _
        $region52: #{tpu_custom_call.1} parent=11 // pred_fallthru
          _
        // Predicated region
        $region53: #{tpu_custom_call.1} parent=11 // pred_check
          %p520 = pneg %p298
        $region54: #{tpu_custom_call.1} parent=11 // pred_check_branch
          %522 = sbr.rel (%p520) target = $region56
        $region55: #{tpu_custom_call.1} parent=11 // pred_region
          _
        $region56: #{tpu_custom_call.1} parent=11 // pred_fallthru
          _
        // Predicated region
        $region57: #{tpu_custom_call.1} parent=11 // pred_check
          %p523 = pneg %p319
        $region58: #{tpu_custom_call.1} parent=11 // pred_check_branch
          %525 = sbr.rel (%p523) target = $region60
        $region59: #{tpu_custom_call.1} parent=11 // pred_region
          _
        $region60: #{tpu_custom_call.1} parent=11 // pred_fallthru
          _
        // Predicated region
        $region61: #{tpu_custom_call.1} parent=11 // pred_check
          %p526 = pneg %p340
        $region62: #{tpu_custom_call.1} parent=11 // pred_check_branch
          %528 = sbr.rel (%p526) target = $region64
        $region63: #{tpu_custom_call.1} parent=11 // pred_region
          _
        $region64: #{tpu_custom_call.1} parent=11 // pred_fallthru
          _
        // Predicated region
        $region65: #{tpu_custom_call.1} parent=11 // pred_check
          %p529 = pneg %p361
        $region66: #{tpu_custom_call.1} parent=11 // pred_check_branch
          %531 = sbr.rel (%p529) target = $region68
        $region67: #{tpu_custom_call.1} parent=11 // pred_region
          _
        $region68: #{tpu_custom_call.1} parent=11 // pred_fallthru
          _
        // Predicated region
        $region69: #{tpu_custom_call.1} parent=11 // pred_check
          %p532 = pneg %p382
        $region70: #{tpu_custom_call.1} parent=11 // pred_check_branch
          %534 = sbr.rel (%p532) target = $region72
        $region71: #{tpu_custom_call.1} parent=11 // pred_region
          _
        $region72: #{tpu_custom_call.1} parent=11 // pred_fallthru
          _
        // Predicated region
        $region73: #{tpu_custom_call.1} parent=11 // pred_check
          %p535 = pneg %p403
        $region74: #{tpu_custom_call.1} parent=11 // pred_check_branch
          %537 = sbr.rel (%p535) target = $region76
        $region75: #{tpu_custom_call.1} parent=11 // pred_region
          _
        $region76: #{tpu_custom_call.1} parent=11 // pred_fallthru
          _
      $region12: #{tpu_custom_call.1} parent=5 // pred_fallthru
        _
      %p538 = scmp.lt.s32.totalorder %s29, 2
      // Predicated region
      $region77: #{tpu_custom_call.1} parent=5 // pred_check
        %p539 = pneg %p538
      $region78: #{tpu_custom_call.1} parent=5 // pred_check_branch
        %541 = sbr.rel (%p539) target = $region80
      $region79: #{tpu_custom_call.1} parent=5 // pred_region
        // Predicated region
        $region81: #{tpu_custom_call.1} parent=79 // pred_check
          %p542 = pneg %p61
        $region82: #{tpu_custom_call.1} parent=79 // pred_check_branch
          %544 = sbr.rel (%p542) target = $region84
        $region83: #{tpu_custom_call.1} parent=79 // pred_region
          %p545 = scmp.lt.s32.totalorder %s36, 1
          %s546 = scalar_select %p545, %s36, 1
          %s547 = smul.addr %s546, 8
          %s548 = scalar_lea.vmem %s0, %s547
        $region84: #{tpu_custom_call.1} parent=79 // pred_fallthru
          _
      $region80: #{tpu_custom_call.1} parent=5 // pred_fallthru
        _
      %p549 = scmp.le.s32.totalorder 1, %s29
      %p550 = scmp.lt.s32.totalorder %s29, 3
      %p551 = pnand %p549, %p550
      %p552 = pneg %p551
      // Predicated region
      $region85: #{tpu_custom_call.1} parent=5 // pred_check
        _
      $region86: #{tpu_custom_call.1} parent=5 // pred_check_branch
        %554 = sbr.rel (%p551) target = $region88
      $region87: #{tpu_custom_call.1} parent=5 // pred_region
        %s555 = ssub.s32 %s29, 1
        // Predicated region
        $region89: #{tpu_custom_call.1} parent=87 // pred_check
          %p556 = pneg %p130
        $region90: #{tpu_custom_call.1} parent=87 // pred_check_branch
          %558 = sbr.rel (%p556) target = $region92
        $region91: #{tpu_custom_call.1} parent=87 // pred_region
          %559 = dma.done [#allocation5], 256
        $region92: #{tpu_custom_call.1} parent=87 // pred_fallthru
          _
        // Predicated region
        $region93: #{tpu_custom_call.1} parent=87 // pred_check
          %p560 = pneg %p193
        $region94: #{tpu_custom_call.1} parent=87 // pred_check_branch
          %562 = sbr.rel (%p560) target = $region96
        $region95: #{tpu_custom_call.1} parent=87 // pred_region
          %563 = dma.done [#allocation8], 16
        $region96: #{tpu_custom_call.1} parent=87 // pred_fallthru
          _
        // Predicated region
        $region97: #{tpu_custom_call.1} parent=87 // pred_check
          %p564 = pneg %p214
        $region98: #{tpu_custom_call.1} parent=87 // pred_check_branch
          %566 = sbr.rel (%p564) target = $region100
        $region99: #{tpu_custom_call.1} parent=87 // pred_region
          %567 = dma.done [#allocation8], 256
        $region100: #{tpu_custom_call.1} parent=87 // pred_fallthru
          _
        // Predicated region
        $region101: #{tpu_custom_call.1} parent=87 // pred_check
          %p568 = pneg %p235
        $region102: #{tpu_custom_call.1} parent=87 // pred_check_branch
          %570 = sbr.rel (%p568) target = $region104
        $region103: #{tpu_custom_call.1} parent=87 // pred_region
          %571 = dma.done [#allocation11], 16
        $region104: #{tpu_custom_call.1} parent=87 // pred_fallthru
          _
        // Predicated region
        $region105: #{tpu_custom_call.1} parent=87 // pred_check
          %p572 = pneg %p256
        $region106: #{tpu_custom_call.1} parent=87 // pred_check_branch
          %574 = sbr.rel (%p572) target = $region108
        $region107: #{tpu_custom_call.1} parent=87 // pred_region
          %575 = dma.done [#allocation11], 16
        $region108: #{tpu_custom_call.1} parent=87 // pred_fallthru
          _
        %p576 = scmp.lt.s32.totalorder %s38, 1
        %s577 = scalar_select %p576, %s38, 1
        %s578 = smul.addr %s577, 8
        %s579 = scalar_lea.vmem %s0, %s578
        %p580 = pneg %p67
        %p581 = pneg %p64
        %p582 = pneg %p88
        %p583 = pneg %p85
        %p584 = pneg %p109
        %p585 = pneg %p106
        %p586 = pneg %p130
        %p587 = pneg %p127
        %p588 = pneg %p151
        %p589 = pneg %p148
        %p590 = pneg %p172
        %p591 = pneg %p169
        %p592 = pneg %p193
        %p593 = pneg %p190
        %p594 = pneg %p214
        %p595 = pneg %p211
        %p596 = pneg %p235
        %p597 = pneg %p232
        %p598 = pneg %p256
        %p599 = pneg %p253
        %p600 = pneg %p277
        %p601 = pneg %p274
        %p602 = pneg %p298
        %p603 = pneg %p295
        %p604 = pneg %p319
        %p605 = pneg %p316
        %p606 = pneg %p340
        %p607 = pneg %p337
        %p608 = pneg %p361
        %p609 = pneg %p358
        %p610 = pneg %p382
        %p611 = pneg %p379
        %p612 = pneg %p403
        %p613 = pneg %p400
        %p614 = pneg %p431
        %p615 = pneg %p428
        %s616 = sand.u32 %s418, 1
        %s617 = scalar_lea.sflag [#allocation6], %s616
        %s618 = sand.u32 %s418, 1
        %s619 = smul.addr %s618, 8
        %s620 = scalar_lea.vmem [#allocation13], %s619
        %p621 = scmp.lt.s32.totalorder %s38, 1
        %s622 = scalar_select %p621, %s38, 1
        %s623 = smul.addr %s622, 8
        %s624 = scalar_lea.vmem %s0, %s623
        %p626 = scmp.eq.s32.totalorder %s39, 0
        // Predicated region
        $region109: #{tpu_custom_call.1} parent=87 // pred_check
          %p627 = pneg %p626
        $region110: #{tpu_custom_call.1} parent=87 // pred_check_branch
          %629 = sbr.rel (%p627) target = $region112
        $region111: #{tpu_custom_call.1} parent=87 // pred_region
          %v630 = vld [vmem:[%s624] sm:$0xff]
          %v631 = vpack.c.bf16 %v630, %v630
          %v632 = vld [vmem:[%s2] sm:$0xf]
          %v633 = vld [vmem:[%s2 + $0x4] sm:$0xf]
          %v634 = vld [vmem:[%s2 + $0x8] sm:$0xf]
          %v635 = vld [vmem:[%s2 + $0xc] sm:$0xf]
          %v636 = vld [vmem:[%s5] sm:$0x1]
          %v638 = vlaneseq
          %v639 = vshrl.u32 %v638, 7
          %v640 = vsub.s32 0, %v639
          %v641 = vrot.slane %v636, %v640
          %v647 = vunpack.c.l.b16 %v632
          %v648 = vunpack.c.l.b16 %v633
          %v649 = vunpack.c.l.b16 %v634
          %v650 = vunpack.c.l.b16 %v635
          %v651 = vpack.c.b16 %v648, %v647
          %v652 = vpack.c.b16 %v650, %v649
          %vm655 = vcmask 261120
          %v657 = vsel %vm655, %v631, 0
          %659 = vmatprep.subr.bf16.mxu0 0
          %660 = vmatpush1.bf16.msra.mxu0 %v651
          %661 = vmatprep.subr.bf16.mxu0 0
          %662 = vmatpush1.bf16.msra.mxu0 %v652
          %663 = vmatprep.subr.bf16.mxu0 0
          %664 = vmatpush1.bf16.msra.mxu0 0
          %665 = vmatprep.subr.bf16.mxu0 0
          %666 = vmatpush1.bf16.msra.mxu0 0
          %667 = vmatprep.subr.bf16.mxu0 0
          %668 = vmatpush1.bf16.msra.mxu0 0
          %669 = vmatprep.subr.bf16.mxu0 0
          %670 = vmatpush1.bf16.msra.mxu0 0
          %671 = vmatprep.subr.bf16.mxu0 0
          %672 = vmatpush1.bf16.msra.mxu0 0
          %673 = vmatprep.subr.bf16.mxu0 0
          %674 = vmatpush1.bf16.msra.mxu0 0
          %675 = vmatprep.subr.bf16.mxu0 0
          %676 = vmatpush1.bf16.msra.mxu0 0
          %677 = vmatprep.subr.bf16.mxu0 0
          %678 = vmatpush1.bf16.msra.mxu0 0
          %679 = vmatprep.subr.bf16.mxu0 0
          %680 = vmatpush1.bf16.msra.mxu0 0
          %681 = vmatprep.subr.bf16.mxu0 0
          %682 = vmatpush1.bf16.msra.mxu0 0
          %683 = vmatprep.subr.bf16.mxu0 0
          %684 = vmatpush1.bf16.msra.mxu0 0
          %685 = vmatprep.subr.bf16.mxu0 0
          %686 = vmatpush1.bf16.msra.mxu0 0
          %687 = vmatprep.subr.bf16.mxu0 0
          %688 = vmatpush1.bf16.msra.mxu0 0
          %689 = vmatprep.subr.bf16.mxu0 0
          %690 = vmatpush1.bf16.msra.mxu0 0
          %691 = vmatprep.mubr.bf16.mxu0 0
          %692 = vmatmul.mubr.bf16.gmra.mrb[0].mxu0 %v657
          %v693 = vpop.f32.mrb[0].mxu0
          %v694 = vadd.f32 %v641, %v693
          %v695 = vpop.f32.mrb[0].mxu0
          %v696 = vpop.f32.mrb[0].mxu0
          %v697 = vpop.f32.mrb[0].mxu0
          %698 = vdwg.mxu0
          %v699 = vld [vmem:[#allocation4] sm:$0xf]
          %v700 = vld [vmem:[#allocation4 + $0x4] sm:$0xf]
          %v701 = vld [vmem:[#allocation4 + $0x8] sm:$0xf]
          %v702 = vld [vmem:[#allocation4 + $0xc] sm:$0xf]
          %v703 = vld [vmem:[#allocation7] sm:$0x1]
          %v705 = vlaneseq
          %v706 = vshrl.u32 %v705, 7
          %v707 = vsub.s32 0, %v706
          %v708 = vrot.slane %v703, %v707
          %v714 = vunpack.c.l.b16 %v699
          %v715 = vunpack.c.l.b16 %v700
          %v716 = vunpack.c.l.b16 %v701
          %v717 = vunpack.c.l.b16 %v702
          %v718 = vpack.c.b16 %v715, %v714
          %v719 = vpack.c.b16 %v717, %v716
          %722 = vmatprep.subr.bf16.mxu0 0
          %723 = vmatpush1.bf16.msra.mxu0 %v718
          %724 = vmatprep.subr.bf16.mxu0 0
          %725 = vmatpush1.bf16.msra.mxu0 %v719
          %726 = vmatprep.subr.bf16.mxu0 0
          %727 = vmatpush1.bf16.msra.mxu0 0
          %728 = vmatprep.subr.bf16.mxu0 0
          %729 = vmatpush1.bf16.msra.mxu0 0
          %730 = vmatprep.subr.bf16.mxu0 0
          %731 = vmatpush1.bf16.msra.mxu0 0
          %732 = vmatprep.subr.bf16.mxu0 0
          %733 = vmatpush1.bf16.msra.mxu0 0
          %734 = vmatprep.subr.bf16.mxu0 0
          %735 = vmatpush1.bf16.msra.mxu0 0
          %736 = vmatprep.subr.bf16.mxu0 0
          %737 = vmatpush1.bf16.msra.mxu0 0
          %738 = vmatprep.subr.bf16.mxu0 0
          %739 = vmatpush1.bf16.msra.mxu0 0
          %740 = vmatprep.subr.bf16.mxu0 0
          %741 = vmatpush1.bf16.msra.mxu0 0
          %742 = vmatprep.subr.bf16.mxu0 0
          %743 = vmatpush1.bf16.msra.mxu0 0
          %744 = vmatprep.subr.bf16.mxu0 0
          %745 = vmatpush1.bf16.msra.mxu0 0
          %746 = vmatprep.subr.bf16.mxu0 0
          %747 = vmatpush1.bf16.msra.mxu0 0
          %748 = vmatprep.subr.bf16.mxu0 0
          %749 = vmatpush1.bf16.msra.mxu0 0
          %750 = vmatprep.subr.bf16.mxu0 0
          %751 = vmatpush1.bf16.msra.mxu0 0
          %752 = vmatprep.subr.bf16.mxu0 0
          %753 = vmatpush1.bf16.msra.mxu0 0
          %754 = vmatprep.mubr.bf16.mxu0 0
          %755 = vmatmul.mubr.bf16.gmra.mrb[0].mxu0 %v657
          %v756 = vpop.f32.mrb[0].mxu0
          %v757 = vadd.f32 %v708, %v756
          %v758 = vpop.f32.mrb[0].mxu0
          %v759 = vpop.f32.mrb[0].mxu0
          %v760 = vpop.f32.mrb[0].mxu0
          %761 = vdwg.mxu0
          %v762 = vpack.c.bf16 %v694, %v694
          %764 = vrot.lane.b32.xlu0 %v762, 120
          %v765 = vpop.permute.xlu0 %764
          %766 = vrot.lane.b32.xlu0 %v762, 112
          %v767 = vpop.permute.xlu0 %766
          %768 = vrot.lane.b32.xlu0 %v762, 104
          %v769 = vpop.permute.xlu0 %768
          %v771 = vunpack.c.l.s4 1983009808
          %v772 = vunpack.c.0.s8 %v771
          %v773 = vlaneseq
          %v774 = vshrl.u32 %v773, 7
          %v775 = vsub.s32 %v772, %v774
          %v776 = vrot.slane %v762, %v775
          %v779 = vunpack.c.l.s4 1983009808
          %v780 = vunpack.c.0.s8 %v779
          %v781 = vlaneseq
          %v782 = vshrl.u32 %v781, 7
          %v783 = vsub.s32 %v780, %v782
          %v784 = vrot.slane %v767, %v783
          %v785 = vcombine.low %v776, %v784
          %v786 = vcombine.high %v776, %v784
          %v788 = vunpack.c.l.s4 1934713408
          %v789 = vunpack.c.0.s8 %v788
          %v790 = vlaneseq
          %v791 = vshrl.u32 %v790, 7
          %v792 = vsub.s32 %v789, %v791
          %v793 = vrot.slane %v785, %v792
          %v795 = vunpack.c.l.s4 1934713408
          %v796 = vunpack.c.0.s8 %v795
          %v797 = vlaneseq
          %v798 = vshrl.u32 %v797, 7
          %v799 = vsub.s32 %v796, %v798
          %v800 = vrot.slane %v786, %v799
          %v801 = vcombine.high %v793, 0
          %v802 = vcombine.high %v800, 0
          %v805 = vunpack.c.l.s4 1983009808
          %v806 = vunpack.c.0.s8 %v805
          %v807 = vlaneseq
          %v808 = vshrl.u32 %v807, 7
          %v809 = vsub.s32 %v806, %v808
          %v810 = vrot.slane %v765, %v809
          %v813 = vunpack.c.l.s4 1983009808
          %v814 = vunpack.c.0.s8 %v813
          %v815 = vlaneseq
          %v816 = vshrl.u32 %v815, 7
          %v817 = vsub.s32 %v814, %v816
          %v818 = vrot.slane %v769, %v817
          %v819 = vcombine.low %v810, %v818
          %v820 = vcombine.high %v810, %v818
          %v822 = vunpack.c.l.s4 1934713408
          %v823 = vunpack.c.0.s8 %v822
          %v824 = vlaneseq
          %v825 = vshrl.u32 %v824, 7
          %v826 = vsub.s32 %v823, %v825
          %v827 = vrot.slane %v819, %v826
          %v829 = vunpack.c.l.s4 1934713408
          %v830 = vunpack.c.0.s8 %v829
          %v831 = vlaneseq
          %v832 = vshrl.u32 %v831, 7
          %v833 = vsub.s32 %v830, %v832
          %v834 = vrot.slane %v820, %v833
          %v835 = vcombine.high %v827, 0
          %v836 = vcombine.high %v834, 0
          %v839 = vpack.i.b16 %v827, %v793
          %v841 = vshrl.u32 %v793, 16
          %v842 = vshrl.u32 %v827, 16
          %v843 = vpack.i.b16 %v842, %v841
          %v847 = vpack.i.b16 %v835, %v801
          %v849 = vshrl.u32 %v801, 16
          %v850 = vshrl.u32 %v835, 16
          %v851 = vpack.i.b16 %v850, %v849
          %v855 = vpack.i.b16 %v834, %v800
          %v857 = vshrl.u32 %v800, 16
          %v858 = vshrl.u32 %v834, 16
          %v859 = vpack.i.b16 %v858, %v857
          %v863 = vpack.i.b16 %v836, %v802
          %v865 = vshrl.u32 %v802, 16
          %v866 = vshrl.u32 %v836, 16
          %v867 = vpack.i.b16 %v866, %v865
          %v869 = vcombine.low %v839, %v855
          %v871 = vunpack.c.l.s4 1983009808
          %v872 = vunpack.c.0.s8 %v871
          %v873 = vlaneseq
          %v874 = vshrl.u32 %v873, 7
          %v875 = vsub.s32 %v872, %v874
          %v876 = vrot.slane %v869, %v875
          %v877 = vcombine.low %v847, %v863
          %v879 = vunpack.c.l.s4 1983009808
          %v880 = vunpack.c.0.s8 %v879
          %v881 = vlaneseq
          %v882 = vshrl.u32 %v881, 7
          %v883 = vsub.s32 %v880, %v882
          %v884 = vrot.slane %v877, %v883
          %v885 = vcombine.low %v876, %v884
          %v887 = vunpack.c.l.s4 1934713408
          %v888 = vunpack.c.0.s8 %v887
          %v889 = vlaneseq
          %v890 = vshrl.u32 %v889, 7
          %v891 = vsub.s32 %v888, %v890
          %v892 = vrot.slane %v885, %v891
          %v893 = vcombine.high %v892, 0
          %v894 = vcombine.low %v843, %v859
          %v896 = vunpack.c.l.s4 1983009808
          %v897 = vunpack.c.0.s8 %v896
          %v898 = vlaneseq
          %v899 = vshrl.u32 %v898, 7
          %v900 = vsub.s32 %v897, %v899
          %v901 = vrot.slane %v894, %v900
          %v902 = vcombine.low %v851, %v867
          %v904 = vunpack.c.l.s4 1983009808
          %v905 = vunpack.c.0.s8 %v904
          %v906 = vlaneseq
          %v907 = vshrl.u32 %v906, 7
          %v908 = vsub.s32 %v905, %v907
          %v909 = vrot.slane %v902, %v908
          %v910 = vcombine.low %v901, %v909
          %v912 = vunpack.c.l.s4 1934713408
          %v913 = vunpack.c.0.s8 %v912
          %v914 = vlaneseq
          %v915 = vshrl.u32 %v914, 7
          %v916 = vsub.s32 %v913, %v915
          %v917 = vrot.slane %v910, %v916
          %v918 = vcombine.high %v917, 0
          %v921 = vpack.i.b16 %v917, %v892
          %v923 = vshrl.u32 %v892, 16
          %v924 = vshrl.u32 %v917, 16
          %v925 = vpack.i.b16 %v924, %v923
          %v929 = vpack.i.b16 %v918, %v893
          %v931 = vshrl.u32 %v893, 16
          %v932 = vshrl.u32 %v918, 16
          %v933 = vpack.i.b16 %v932, %v931
          %vm935 = vcmask 60416
          %936 = vst.msk [vmem:[#allocation2] sm:$0xf] %vm935, %v921
          %937 = vst.msk [vmem:[#allocation2 + $0x4] sm:$0xf] %vm935, %v925
          %938 = vst.msk [vmem:[#allocation2 + $0x8] sm:$0xf] %vm935, %v929
          %939 = vst.msk [vmem:[#allocation2 + $0xc] sm:$0xf] %vm935, %v933
          %v940 = vpack.c.bf16 %v757, %v757
          %942 = vrot.lane.b32.xlu0 %v940, 120
          %v943 = vpop.permute.xlu0 %942
          %944 = vrot.lane.b32.xlu0 %v940, 112
          %v945 = vpop.permute.xlu0 %944
          %946 = vrot.lane.b32.xlu0 %v940, 104
          %v947 = vpop.permute.xlu0 %946
          %v949 = vunpack.c.l.s4 1983009808
          %v950 = vunpack.c.0.s8 %v949
          %v951 = vlaneseq
          %v952 = vshrl.u32 %v951, 7
          %v953 = vsub.s32 %v950, %v952
          %v954 = vrot.slane %v940, %v953
          %v957 = vunpack.c.l.s4 1983009808
          %v958 = vunpack.c.0.s8 %v957
          %v959 = vlaneseq
          %v960 = vshrl.u32 %v959, 7
          %v961 = vsub.s32 %v958, %v960
          %v962 = vrot.slane %v945, %v961
          %v963 = vcombine.low %v954, %v962
          %v964 = vcombine.high %v954, %v962
          %v966 = vunpack.c.l.s4 1934713408
          %v967 = vunpack.c.0.s8 %v966
          %v968 = vlaneseq
          %v969 = vshrl.u32 %v968, 7
          %v970 = vsub.s32 %v967, %v969
          %v971 = vrot.slane %v963, %v970
          %v973 = vunpack.c.l.s4 1934713408
          %v974 = vunpack.c.0.s8 %v973
          %v975 = vlaneseq
          %v976 = vshrl.u32 %v975, 7
          %v977 = vsub.s32 %v974, %v976
          %v978 = vrot.slane %v964, %v977
          %v979 = vcombine.high %v971, 0
          %v980 = vcombine.high %v978, 0
          %v983 = vunpack.c.l.s4 1983009808
          %v984 = vunpack.c.0.s8 %v983
          %v985 = vlaneseq
          %v986 = vshrl.u32 %v985, 7
          %v987 = vsub.s32 %v984, %v986
          %v988 = vrot.slane %v943, %v987
          %v991 = vunpack.c.l.s4 1983009808
          %v992 = vunpack.c.0.s8 %v991
          %v993 = vlaneseq
          %v994 = vshrl.u32 %v993, 7
          %v995 = vsub.s32 %v992, %v994
          %v996 = vrot.slane %v947, %v995
          %v997 = vcombine.low %v988, %v996
          %v998 = vcombine.high %v988, %v996
          %v1000 = vunpack.c.l.s4 1934713408
          %v1001 = vunpack.c.0.s8 %v1000
          %v1002 = vlaneseq
          %v1003 = vshrl.u32 %v1002, 7
          %v1004 = vsub.s32 %v1001, %v1003
          %v1005 = vrot.slane %v997, %v1004
          %v1007 = vunpack.c.l.s4 1934713408
          %v1008 = vunpack.c.0.s8 %v1007
          %v1009 = vlaneseq
          %v1010 = vshrl.u32 %v1009, 7
          %v1011 = vsub.s32 %v1008, %v1010
          %v1012 = vrot.slane %v998, %v1011
          %v1013 = vcombine.high %v1005, 0
          %v1014 = vcombine.high %v1012, 0
          %v1017 = vpack.i.b16 %v1005, %v971
          %v1019 = vshrl.u32 %v971, 16
          %v1020 = vshrl.u32 %v1005, 16
          %v1021 = vpack.i.b16 %v1020, %v1019
          %v1025 = vpack.i.b16 %v1013, %v979
          %v1027 = vshrl.u32 %v979, 16
          %v1028 = vshrl.u32 %v1013, 16
          %v1029 = vpack.i.b16 %v1028, %v1027
          %v1033 = vpack.i.b16 %v1012, %v978
          %v1035 = vshrl.u32 %v978, 16
          %v1036 = vshrl.u32 %v1012, 16
          %v1037 = vpack.i.b16 %v1036, %v1035
          %v1041 = vpack.i.b16 %v1014, %v980
          %v1043 = vshrl.u32 %v980, 16
          %v1044 = vshrl.u32 %v1014, 16
          %v1045 = vpack.i.b16 %v1044, %v1043
          %v1047 = vcombine.low %v1017, %v1033
          %v1049 = vunpack.c.l.s4 1983009808
          %v1050 = vunpack.c.0.s8 %v1049
          %v1051 = vlaneseq
          %v1052 = vshrl.u32 %v1051, 7
          %v1053 = vsub.s32 %v1050, %v1052
          %v1054 = vrot.slane %v1047, %v1053
          %v1055 = vcombine.low %v1025, %v1041
          %v1057 = vunpack.c.l.s4 1983009808
          %v1058 = vunpack.c.0.s8 %v1057
          %v1059 = vlaneseq
          %v1060 = vshrl.u32 %v1059, 7
          %v1061 = vsub.s32 %v1058, %v1060
          %v1062 = vrot.slane %v1055, %v1061
          %v1063 = vcombine.low %v1054, %v1062
          %v1065 = vunpack.c.l.s4 1934713408
          %v1066 = vunpack.c.0.s8 %v1065
          %v1067 = vlaneseq
          %v1068 = vshrl.u32 %v1067, 7
          %v1069 = vsub.s32 %v1066, %v1068
          %v1070 = vrot.slane %v1063, %v1069
          %v1071 = vcombine.high %v1070, 0
          %v1072 = vcombine.low %v1021, %v1037
          %v1074 = vunpack.c.l.s4 1983009808
          %v1075 = vunpack.c.0.s8 %v1074
          %v1076 = vlaneseq
          %v1077 = vshrl.u32 %v1076, 7
          %v1078 = vsub.s32 %v1075, %v1077
          %v1079 = vrot.slane %v1072, %v1078
          %v1080 = vcombine.low %v1029, %v1045
          %v1082 = vunpack.c.l.s4 1983009808
          %v1083 = vunpack.c.0.s8 %v1082
          %v1084 = vlaneseq
          %v1085 = vshrl.u32 %v1084, 7
          %v1086 = vsub.s32 %v1083, %v1085
          %v1087 = vrot.slane %v1080, %v1086
          %v1088 = vcombine.low %v1079, %v1087
          %v1090 = vunpack.c.l.s4 1934713408
          %v1091 = vunpack.c.0.s8 %v1090
          %v1092 = vlaneseq
          %v1093 = vshrl.u32 %v1092, 7
          %v1094 = vsub.s32 %v1091, %v1093
          %v1095 = vrot.slane %v1088, %v1094
          %v1096 = vcombine.high %v1095, 0
          %v1099 = vpack.i.b16 %v1095, %v1070
          %v1101 = vshrl.u32 %v1070, 16
          %v1102 = vshrl.u32 %v1095, 16
          %v1103 = vpack.i.b16 %v1102, %v1101
          %v1107 = vpack.i.b16 %v1096, %v1071
          %v1109 = vshrl.u32 %v1071, 16
          %v1110 = vshrl.u32 %v1096, 16
          %v1111 = vpack.i.b16 %v1110, %v1109
          %1113 = vst.msk [vmem:[#allocation3] sm:$0xf] %vm935, %v1099
          %1114 = vst.msk [vmem:[#allocation3 + $0x4] sm:$0xf] %vm935, %v1103
          %1115 = vst.msk [vmem:[#allocation3 + $0x8] sm:$0xf] %vm935, %v1107
          %1116 = vst.msk [vmem:[#allocation3 + $0xc] sm:$0xf] %vm935, %v1111
        $region112: #{tpu_custom_call.1} parent=87 // pred_fallthru
          _
        %s1117 = smul.u32 %s39, 8
        %s1118 = scalar_lea.vmem %s624, %s1117
        %v1119 = vld [vmem:[%s1118] sm:$0xff]
        %v1120 = vpack.c.bf16 %v1119, %v1119
        %v1121 = vld [vmem:[%s1] sm:$0xf]
        %v1122 = vld [vmem:[%s1 + $0x4] sm:$0xf]
        %v1123 = vld [vmem:[%s1 + $0x8] sm:$0xf]
        %v1124 = vld [vmem:[%s1 + $0xc] sm:$0xf]
        %v1125 = vld [vmem:[%s4] sm:$0x1]
        %v1127 = vlaneseq
        %v1128 = vshrl.u32 %v1127, 7
        %v1129 = vsub.s32 0, %v1128
        %v1130 = vrot.slane %v1125, %v1129
        %v1136 = vunpack.c.l.b16 %v1121
        %v1137 = vunpack.c.l.b16 %v1122
        %v1138 = vunpack.c.l.b16 %v1123
        %v1139 = vunpack.c.l.b16 %v1124
        %v1140 = vpack.c.b16 %v1137, %v1136
        %v1141 = vpack.c.b16 %v1139, %v1138
        %vm1144 = vcmask 261120
        %v1146 = vsel %vm1144, %v1120, 0
        %1148 = vmatprep.subr.bf16.mxu0 0
        %1149 = vmatpush1.bf16.msra.mxu0 %v1140
        %1150 = vmatprep.subr.bf16.mxu0 0
        %1151 = vmatpush1.bf16.msra.mxu0 %v1141
        %1152 = vmatprep.subr.bf16.mxu0 0
        %1153 = vmatpush1.bf16.msra.mxu0 0
        %1154 = vmatprep.subr.bf16.mxu0 0
        %1155 = vmatpush1.bf16.msra.mxu0 0
        %1156 = vmatprep.subr.bf16.mxu0 0
        %1157 = vmatpush1.bf16.msra.mxu0 0
        %1158 = vmatprep.subr.bf16.mxu0 0
        %1159 = vmatpush1.bf16.msra.mxu0 0
        %1160 = vmatprep.subr.bf16.mxu0 0
        %1161 = vmatpush1.bf16.msra.mxu0 0
        %1162 = vmatprep.subr.bf16.mxu0 0
        %1163 = vmatpush1.bf16.msra.mxu0 0
        %1164 = vmatprep.subr.bf16.mxu0 0
        %1165 = vmatpush1.bf16.msra.mxu0 0
        %1166 = vmatprep.subr.bf16.mxu0 0
        %1167 = vmatpush1.bf16.msra.mxu0 0
        %1168 = vmatprep.subr.bf16.mxu0 0
        %1169 = vmatpush1.bf16.msra.mxu0 0
        %1170 = vmatprep.subr.bf16.mxu0 0
        %1171 = vmatpush1.bf16.msra.mxu0 0
        %1172 = vmatprep.subr.bf16.mxu0 0
        %1173 = vmatpush1.bf16.msra.mxu0 0
        %1174 = vmatprep.subr.bf16.mxu0 0
        %1175 = vmatpush1.bf16.msra.mxu0 0
        %1176 = vmatprep.subr.bf16.mxu0 0
        %1177 = vmatpush1.bf16.msra.mxu0 0
        %1178 = vmatprep.subr.bf16.mxu0 0
        %1179 = vmatpush1.bf16.msra.mxu0 0
        %1180 = vmatprep.mubr.bf16.mxu0 0
        %1181 = vmatmul.mubr.bf16.gmra.mrb[0].mxu0 %v1146
        %v1182 = vpop.f32.mrb[0].mxu0
        %v1183 = vadd.f32 %v1130, %v1182
        %v1184 = vpop.f32.mrb[0].mxu0
        %v1185 = vpop.f32.mrb[0].mxu0
        %v1186 = vpop.f32.mrb[0].mxu0
        %1187 = vdwg.mxu0
        %v1188 = vpack.c.bf16 %v1183, %v1183
        %1190 = vrot.lane.b32.xlu0 %v1188, 120
        %v1191 = vpop.permute.xlu0 %1190
        %1192 = vrot.lane.b32.xlu0 %v1188, 112
        %v1193 = vpop.permute.xlu0 %1192
        %1194 = vrot.lane.b32.xlu0 %v1188, 104
        %v1195 = vpop.permute.xlu0 %1194
        %v1197 = vunpack.c.l.s4 1983009808
        %v1198 = vunpack.c.0.s8 %v1197
        %v1199 = vlaneseq
        %v1200 = vshrl.u32 %v1199, 7
        %v1201 = vsub.s32 %v1198, %v1200
        %v1202 = vrot.slane %v1188, %v1201
        %v1205 = vunpack.c.l.s4 1983009808
        %v1206 = vunpack.c.0.s8 %v1205
        %v1207 = vlaneseq
        %v1208 = vshrl.u32 %v1207, 7
        %v1209 = vsub.s32 %v1206, %v1208
        %v1210 = vrot.slane %v1193, %v1209
        %v1211 = vcombine.low %v1202, %v1210
        %v1212 = vcombine.high %v1202, %v1210
        %v1214 = vunpack.c.l.s4 1934713408
        %v1215 = vunpack.c.0.s8 %v1214
        %v1216 = vlaneseq
        %v1217 = vshrl.u32 %v1216, 7
        %v1218 = vsub.s32 %v1215, %v1217
        %v1219 = vrot.slane %v1211, %v1218
        %v1221 = vunpack.c.l.s4 1934713408
        %v1222 = vunpack.c.0.s8 %v1221
        %v1223 = vlaneseq
        %v1224 = vshrl.u32 %v1223, 7
        %v1225 = vsub.s32 %v1222, %v1224
        %v1226 = vrot.slane %v1212, %v1225
        %v1227 = vcombine.high %v1219, 0
        %v1228 = vcombine.high %v1226, 0
        %v1231 = vunpack.c.l.s4 1983009808
        %v1232 = vunpack.c.0.s8 %v1231
        %v1233 = vlaneseq
        %v1234 = vshrl.u32 %v1233, 7
        %v1235 = vsub.s32 %v1232, %v1234
        %v1236 = vrot.slane %v1191, %v1235
        %v1239 = vunpack.c.l.s4 1983009808
        %v1240 = vunpack.c.0.s8 %v1239
        %v1241 = vlaneseq
        %v1242 = vshrl.u32 %v1241, 7
        %v1243 = vsub.s32 %v1240, %v1242
        %v1244 = vrot.slane %v1195, %v1243
        %v1245 = vcombine.low %v1236, %v1244
        %v1246 = vcombine.high %v1236, %v1244
        %v1248 = vunpack.c.l.s4 1934713408
        %v1249 = vunpack.c.0.s8 %v1248
        %v1250 = vlaneseq
        %v1251 = vshrl.u32 %v1250, 7
        %v1252 = vsub.s32 %v1249, %v1251
        %v1253 = vrot.slane %v1245, %v1252
        %v1255 = vunpack.c.l.s4 1934713408
        %v1256 = vunpack.c.0.s8 %v1255
        %v1257 = vlaneseq
        %v1258 = vshrl.u32 %v1257, 7
        %v1259 = vsub.s32 %v1256, %v1258
        %v1260 = vrot.slane %v1246, %v1259
        %v1261 = vcombine.high %v1253, 0
        %v1262 = vcombine.high %v1260, 0
        %v1265 = vpack.i.b16 %v1253, %v1219
        %v1267 = vshrl.u32 %v1219, 16
        %v1268 = vshrl.u32 %v1253, 16
        %v1269 = vpack.i.b16 %v1268, %v1267
        %v1273 = vpack.i.b16 %v1261, %v1227
        %v1275 = vshrl.u32 %v1227, 16
        %v1276 = vshrl.u32 %v1261, 16
        %v1277 = vpack.i.b16 %v1276, %v1275
        %v1281 = vpack.i.b16 %v1260, %v1226
        %v1283 = vshrl.u32 %v1226, 16
        %v1284 = vshrl.u32 %v1260, 16
        %v1285 = vpack.i.b16 %v1284, %v1283
        %v1289 = vpack.i.b16 %v1262, %v1228
        %v1291 = vshrl.u32 %v1228, 16
        %v1292 = vshrl.u32 %v1262, 16
        %v1293 = vpack.i.b16 %v1292, %v1291
        %v1295 = vcombine.low %v1265, %v1281
        %v1297 = vunpack.c.l.s4 1983009808
        %v1298 = vunpack.c.0.s8 %v1297
        %v1299 = vlaneseq
        %v1300 = vshrl.u32 %v1299, 7
        %v1301 = vsub.s32 %v1298, %v1300
        %v1302 = vrot.slane %v1295, %v1301
        %v1303 = vcombine.low %v1273, %v1289
        %v1305 = vunpack.c.l.s4 1983009808
        %v1306 = vunpack.c.0.s8 %v1305
        %v1307 = vlaneseq
        %v1308 = vshrl.u32 %v1307, 7
        %v1309 = vsub.s32 %v1306, %v1308
        %v1310 = vrot.slane %v1303, %v1309
        %v1311 = vcombine.low %v1302, %v1310
        %v1313 = vunpack.c.l.s4 1934713408
        %v1314 = vunpack.c.0.s8 %v1313
        %v1315 = vlaneseq
        %v1316 = vshrl.u32 %v1315, 7
        %v1317 = vsub.s32 %v1314, %v1316
        %v1318 = vrot.slane %v1311, %v1317
        %v1319 = vcombine.high %v1318, 0
        %v1320 = vcombine.low %v1269, %v1285
        %v1322 = vunpack.c.l.s4 1983009808
        %v1323 = vunpack.c.0.s8 %v1322
        %v1324 = vlaneseq
        %v1325 = vshrl.u32 %v1324, 7
        %v1326 = vsub.s32 %v1323, %v1325
        %v1327 = vrot.slane %v1320, %v1326
        %v1328 = vcombine.low %v1277, %v1293
        %v1330 = vunpack.c.l.s4 1983009808
        %v1331 = vunpack.c.0.s8 %v1330
        %v1332 = vlaneseq
        %v1333 = vshrl.u32 %v1332, 7
        %v1334 = vsub.s32 %v1331, %v1333
        %v1335 = vrot.slane %v1328, %v1334
        %v1336 = vcombine.low %v1327, %v1335
        %v1338 = vunpack.c.l.s4 1934713408
        %v1339 = vunpack.c.0.s8 %v1338
        %v1340 = vlaneseq
        %v1341 = vshrl.u32 %v1340, 7
        %v1342 = vsub.s32 %v1339, %v1341
        %v1343 = vrot.slane %v1336, %v1342
        %v1344 = vcombine.high %v1343, 0
        %v1347 = vpack.i.b16 %v1343, %v1318
        %v1348 = vshrl.u32 %v1318, 16
        %v1349 = vshrl.u32 %v1343, 16
        %v1350 = vpack.i.b16 %v1349, %v1348
        %v1353 = vpack.i.b16 %v1344, %v1319
        %v1354 = vshrl.u32 %v1319, 16
        %v1355 = vshrl.u32 %v1344, 16
        %v1356 = vpack.i.b16 %v1355, %v1354
        %v1357 = vld [vmem:[#allocation2] sm:$0xf]
        %v1358 = vld [vmem:[#allocation2 + $0x4] sm:$0xf]
        %v1359 = vld [vmem:[#allocation2 + $0x8] sm:$0xf]
        %v1360 = vld [vmem:[#allocation2 + $0xc] sm:$0xf]
        %v1361 = vld [vmem:[#allocation3] sm:$0xf]
        %v1362 = vld [vmem:[#allocation3 + $0x4] sm:$0xf]
        %v1363 = vld [vmem:[#allocation3 + $0x8] sm:$0xf]
        %v1364 = vld [vmem:[#allocation3 + $0xc] sm:$0xf]
        %vm1365 = vcmask 64512
        %v1367 = vsel %vm1365, %v1347, 0
        %v1370 = vsel %vm1365, %v1357, 0
        %1372 = vmatprep.subr.bf16.mxu0 0
        %1373 = vmatpush1.bf16.xpose.msra.mxu0 %v1370
        %1374 = vmatprep.subr.bf16.mxu0 0
        %1375 = vmatpush1.bf16.xpose.msra.mxu0 0
        %1376 = vmatprep.subr.bf16.mxu0 0
        %1377 = vmatpush1.bf16.xpose.msra.mxu0 0
        %1378 = vmatprep.subr.bf16.mxu0 0
        %1379 = vmatpush1.bf16.xpose.msra.mxu0 0
        %1380 = vmatprep.subr.bf16.mxu0 0
        %1381 = vmatpush1.bf16.xpose.msra.mxu0 0
        %1382 = vmatprep.subr.bf16.mxu0 0
        %1383 = vmatpush1.bf16.xpose.msra.mxu0 0
        %1384 = vmatprep.subr.bf16.mxu0 0
        %1385 = vmatpush1.bf16.xpose.msra.mxu0 0
        %1386 = vmatprep.subr.bf16.mxu0 0
        %1387 = vmatpush1.bf16.xpose.msra.mxu0 0
        %1388 = vmatprep.subr.bf16.mxu0 0
        %1389 = vmatpush1.bf16.xpose.msra.mxu0 0
        %1390 = vmatprep.subr.bf16.mxu0 0
        %1391 = vmatpush1.bf16.xpose.msra.mxu0 0
        %1392 = vmatprep.subr.bf16.mxu0 0
        %1393 = vmatpush1.bf16.xpose.msra.mxu0 0
        %1394 = vmatprep.subr.bf16.mxu0 0
        %1395 = vmatpush1.bf16.xpose.msra.mxu0 0
        %1396 = vmatprep.subr.bf16.mxu0 0
        %1397 = vmatpush1.bf16.xpose.msra.mxu0 0
        %1398 = vmatprep.subr.bf16.mxu0 0
        %1399 = vmatpush1.bf16.xpose.msra.mxu0 0
        %1400 = vmatprep.subr.bf16.mxu0 0
        %1401 = vmatpush1.bf16.xpose.msra.mxu0 0
        %1402 = vmatprep.subr.bf16.mxu0 0
        %1403 = vmatpush1.bf16.xpose.msra.mxu0 0
        %1404 = vmatprep.mubr.bf16.mxu0 0
        %1405 = vmatmul.mubr.bf16.gmra.mrb[0].mxu0 %v1367
        %v1406 = vpop.f32.mrb[0].mxu0
        %v1407 = vadd.f32 0.0, %v1406
        %v1408 = vpop.f32.mrb[0].mxu0
        %v1409 = vpop.f32.mrb[0].mxu0
        %v1410 = vpop.f32.mrb[0].mxu0
        %1411 = vdwg.mxu0
        %v1413 = vsel %vm1365, %v1350, 0
        %v1416 = vsel %vm1365, %v1358, 0
        %1418 = vmatprep.subr.bf16.mxu0 0
        %1419 = vmatpush1.bf16.xpose.msra.mxu0 %v1416
        %1420 = vmatprep.subr.bf16.mxu0 0
        %1421 = vmatpush1.bf16.xpose.msra.mxu0 0
        %1422 = vmatprep.subr.bf16.mxu0 0
        %1423 = vmatpush1.bf16.xpose.msra.mxu0 0
        %1424 = vmatprep.subr.bf16.mxu0 0
        %1425 = vmatpush1.bf16.xpose.msra.mxu0 0
        %1426 = vmatprep.subr.bf16.mxu0 0
        %1427 = vmatpush1.bf16.xpose.msra.mxu0 0
        %1428 = vmatprep.subr.bf16.mxu0 0
        %1429 = vmatpush1.bf16.xpose.msra.mxu0 0
        %1430 = vmatprep.subr.bf16.mxu0 0
        %1431 = vmatpush1.bf16.xpose.msra.mxu0 0
        %1432 = vmatprep.subr.bf16.mxu0 0
        %1433 = vmatpush1.bf16.xpose.msra.mxu0 0
        %1434 = vmatprep.subr.bf16.mxu0 0
        %1435 = vmatpush1.bf16.xpose.msra.mxu0 0
        %1436 = vmatprep.subr.bf16.mxu0 0
        %1437 = vmatpush1.bf16.xpose.msra.mxu0 0
        %1438 = vmatprep.subr.bf16.mxu0 0
        %1439 = vmatpush1.bf16.xpose.msra.mxu0 0
        %1440 = vmatprep.subr.bf16.mxu0 0
        %1441 = vmatpush1.bf16.xpose.msra.mxu0 0
        %1442 = vmatprep.subr.bf16.mxu0 0
        %1443 = vmatpush1.bf16.xpose.msra.mxu0 0
        %1444 = vmatprep.subr.bf16.mxu0 0
        %1445 = vmatpush1.bf16.xpose.msra.mxu0 0
        %1446 = vmatprep.subr.bf16.mxu0 0
        %1447 = vmatpush1.bf16.xpose.msra.mxu0 0
        %1448 = vmatprep.subr.bf16.mxu0 0
        %1449 = vmatpush1.bf16.xpose.msra.mxu0 0
        %1450 = vmatprep.mubr.bf16.mxu0 0
        %1451 = vmatmul.mubr.bf16.gmra.mrb[0].mxu0 %v1413
        %v1452 = vpop.f32.mrb[0].mxu0
        %v1453 = vadd.f32 0.0, %v1452
        %v1454 = vpop.f32.mrb[0].mxu0
        %v1455 = vpop.f32.mrb[0].mxu0
        %v1456 = vpop.f32.mrb[0].mxu0
        %1457 = vdwg.mxu0
        %v1459 = vsel %vm1365, %v1353, 0
        %v1462 = vsel %vm1365, %v1359, 0
        %1464 = vmatprep.subr.bf16.mxu0 0
        %1465 = vmatpush1.bf16.xpose.msra.mxu0 %v1462
        %1466 = vmatprep.subr.bf16.mxu0 0
        %1467 = vmatpush1.bf16.xpose.msra.mxu0 0
        %1468 = vmatprep.subr.bf16.mxu0 0
        %1469 = vmatpush1.bf16.xpose.msra.mxu0 0
        %1470 = vmatprep.subr.bf16.mxu0 0
        %1471 = vmatpush1.bf16.xpose.msra.mxu0 0
        %1472 = vmatprep.subr.bf16.mxu0 0
        %1473 = vmatpush1.bf16.xpose.msra.mxu0 0
        %1474 = vmatprep.subr.bf16.mxu0 0
        %1475 = vmatpush1.bf16.xpose.msra.mxu0 0
        %1476 = vmatprep.subr.bf16.mxu0 0
        %1477 = vmatpush1.bf16.xpose.msra.mxu0 0
        %1478 = vmatprep.subr.bf16.mxu0 0
        %1479 = vmatpush1.bf16.xpose.msra.mxu0 0
        %1480 = vmatprep.subr.bf16.mxu0 0
        %1481 = vmatpush1.bf16.xpose.msra.mxu0 0
        %1482 = vmatprep.subr.bf16.mxu0 0
        %1483 = vmatpush1.bf16.xpose.msra.mxu0 0
        %1484 = vmatprep.subr.bf16.mxu0 0
        %1485 = vmatpush1.bf16.xpose.msra.mxu0 0
        %1486 = vmatprep.subr.bf16.mxu0 0
        %1487 = vmatpush1.bf16.xpose.msra.mxu0 0
        %1488 = vmatprep.subr.bf16.mxu0 0
        %1489 = vmatpush1.bf16.xpose.msra.mxu0 0
        %1490 = vmatprep.subr.bf16.mxu0 0
        %1491 = vmatpush1.bf16.xpose.msra.mxu0 0
        %1492 = vmatprep.subr.bf16.mxu0 0
        %1493 = vmatpush1.bf16.xpose.msra.mxu0 0
        %1494 = vmatprep.subr.bf16.mxu0 0
        %1495 = vmatpush1.bf16.xpose.msra.mxu0 0
        %1496 = vmatprep.mubr.bf16.mxu0 0
        %1497 = vmatmul.mubr.bf16.gmra.mrb[0].mxu0 %v1459
        %v1498 = vpop.f32.mrb[0].mxu0
        %v1499 = vadd.f32 0.0, %v1498
        %v1500 = vpop.f32.mrb[0].mxu0
        %v1501 = vpop.f32.mrb[0].mxu0
        %v1502 = vpop.f32.mrb[0].mxu0
        %1503 = vdwg.mxu0
        %v1505 = vsel %vm1365, %v1356, 0
        %v1508 = vsel %vm1365, %v1360, 0
        %1510 = vmatprep.subr.bf16.mxu0 0
        %1511 = vmatpush1.bf16.xpose.msra.mxu0 %v1508
        %1512 = vmatprep.subr.bf16.mxu0 0
        %1513 = vmatpush1.bf16.xpose.msra.mxu0 0
        %1514 = vmatprep.subr.bf16.mxu0 0
        %1515 = vmatpush1.bf16.xpose.msra.mxu0 0
        %1516 = vmatprep.subr.bf16.mxu0 0
        %1517 = vmatpush1.bf16.xpose.msra.mxu0 0
        %1518 = vmatprep.subr.bf16.mxu0 0
        %1519 = vmatpush1.bf16.xpose.msra.mxu0 0
        %1520 = vmatprep.subr.bf16.mxu0 0
        %1521 = vmatpush1.bf16.xpose.msra.mxu0 0
        %1522 = vmatprep.subr.bf16.mxu0 0
        %1523 = vmatpush1.bf16.xpose.msra.mxu0 0
        %1524 = vmatprep.subr.bf16.mxu0 0
        %1525 = vmatpush1.bf16.xpose.msra.mxu0 0
        %1526 = vmatprep.subr.bf16.mxu0 0
        %1527 = vmatpush1.bf16.xpose.msra.mxu0 0
        %1528 = vmatprep.subr.bf16.mxu0 0
        %1529 = vmatpush1.bf16.xpose.msra.mxu0 0
        %1530 = vmatprep.subr.bf16.mxu0 0
        %1531 = vmatpush1.bf16.xpose.msra.mxu0 0
        %1532 = vmatprep.subr.bf16.mxu0 0
        %1533 = vmatpush1.bf16.xpose.msra.mxu0 0
        %1534 = vmatprep.subr.bf16.mxu0 0
        %1535 = vmatpush1.bf16.xpose.msra.mxu0 0
        %1536 = vmatprep.subr.bf16.mxu0 0
        %1537 = vmatpush1.bf16.xpose.msra.mxu0 0
        %1538 = vmatprep.subr.bf16.mxu0 0
        %1539 = vmatpush1.bf16.xpose.msra.mxu0 0
        %1540 = vmatprep.subr.bf16.mxu0 0
        %1541 = vmatpush1.bf16.xpose.msra.mxu0 0
        %1542 = vmatprep.mubr.bf16.mxu0 0
        %1543 = vmatmul.mubr.bf16.gmra.mrb[0].mxu0 %v1505
        %v1544 = vpop.f32.mrb[0].mxu0
        %v1545 = vadd.f32 0.0, %v1544
        %v1546 = vpop.f32.mrb[0].mxu0
        %v1547 = vpop.f32.mrb[0].mxu0
        %v1548 = vpop.f32.mrb[0].mxu0
        %1549 = vdwg.mxu0
        %v1550 = vsel %vm1365, %v1407, -inf
        %1551 = vmax.xlane.f32.xlu0 %v1550
        %v1552 = vpop.xlane.xlu0 %1551
        %v1553 = vsel %vm1365, %v1453, -inf
        %1554 = vmax.xlane.f32.xlu0 %v1553
        %v1555 = vpop.xlane.xlu0 %1554
        %v1556 = vsel %vm1365, %v1499, -inf
        %1557 = vmax.xlane.f32.xlu0 %v1556
        %v1558 = vpop.xlane.xlu0 %1557
        %v1559 = vsel %vm1365, %v1545, -inf
        %1560 = vmax.xlane.f32.xlu0 %v1559
        %v1561 = vpop.xlane.xlu0 %1560
        %v1562 = vsub.f32 %v1407, %v1552
        %v1563 = vsub.f32 %v1453, %v1555
        %v1564 = vsub.f32 %v1499, %v1558
        %v1565 = vsub.f32 %v1545, %v1561
        %v1566 = vmul.f32 %v1562, 1.442695
        %v1567 = vpow.pop %v1566
        %v1568 = vmul.f32 %v1563, 1.442695
        %v1569 = vpow.pop %v1568
        %v1570 = vmul.f32 %v1564, 1.442695
        %v1571 = vpow.pop %v1570
        %v1572 = vmul.f32 %v1565, 1.442695
        %v1573 = vpow.pop %v1572
        %v1574 = vsel %vm1365, %v1567, 0.0
        %1575 = vadd.xlane.f32.xlu0 %v1574
        %v1576 = vpop.xlane.xlu0 %1575
        %v1577 = vsel %vm1365, %v1569, 0.0
        %1578 = vadd.xlane.f32.xlu0 %v1577
        %v1579 = vpop.xlane.xlu0 %1578
        %v1580 = vsel %vm1365, %v1571, 0.0
        %1581 = vadd.xlane.f32.xlu0 %v1580
        %v1582 = vpop.xlane.xlu0 %1581
        %v1583 = vsel %vm1365, %v1573, 0.0
        %1584 = vadd.xlane.f32.xlu0 %v1583
        %v1585 = vpop.xlane.xlu0 %1584
        %v1586 = vrcp.pop %v1576
        %v1587 = vrcp.pop %v1579
        %v1588 = vrcp.pop %v1582
        %v1589 = vrcp.pop %v1585
        %v1590 = vpack.c.bf16 %v1567, %v1567
        %v1591 = vpack.c.bf16 %v1569, %v1569
        %v1592 = vpack.c.bf16 %v1571, %v1571
        %v1593 = vpack.c.bf16 %v1573, %v1573
        %v1594 = vpack.c.bf16 %v1586, %v1586
        %v1595 = vpack.c.bf16 %v1587, %v1587
        %v1596 = vpack.c.bf16 %v1588, %v1588
        %v1597 = vpack.c.bf16 %v1589, %v1589
        %v1598 = vmul.bf16 %v1590, %v1594
        %v1599 = vmul.bf16 %v1591, %v1595
        %v1600 = vmul.bf16 %v1592, %v1596
        %v1601 = vmul.bf16 %v1593, %v1597
        %v1603 = vsel %vm1365, %v1598, 0
        %vm1605 = vcmask 1043456
        %v1607 = vsel %vm1605, %v1361, 0
        %1609 = vmatprep.subr.bf16.mxu0 0
        %1610 = vmatpush1.bf16.msra.mxu0 %v1607
        %1611 = vmatprep.subr.bf16.mxu0 0
        %1612 = vmatpush1.bf16.msra.mxu0 0
        %1613 = vmatprep.subr.bf16.mxu0 0
        %1614 = vmatpush1.bf16.msra.mxu0 0
        %1615 = vmatprep.subr.bf16.mxu0 0
        %1616 = vmatpush1.bf16.msra.mxu0 0
        %1617 = vmatprep.subr.bf16.mxu0 0
        %1618 = vmatpush1.bf16.msra.mxu0 0
        %1619 = vmatprep.subr.bf16.mxu0 0
        %1620 = vmatpush1.bf16.msra.mxu0 0
        %1621 = vmatprep.subr.bf16.mxu0 0
        %1622 = vmatpush1.bf16.msra.mxu0 0
        %1623 = vmatprep.subr.bf16.mxu0 0
        %1624 = vmatpush1.bf16.msra.mxu0 0
        %1625 = vmatprep.subr.bf16.mxu0 0
        %1626 = vmatpush1.bf16.msra.mxu0 0
        %1627 = vmatprep.subr.bf16.mxu0 0
        %1628 = vmatpush1.bf16.msra.mxu0 0
        %1629 = vmatprep.subr.bf16.mxu0 0
        %1630 = vmatpush1.bf16.msra.mxu0 0
        %1631 = vmatprep.subr.bf16.mxu0 0
        %1632 = vmatpush1.bf16.msra.mxu0 0
        %1633 = vmatprep.subr.bf16.mxu0 0
        %1634 = vmatpush1.bf16.msra.mxu0 0
        %1635 = vmatprep.subr.bf16.mxu0 0
        %1636 = vmatpush1.bf16.msra.mxu0 0
        %1637 = vmatprep.subr.bf16.mxu0 0
        %1638 = vmatpush1.bf16.msra.mxu0 0
        %1639 = vmatprep.subr.bf16.mxu0 0
        %1640 = vmatpush1.bf16.msra.mxu0 0
        %1641 = vmatprep.mubr.bf16.mxu0 0
        %1642 = vmatmul.mubr.bf16.gmra.mrb[0].mxu0 %v1603
        %v1643 = vpop.f32.mrb[0].mxu0
        %v1644 = vadd.f32 0.0, %v1643
        %v1645 = vpop.f32.mrb[0].mxu0
        %v1646 = vpop.f32.mrb[0].mxu0
        %v1647 = vpop.f32.mrb[0].mxu0
        %1648 = vdwg.mxu0
        %v1650 = vsel %vm1365, %v1599, 0
        %v1653 = vsel %vm1605, %v1362, 0
        %1655 = vmatprep.subr.bf16.mxu0 0
        %1656 = vmatpush1.bf16.msra.mxu0 %v1653
        %1657 = vmatprep.subr.bf16.mxu0 0
        %1658 = vmatpush1.bf16.msra.mxu0 0
        %1659 = vmatprep.subr.bf16.mxu0 0
        %1660 = vmatpush1.bf16.msra.mxu0 0
        %1661 = vmatprep.subr.bf16.mxu0 0
        %1662 = vmatpush1.bf16.msra.mxu0 0
        %1663 = vmatprep.subr.bf16.mxu0 0
        %1664 = vmatpush1.bf16.msra.mxu0 0
        %1665 = vmatprep.subr.bf16.mxu0 0
        %1666 = vmatpush1.bf16.msra.mxu0 0
        %1667 = vmatprep.subr.bf16.mxu0 0
        %1668 = vmatpush1.bf16.msra.mxu0 0
        %1669 = vmatprep.subr.bf16.mxu0 0
        %1670 = vmatpush1.bf16.msra.mxu0 0
        %1671 = vmatprep.subr.bf16.mxu0 0
        %1672 = vmatpush1.bf16.msra.mxu0 0
        %1673 = vmatprep.subr.bf16.mxu0 0
        %1674 = vmatpush1.bf16.msra.mxu0 0
        %1675 = vmatprep.subr.bf16.mxu0 0
        %1676 = vmatpush1.bf16.msra.mxu0 0
        %1677 = vmatprep.subr.bf16.mxu0 0
        %1678 = vmatpush1.bf16.msra.mxu0 0
        %1679 = vmatprep.subr.bf16.mxu0 0
        %1680 = vmatpush1.bf16.msra.mxu0 0
        %1681 = vmatprep.subr.bf16.mxu0 0
        %1682 = vmatpush1.bf16.msra.mxu0 0
        %1683 = vmatprep.subr.bf16.mxu0 0
        %1684 = vmatpush1.bf16.msra.mxu0 0
        %1685 = vmatprep.subr.bf16.mxu0 0
        %1686 = vmatpush1.bf16.msra.mxu0 0
        %1687 = vmatprep.mubr.bf16.mxu0 0
        %1688 = vmatmul.mubr.bf16.gmra.mrb[0].mxu0 %v1650
        %v1689 = vpop.f32.mrb[0].mxu0
        %v1690 = vadd.f32 0.0, %v1689
        %v1691 = vpop.f32.mrb[0].mxu0
        %v1692 = vpop.f32.mrb[0].mxu0
        %v1693 = vpop.f32.mrb[0].mxu0
        %1694 = vdwg.mxu0
        %v1696 = vsel %vm1365, %v1600, 0
        %v1699 = vsel %vm1605, %v1363, 0
        %1701 = vmatprep.subr.bf16.mxu0 0
        %1702 = vmatpush1.bf16.msra.mxu0 %v1699
        %1703 = vmatprep.subr.bf16.mxu0 0
        %1704 = vmatpush1.bf16.msra.mxu0 0
        %1705 = vmatprep.subr.bf16.mxu0 0
        %1706 = vmatpush1.bf16.msra.mxu0 0
        %1707 = vmatprep.subr.bf16.mxu0 0
        %1708 = vmatpush1.bf16.msra.mxu0 0
        %1709 = vmatprep.subr.bf16.mxu0 0
        %1710 = vmatpush1.bf16.msra.mxu0 0
        %1711 = vmatprep.subr.bf16.mxu0 0
        %1712 = vmatpush1.bf16.msra.mxu0 0
        %1713 = vmatprep.subr.bf16.mxu0 0
        %1714 = vmatpush1.bf16.msra.mxu0 0
        %1715 = vmatprep.subr.bf16.mxu0 0
        %1716 = vmatpush1.bf16.msra.mxu0 0
        %1717 = vmatprep.subr.bf16.mxu0 0
        %1718 = vmatpush1.bf16.msra.mxu0 0
        %1719 = vmatprep.subr.bf16.mxu0 0
        %1720 = vmatpush1.bf16.msra.mxu0 0
        %1721 = vmatprep.subr.bf16.mxu0 0
        %1722 = vmatpush1.bf16.msra.mxu0 0
        %1723 = vmatprep.subr.bf16.mxu0 0
        %1724 = vmatpush1.bf16.msra.mxu0 0
        %1725 = vmatprep.subr.bf16.mxu0 0
        %1726 = vmatpush1.bf16.msra.mxu0 0
        %1727 = vmatprep.subr.bf16.mxu0 0
        %1728 = vmatpush1.bf16.msra.mxu0 0
        %1729 = vmatprep.subr.bf16.mxu0 0
        %1730 = vmatpush1.bf16.msra.mxu0 0
        %1731 = vmatprep.subr.bf16.mxu0 0
        %1732 = vmatpush1.bf16.msra.mxu0 0
        %1733 = vmatprep.mubr.bf16.mxu0 0
        %1734 = vmatmul.mubr.bf16.gmra.mrb[0].mxu0 %v1696
        %v1735 = vpop.f32.mrb[0].mxu0
        %v1736 = vadd.f32 0.0, %v1735
        %v1737 = vpop.f32.mrb[0].mxu0
        %v1738 = vpop.f32.mrb[0].mxu0
        %v1739 = vpop.f32.mrb[0].mxu0
        %1740 = vdwg.mxu0
        %v1742 = vsel %vm1365, %v1601, 0
        %v1745 = vsel %vm1605, %v1364, 0
        %1747 = vmatprep.subr.bf16.mxu0 0
        %1748 = vmatpush1.bf16.msra.mxu0 %v1745
        %1749 = vmatprep.subr.bf16.mxu0 0
        %1750 = vmatpush1.bf16.msra.mxu0 0
        %1751 = vmatprep.subr.bf16.mxu0 0
        %1752 = vmatpush1.bf16.msra.mxu0 0
        %1753 = vmatprep.subr.bf16.mxu0 0
        %1754 = vmatpush1.bf16.msra.mxu0 0
        %1755 = vmatprep.subr.bf16.mxu0 0
        %1756 = vmatpush1.bf16.msra.mxu0 0
        %1757 = vmatprep.subr.bf16.mxu0 0
        %1758 = vmatpush1.bf16.msra.mxu0 0
        %1759 = vmatprep.subr.bf16.mxu0 0
        %1760 = vmatpush1.bf16.msra.mxu0 0
        %1761 = vmatprep.subr.bf16.mxu0 0
        %1762 = vmatpush1.bf16.msra.mxu0 0
        %1763 = vmatprep.subr.bf16.mxu0 0
        %1764 = vmatpush1.bf16.msra.mxu0 0
        %1765 = vmatprep.subr.bf16.mxu0 0
        %1766 = vmatpush1.bf16.msra.mxu0 0
        %1767 = vmatprep.subr.bf16.mxu0 0
        %1768 = vmatpush1.bf16.msra.mxu0 0
        %1769 = vmatprep.subr.bf16.mxu0 0
        %1770 = vmatpush1.bf16.msra.mxu0 0
        %1771 = vmatprep.subr.bf16.mxu0 0
        %1772 = vmatpush1.bf16.msra.mxu0 0
        %1773 = vmatprep.subr.bf16.mxu0 0
        %1774 = vmatpush1.bf16.msra.mxu0 0
        %1775 = vmatprep.subr.bf16.mxu0 0
        %1776 = vmatpush1.bf16.msra.mxu0 0
        %1777 = vmatprep.subr.bf16.mxu0 0
        %1778 = vmatpush1.bf16.msra.mxu0 0
        %1779 = vmatprep.mubr.bf16.mxu0 0
        %1780 = vmatmul.mubr.bf16.gmra.mrb[0].mxu0 %v1742
        %v1781 = vpop.f32.mrb[0].mxu0
        %v1782 = vadd.f32 0.0, %v1781
        %v1783 = vpop.f32.mrb[0].mxu0
        %v1784 = vpop.f32.mrb[0].mxu0
        %v1785 = vpop.f32.mrb[0].mxu0
        %1786 = vdwg.mxu0
        %v1787 = vcombine.low %v1644, %v1736
        %v1788 = vcombine.high %v1644, %v1736
        %v1790 = vunpack.c.l.s4 1983009808
        %v1791 = vunpack.c.0.s8 %v1790
        %v1792 = vlaneseq
        %v1793 = vshrl.u32 %v1792, 7
        %v1794 = vsub.s32 %v1791, %v1793
        %v1795 = vrot.slane %v1787, %v1794
        %v1797 = vunpack.c.l.s4 1983009808
        %v1798 = vunpack.c.0.s8 %v1797
        %v1799 = vlaneseq
        %v1800 = vshrl.u32 %v1799, 7
        %v1801 = vsub.s32 %v1798, %v1800
        %v1802 = vrot.slane %v1788, %v1801
        %v1803 = vcombine.low %v1690, %v1782
        %v1804 = vcombine.high %v1690, %v1782
        %v1806 = vunpack.c.l.s4 1983009808
        %v1807 = vunpack.c.0.s8 %v1806
        %v1808 = vlaneseq
        %v1809 = vshrl.u32 %v1808, 7
        %v1810 = vsub.s32 %v1807, %v1809
        %v1811 = vrot.slane %v1803, %v1810
        %v1813 = vunpack.c.l.s4 1983009808
        %v1814 = vunpack.c.0.s8 %v1813
        %v1815 = vlaneseq
        %v1816 = vshrl.u32 %v1815, 7
        %v1817 = vsub.s32 %v1814, %v1816
        %v1818 = vrot.slane %v1804, %v1817
        %v1819 = vcombine.low %v1795, %v1811
        %v1820 = vcombine.high %v1795, %v1811
        %v1822 = vunpack.c.l.s4 1934713408
        %v1823 = vunpack.c.0.s8 %v1822
        %v1824 = vlaneseq
        %v1825 = vshrl.u32 %v1824, 7
        %v1826 = vsub.s32 %v1823, %v1825
        %v1827 = vrot.slane %v1819, %v1826
        %v1829 = vunpack.c.l.s4 1934713408
        %v1830 = vunpack.c.0.s8 %v1829
        %v1831 = vlaneseq
        %v1832 = vshrl.u32 %v1831, 7
        %v1833 = vsub.s32 %v1830, %v1832
        %v1834 = vrot.slane %v1820, %v1833
        %v1835 = vcombine.low %v1802, %v1818
        %v1836 = vcombine.high %v1802, %v1818
        %v1838 = vunpack.c.l.s4 1934713408
        %v1839 = vunpack.c.0.s8 %v1838
        %v1840 = vlaneseq
        %v1841 = vshrl.u32 %v1840, 7
        %v1842 = vsub.s32 %v1839, %v1841
        %v1843 = vrot.slane %v1835, %v1842
        %v1845 = vunpack.c.l.s4 1934713408
        %v1846 = vunpack.c.0.s8 %v1845
        %v1847 = vlaneseq
        %v1848 = vshrl.u32 %v1847, 7
        %v1849 = vsub.s32 %v1846, %v1848
        %v1850 = vrot.slane %v1836, %v1849
        %v1851 = vcombine.high %v1827, 0.0
        %v1852 = vcombine.high %v1834, 0.0
        %v1853 = vcombine.high %v1843, 0.0
        %v1854 = vcombine.high %v1850, 0.0
        %v1855 = vcombine.low %v1827, %v1834
        %v1857 = vunpack.c.l.s4 1983009808
        %v1858 = vunpack.c.0.s8 %v1857
        %v1859 = vlaneseq
        %v1860 = vshrl.u32 %v1859, 7
        %v1861 = vsub.s32 %v1858, %v1860
        %v1862 = vrot.slane %v1855, %v1861
        %v1863 = vcombine.low %v1851, %v1852
        %v1865 = vunpack.c.l.s4 1983009808
        %v1866 = vunpack.c.0.s8 %v1865
        %v1867 = vlaneseq
        %v1868 = vshrl.u32 %v1867, 7
        %v1869 = vsub.s32 %v1866, %v1868
        %v1870 = vrot.slane %v1863, %v1869
        %v1871 = vcombine.low %v1843, %v1850
        %v1873 = vunpack.c.l.s4 1983009808
        %v1874 = vunpack.c.0.s8 %v1873
        %v1875 = vlaneseq
        %v1876 = vshrl.u32 %v1875, 7
        %v1877 = vsub.s32 %v1874, %v1876
        %v1878 = vrot.slane %v1871, %v1877
        %v1879 = vcombine.low %v1853, %v1854
        %v1881 = vunpack.c.l.s4 1983009808
        %v1882 = vunpack.c.0.s8 %v1881
        %v1883 = vlaneseq
        %v1884 = vshrl.u32 %v1883, 7
        %v1885 = vsub.s32 %v1882, %v1884
        %v1886 = vrot.slane %v1879, %v1885
        %v1887 = vcombine.low %v1862, %v1870
        %v1888 = vcombine.high %v1862, %v1870
        %v1890 = vunpack.c.l.s4 1934713408
        %v1891 = vunpack.c.0.s8 %v1890
        %v1892 = vlaneseq
        %v1893 = vshrl.u32 %v1892, 7
        %v1894 = vsub.s32 %v1891, %v1893
        %v1895 = vrot.slane %v1887, %v1894
        %v1897 = vunpack.c.l.s4 1934713408
        %v1898 = vunpack.c.0.s8 %v1897
        %v1899 = vlaneseq
        %v1900 = vshrl.u32 %v1899, 7
        %v1901 = vsub.s32 %v1898, %v1900
        %v1902 = vrot.slane %v1888, %v1901
        %v1903 = vcombine.low %v1878, %v1886
        %v1904 = vcombine.high %v1878, %v1886
        %v1906 = vunpack.c.l.s4 1934713408
        %v1907 = vunpack.c.0.s8 %v1906
        %v1908 = vlaneseq
        %v1909 = vshrl.u32 %v1908, 7
        %v1910 = vsub.s32 %v1907, %v1909
        %v1911 = vrot.slane %v1903, %v1910
        %v1913 = vunpack.c.l.s4 1934713408
        %v1914 = vunpack.c.0.s8 %v1913
        %v1915 = vlaneseq
        %v1916 = vshrl.u32 %v1915, 7
        %v1917 = vsub.s32 %v1914, %v1916
        %v1918 = vrot.slane %v1904, %v1917
        %v1919 = vcombine.low %v1895, %v1911
        %v1920 = vcombine.high %v1895, %v1911
        %v1921 = vcombine.low %v1902, %v1918
        %v1922 = vcombine.high %v1902, %v1918
        %1924 = vrot.lane.b32.xlu0 %v1920, 8
        %v1925 = vpop.permute.xlu0 %1924
        %1928 = vrot.lane.b32.xlu0 %v1921, 16
        %v1929 = vpop.permute.xlu0 %1928
        %1932 = vrot.lane.b32.xlu0 %v1922, 24
        %v1933 = vpop.permute.xlu0 %1932
        %v1935 = vsel %vm1365, %v1919, %v1925
        %vm1936 = vcmask 130048
        %v1937 = vsel %vm1936, %v1935, %v1929
        %vm1938 = vcmask 195584
        %v1939 = vsel %vm1938, %v1937, %v1933
        %v1940 = vpack.c.bf16 %v1939, %v1939
        %v1941 = vld [vmem:[#allocation9] sm:$0xf]
        %v1942 = vld [vmem:[#allocation9 + $0x4] sm:$0xf]
        %v1943 = vld [vmem:[#allocation9 + $0x8] sm:$0xf]
        %v1944 = vld [vmem:[#allocation9 + $0xc] sm:$0xf]
        %v1945 = vld [vmem:[#allocation10] sm:$0x1]
        %v1947 = vlaneseq
        %v1948 = vshrl.u32 %v1947, 7
        %v1949 = vsub.s32 0, %v1948
        %v1950 = vrot.slane %v1945, %v1949
        %v1956 = vunpack.c.l.b16 %v1941
        %v1957 = vunpack.c.l.b16 %v1942
        %v1958 = vunpack.c.l.b16 %v1943
        %v1959 = vunpack.c.l.b16 %v1944
        %v1960 = vpack.c.b16 %v1957, %v1956
        %v1961 = vpack.c.b16 %v1959, %v1958
        %v1965 = vsel %vm1144, %v1940, 0
        %1967 = vmatprep.subr.bf16.mxu0 0
        %1968 = vmatpush1.bf16.msra.mxu0 %v1960
        %1969 = vmatprep.subr.bf16.mxu0 0
        %1970 = vmatpush1.bf16.msra.mxu0 %v1961
        %1971 = vmatprep.subr.bf16.mxu0 0
        %1972 = vmatpush1.bf16.msra.mxu0 0
        %1973 = vmatprep.subr.bf16.mxu0 0
        %1974 = vmatpush1.bf16.msra.mxu0 0
        %1975 = vmatprep.subr.bf16.mxu0 0
        %1976 = vmatpush1.bf16.msra.mxu0 0
        %1977 = vmatprep.subr.bf16.mxu0 0
        %1978 = vmatpush1.bf16.msra.mxu0 0
        %1979 = vmatprep.subr.bf16.mxu0 0
        %1980 = vmatpush1.bf16.msra.mxu0 0
        %1981 = vmatprep.subr.bf16.mxu0 0
        %1982 = vmatpush1.bf16.msra.mxu0 0
        %1983 = vmatprep.subr.bf16.mxu0 0
        %1984 = vmatpush1.bf16.msra.mxu0 0
        %1985 = vmatprep.subr.bf16.mxu0 0
        %1986 = vmatpush1.bf16.msra.mxu0 0
        %1987 = vmatprep.subr.bf16.mxu0 0
        %1988 = vmatpush1.bf16.msra.mxu0 0
        %1989 = vmatprep.subr.bf16.mxu0 0
        %1990 = vmatpush1.bf16.msra.mxu0 0
        %1991 = vmatprep.subr.bf16.mxu0 0
        %1992 = vmatpush1.bf16.msra.mxu0 0
        %1993 = vmatprep.subr.bf16.mxu0 0
        %1994 = vmatpush1.bf16.msra.mxu0 0
        %1995 = vmatprep.subr.bf16.mxu0 0
        %1996 = vmatpush1.bf16.msra.mxu0 0
        %1997 = vmatprep.subr.bf16.mxu0 0
        %1998 = vmatpush1.bf16.msra.mxu0 0
        %1999 = vmatprep.mubr.bf16.mxu0 0
        %2000 = vmatmul.mubr.bf16.gmra.mrb[0].mxu0 %v1965
        %v2001 = vpop.f32.mrb[0].mxu0
        %v2002 = vadd.f32 %v1950, %v2001
        %v2003 = vpop.f32.mrb[0].mxu0
        %v2004 = vpop.f32.mrb[0].mxu0
        %v2005 = vpop.f32.mrb[0].mxu0
        %2006 = vdwg.mxu0
        %v2007 = vadd.f32 %v2002, %v1119
        %v2008 = vld [vmem:[#allocation12] sm:$0x1]
        %v2009 = vld [vmem:[%s10] sm:$0x1]
        %v2010 = vsel %vm1144, %v2007, 0.0
        %2011 = vadd.xlane.f32.xlu0 %v2010
        %v2012 = vpop.xlane.xlu0 %2011
        %v2013 = vrcp.pop 32.0
        %v2014 = vmul.f32 %v2012, %v2013
        %v2015 = vsub.f32 %v2007, %v2014
        %v2016 = vmul.f32 %v2015, %v2015
        %v2017 = vsel %vm1144, %v2016, 0.0
        %2018 = vadd.xlane.f32.xlu0 %v2017
        %v2019 = vpop.xlane.xlu0 %2018
        %v2020 = vmul.f32 %v2019, %v2013
        %v2021 = vadd.f32 %v2020, 1e-05
        %v2022 = vrsqrt.pop %v2021
        %v2023 = vmul.f32 %v2015, %v2022
        %v2025 = vlaneseq
        %v2026 = vshrl.u32 %v2025, 7
        %v2027 = vsub.s32 0, %v2026
        %v2028 = vrot.slane %v2008, %v2027
        %v2030 = vmul.f32 %v2023, %v2028
        %v2032 = vlaneseq
        %v2033 = vshrl.u32 %v2032, 7
        %v2034 = vsub.s32 0, %v2033
        %v2035 = vrot.slane %v2009, %v2034
        %v2037 = vadd.f32 %v2030, %v2035
        %v2038 = vpack.c.bf16 %v2037, %v2037
        %v2039 = vld [vmem:[%s11] sm:$0xf]
        %v2040 = vld [vmem:[%s11 + $0x4] sm:$0xf]
        %v2041 = vld [vmem:[%s11 + $0x8] sm:$0xf]
        %v2042 = vld [vmem:[%s11 + $0xc] sm:$0xf]
        %v2043 = vld [vmem:[%s12] sm:$0x1]
        %v2045 = vlaneseq
        %v2046 = vshrl.u32 %v2045, 7
        %v2047 = vsub.s32 0, %v2046
        %v2048 = vrot.slane %v2043, %v2047
        %v2054 = vunpack.c.l.b16 %v2039
        %v2055 = vunpack.c.l.b16 %v2040
        %v2056 = vunpack.c.l.b16 %v2041
        %v2057 = vunpack.c.l.b16 %v2042
        %v2058 = vpack.c.b16 %v2055, %v2054
        %v2059 = vpack.c.b16 %v2057, %v2056
        %v2063 = vsel %vm1144, %v2038, 0
        %2065 = vmatprep.subr.bf16.mxu0 0
        %2066 = vmatpush1.bf16.msra.mxu0 %v2058
        %2067 = vmatprep.subr.bf16.mxu0 0
        %2068 = vmatpush1.bf16.msra.mxu0 %v2059
        %2069 = vmatprep.subr.bf16.mxu0 0
        %2070 = vmatpush1.bf16.msra.mxu0 0
        %2071 = vmatprep.subr.bf16.mxu0 0
        %2072 = vmatpush1.bf16.msra.mxu0 0
        %2073 = vmatprep.subr.bf16.mxu0 0
        %2074 = vmatpush1.bf16.msra.mxu0 0
        %2075 = vmatprep.subr.bf16.mxu0 0
        %2076 = vmatpush1.bf16.msra.mxu0 0
        %2077 = vmatprep.subr.bf16.mxu0 0
        %2078 = vmatpush1.bf16.msra.mxu0 0
        %2079 = vmatprep.subr.bf16.mxu0 0
        %2080 = vmatpush1.bf16.msra.mxu0 0
        %2081 = vmatprep.subr.bf16.mxu0 0
        %2082 = vmatpush1.bf16.msra.mxu0 0
        %2083 = vmatprep.subr.bf16.mxu0 0
        %2084 = vmatpush1.bf16.msra.mxu0 0
        %2085 = vmatprep.subr.bf16.mxu0 0
        %2086 = vmatpush1.bf16.msra.mxu0 0
        %2087 = vmatprep.subr.bf16.mxu0 0
        %2088 = vmatpush1.bf16.msra.mxu0 0
        %2089 = vmatprep.subr.bf16.mxu0 0
        %2090 = vmatpush1.bf16.msra.mxu0 0
        %2091 = vmatprep.subr.bf16.mxu0 0
        %2092 = vmatpush1.bf16.msra.mxu0 0
        %2093 = vmatprep.subr.bf16.mxu0 0
        %2094 = vmatpush1.bf16.msra.mxu0 0
        %2095 = vmatprep.subr.bf16.mxu0 0
        %2096 = vmatpush1.bf16.msra.mxu0 0
        %2097 = vmatprep.mubr.bf16.mxu0 0
        %2098 = vmatmul.mubr.bf16.gmra.mrb[0].mxu0 %v2063
        %v2099 = vpop.f32.mrb[0].mxu0
        %v2100 = vadd.f32 %v2048, %v2099
        %v2101 = vpop.f32.mrb[0].mxu0
        %v2102 = vpop.f32.mrb[0].mxu0
        %v2103 = vpop.f32.mrb[0].mxu0
        %2104 = vdwg.mxu0
        %v2105 = vmul.f32 %v2100, %v2100
        %v2106 = vmul.f32 %v2100, %v2105
        %v2107 = vmul.f32 %v2106, 0.044715
        %v2108 = vadd.f32 %v2100, %v2107
        %v2109 = vmul.f32 %v2108, 0.7978846
        %v2110 = vtanh.pop %v2109
        %v2111 = vadd.f32 %v2110, 1.0
        %v2112 = vmul.f32 %v2111, 0.5
        %v2113 = vmul.f32 %v2100, %v2112
        %v2114 = vpack.c.bf16 %v2113, %v2113
        %v2115 = vld [vmem:[%s13] sm:$0xf]
        %v2116 = vld [vmem:[%s13 + $0x4] sm:$0xf]
        %v2117 = vld [vmem:[%s13 + $0x8] sm:$0xf]
        %v2118 = vld [vmem:[%s13 + $0xc] sm:$0xf]
        %v2119 = vld [vmem:[%s13 + $0x10] sm:$0xf]
        %v2120 = vld [vmem:[%s13 + $0x14] sm:$0xf]
        %v2121 = vld [vmem:[%s13 + $0x18] sm:$0xf]
        %v2122 = vld [vmem:[%s13 + $0x1c] sm:$0xf]
        %v2123 = vld [vmem:[%s14] sm:$0x1]
        %v2125 = vlaneseq
        %v2126 = vshrl.u32 %v2125, 7
        %v2127 = vsub.s32 0, %v2126
        %v2128 = vrot.slane %v2123, %v2127
        %v2138 = vunpack.c.l.b16 %v2115
        %v2139 = vunpack.c.l.b16 %v2116
        %v2140 = vunpack.c.l.b16 %v2117
        %v2141 = vunpack.c.l.b16 %v2118
        %v2142 = vunpack.c.l.b16 %v2119
        %v2143 = vunpack.c.l.b16 %v2120
        %v2144 = vunpack.c.l.b16 %v2121
        %v2145 = vunpack.c.l.b16 %v2122
        %v2146 = vpack.c.b16 %v2139, %v2138
        %v2147 = vpack.c.b16 %v2141, %v2140
        %v2148 = vpack.c.b16 %v2143, %v2142
        %v2149 = vpack.c.b16 %v2145, %v2144
        %vm2154 = vcmask 523264
        %v2156 = vsel %vm2154, %v2114, 0
        %2158 = vmatprep.subr.bf16.mxu0 0
        %2159 = vmatpush1.bf16.msra.mxu0 %v2146
        %2160 = vmatprep.subr.bf16.mxu0 0
        %2161 = vmatpush1.bf16.msra.mxu0 %v2147
        %2162 = vmatprep.subr.bf16.mxu0 0
        %2163 = vmatpush1.bf16.msra.mxu0 %v2148
        %2164 = vmatprep.subr.bf16.mxu0 0
        %2165 = vmatpush1.bf16.msra.mxu0 %v2149
        %2166 = vmatprep.subr.bf16.mxu0 0
        %2167 = vmatpush1.bf16.msra.mxu0 0
        %2168 = vmatprep.subr.bf16.mxu0 0
        %2169 = vmatpush1.bf16.msra.mxu0 0
        %2170 = vmatprep.subr.bf16.mxu0 0
        %2171 = vmatpush1.bf16.msra.mxu0 0
        %2172 = vmatprep.subr.bf16.mxu0 0
        %2173 = vmatpush1.bf16.msra.mxu0 0
        %2174 = vmatprep.subr.bf16.mxu0 0
        %2175 = vmatpush1.bf16.msra.mxu0 0
        %2176 = vmatprep.subr.bf16.mxu0 0
        %2177 = vmatpush1.bf16.msra.mxu0 0
        %2178 = vmatprep.subr.bf16.mxu0 0
        %2179 = vmatpush1.bf16.msra.mxu0 0
        %2180 = vmatprep.subr.bf16.mxu0 0
        %2181 = vmatpush1.bf16.msra.mxu0 0
        %2182 = vmatprep.subr.bf16.mxu0 0
        %2183 = vmatpush1.bf16.msra.mxu0 0
        %2184 = vmatprep.subr.bf16.mxu0 0
        %2185 = vmatpush1.bf16.msra.mxu0 0
        %2186 = vmatprep.subr.bf16.mxu0 0
        %2187 = vmatpush1.bf16.msra.mxu0 0
        %2188 = vmatprep.subr.bf16.mxu0 0
        %2189 = vmatpush1.bf16.msra.mxu0 0
        %2190 = vmatprep.mubr.bf16.mxu0 0
        %2191 = vmatmul.mubr.bf16.gmra.mrb[0].mxu0 %v2156
        %v2192 = vpop.f32.mrb[0].mxu0
        %v2193 = vadd.f32 %v2128, %v2192
        %v2194 = vpop.f32.mrb[0].mxu0
        %v2195 = vpop.f32.mrb[0].mxu0
        %v2196 = vpop.f32.mrb[0].mxu0
        %2197 = vdwg.mxu0
        %v2198 = vadd.f32 %v2193, %v2037
        %v2199 = vld [vmem:[%s15] sm:$0x1]
        %v2200 = vld [vmem:[%s16] sm:$0x1]
        %v2201 = vsel %vm1144, %v2198, 0.0
        %2202 = vadd.xlane.f32.xlu0 %v2201
        %v2203 = vpop.xlane.xlu0 %2202
        %v2204 = vmul.f32 %v2203, %v2013
        %v2205 = vsub.f32 %v2198, %v2204
        %v2206 = vmul.f32 %v2205, %v2205
        %v2207 = vsel %vm1144, %v2206, 0.0
        %2208 = vadd.xlane.f32.xlu0 %v2207
        %v2209 = vpop.xlane.xlu0 %2208
        %v2210 = vmul.f32 %v2209, %v2013
        %v2211 = vadd.f32 %v2210, 1e-05
        %v2212 = vrsqrt.pop %v2211
        %v2213 = vmul.f32 %v2205, %v2212
        %v2215 = vlaneseq
        %v2216 = vshrl.u32 %v2215, 7
        %v2217 = vsub.s32 0, %v2216
        %v2218 = vrot.slane %v2199, %v2217
        %v2220 = vmul.f32 %v2213, %v2218
        %v2222 = vlaneseq
        %v2223 = vshrl.u32 %v2222, 7
        %v2224 = vsub.s32 0, %v2223
        %v2225 = vrot.slane %v2200, %v2224
        %v2227 = vadd.f32 %v2220, %v2225
        %2228 = vst.msk [vmem:[%s620] sm:$0xff] %vm1144, %v2227
        %s2229 = sand.u32 %s418, 1
        %s2230 = scalar_lea.sflag [#allocation6], %s2229
        %s2231 = sand.u32 %s418, 1
        %s2232 = smul.addr %s2231, 8
        %s2233 = scalar_lea.vmem [#allocation13], %s2232
        // Predicated region
        $region113: #{tpu_custom_call.1} parent=87 // pred_check
          %p2234 = pneg %p428
        $region114: #{tpu_custom_call.1} parent=87 // pred_check_branch
          %2236 = sbr.rel (%p2234) target = $region116
        $region115: #{tpu_custom_call.1} parent=87 // pred_region
          %s2238 = ssub.s32 128, 128
          %2239 = vsyncadd %s2230, %s2238
          %s2240 = sadd.s32 %s39, %s38
          %s2241 = smul.addr %s2240, 128
          %s2242 = scalar_lea.hbm %s17, %s2241
          %s2244 = sshll.u32 %s2233, 4
          %s2245 = int_to_ptr.vmem [resolvable:$true] %s2244
          %2247 = dma.vmem_to_hbm [thread:$0]  %s2245, 128, %s2242, %s2230
        $region116: #{tpu_custom_call.1} parent=87 // pred_fallthru
          _
      $region88: #{tpu_custom_call.1} parent=5 // pred_fallthru
        _
      %p2248 = scmp.le.s32.totalorder 2, %s29
      // Predicated region
      $region117: #{tpu_custom_call.1} parent=5 // pred_check
        %p2249 = pneg %p2248
      $region118: #{tpu_custom_call.1} parent=5 // pred_check_branch
        %2251 = sbr.rel (%p2249) target = $region120
      $region119: #{tpu_custom_call.1} parent=5 // pred_region
        %s2252 = ssub.s32 %s29, 2
        // Predicated region
        $region121: #{tpu_custom_call.1} parent=119 // pred_check
          %p2253 = pneg %p434
        $region122: #{tpu_custom_call.1} parent=119 // pred_check_branch
          %2255 = sbr.rel (%p2253) target = $region124
        $region123: #{tpu_custom_call.1} parent=119 // pred_region
          %s2256 = sand.u32 %s419, 1
          %s2257 = scalar_lea.sflag [#allocation6], %s2256
          %s2258 = sand.u32 %s419, 1
          %s2259 = smul.addr %s2258, 8
          %s2260 = scalar_lea.vmem [#allocation13], %s2259
          %2261 = dma.done %s2257, 128
        $region124: #{tpu_custom_call.1} parent=119 // pred_fallthru
          _
      $region120: #{tpu_custom_call.1} parent=5 // pred_fallthru
        _
    $region6: #{tpu_custom_call.1} parent=1 // loop_footer
      %s33 = sadd.s32 1, %s29
    $region7: #{tpu_custom_call.1} parent=1 // loop_footer_branch
      %28 = sbr.rel target = $region3
    $region8: #{tpu_custom_call.1} parent=1 // loop_exit
      _
    %2262 = vsyncpa [#allocation5], 1
    %s2263 = scalar_lea.sflag [#allocation5], 1
    %2264 = vsyncpa %s2263, 1
    %2265 = vsyncpa [#allocation8], 1
    %2266 = vsyncpa [#allocation11], 1
    %2267 = vsyncpa [#allocation6], 1
    %s2268 = scalar_lea.sflag [#allocation6], 1
    %2269 = vsyncpa %s2268, 1

// kernel: tpu_custom_call.1
$region0: #{tpu_custom_call.1}
  #allocation0 [shape = 'u32[]', space=smem, size = 0x4, offset = 0x4, fixed_abs, tag = 'smem constant byte address 0x4 - core index']
  #allocation1 [shape = 'u32[144,128]{1,0:T(1,128)}', space=vmem, size = 0x12000, scoped, tag = 'internal scratch']
  #allocation2 [shape = 'bf16[4,8,8]{2,1,0:T(8,128)(2,1)}', space=vmem, size = 0x2000, scoped, tag = 'scratch operand']
  #allocation3 [shape = 'bf16[4,8,8]{2,1,0:T(8,128)(2,1)}', space=vmem, size = 0x2000, scoped, tag = 'scratch operand']
  %s0 = inlined_call_operand.vmem [shape: f32[2,8,32], index: 0, kind: input, shape index: {}]
  %s1 = inlined_call_operand.vmem [shape: bf16[32,32], index: 1, kind: input, shape index: {}]
  %s2 = inlined_call_operand.vmem [shape: bf16[32,32], index: 2, kind: input, shape index: {}]
  %s3 = inlined_call_operand.hbm [shape: bf16[32,32], index: 3, kind: input, shape index: {}]
  %s4 = inlined_call_operand.vmem [shape: f32[1,32], index: 4, kind: input, shape index: {}]
  %s5 = inlined_call_operand.vmem [shape: f32[1,32], index: 5, kind: input, shape index: {}]
  %s6 = inlined_call_operand.hbm [shape: f32[1,32], index: 6, kind: input, shape index: {}]
  %s7 = inlined_call_operand.hbm [shape: bf16[32,32], index: 7, kind: input, shape index: {}]
  %s8 = inlined_call_operand.hbm [shape: f32[1,32], index: 8, kind: input, shape index: {}]
  %s9 = inlined_call_operand.hbm [shape: f32[1,32], index: 9, kind: input, shape index: {}]
  %s10 = inlined_call_operand.vmem [shape: f32[1,32], index: 10, kind: input, shape index: {}]
  %s11 = inlined_call_operand.vmem [shape: bf16[32,64], index: 11, kind: input, shape index: {}]
  %s12 = inlined_call_operand.vmem [shape: f32[1,64], index: 12, kind: input, shape index: {}]
  %s13 = inlined_call_operand.vmem [shape: bf16[64,32], index: 13, kind: input, shape index: {}]
  %s14 = inlined_call_operand.vmem [shape: f32[1,32], index: 14, kind: input, shape index: {}]
  %s15 = inlined_call_operand.vmem [shape: f32[1,32], index: 15, kind: input, shape index: {}]
  %s16 = inlined_call_operand.vmem [shape: f32[1,32], index: 16, kind: input, shape index: {}]
  %s17 = inlined_call_operand.hbm [shape: f32[2,8,32], index: 17, kind: output, shape index: {}]
  %s18 = sld [smem:[#allocation0]]
  $region125: #{tpu_custom_call.1} parent=0
    _
  %s20 = ssub.s32 1, %s18
  %s21 = scalar_select 0, %s20, %s18
  $region1: #{tpu_custom_call.1} parent=0
    #allocation4 [shape = 'u8[8192]{0}', space=vmem, size = 0x2000, scoped, tag = 'input window, operand 3, single buffered']
    #allocation5 [shape = 's32[2]{0}', space=sflag, size = 0x8, scoped, tag = 'scoped memory for tpu_custom_call.1']
    #allocation6 [shape = 's32[2]{0}', space=sflag, size = 0x8, scoped, tag = 'scoped memory for tpu_custom_call.1']
    #allocation7 [shape = 'u8[512]{0}', space=vmem, size = 0x400, scoped, tag = 'input window, operand 6, single buffered']
    #allocation8 [shape = 's32[1]{0}', space=sflag, size = 0x4, scoped, tag = 'scoped memory for tpu_custom_call.1']
    #allocation9 [shape = 'u8[8192]{0}', space=vmem, size = 0x2000, scoped, tag = 'input window, operand 7, single buffered']
    #allocation10 [shape = 'u8[512]{0}', space=vmem, size = 0x400, scoped, tag = 'input window, operand 8, single buffered']
    #allocation11 [shape = 's32[1]{0}', space=sflag, size = 0x4, scoped, tag = 'scoped memory for tpu_custom_call.1']
    #allocation12 [shape = 'u8[512]{0}', space=vmem, size = 0x400, scoped, tag = 'input window, operand 9, single buffered']
    #allocation13 [shape = 'u8[8192]{0}', space=vmem, size = 0x2000, scoped, tag = 'output window, operand 0']
    %22 = vsyncpa [#allocation5], 0
    %23 = vsyncpa [#allocation8], 0
    %24 = vsyncpa [#allocation11], 0
    %25 = vsyncpa [#allocation6], 0
    %s26 = scalar_lea.sflag [#allocation6], 1
    %27 = vsyncpa %s26, 0
    loop: start=0, step=1, limit=4
    $region2: #{tpu_custom_call.1} parent=1 // loop_pre_header
      _
    $region3: #{tpu_custom_call.1} parent=1 // loop_header
      %s29 = sphi 0, %s33
      %p30 = scmp.ge.s32.totalorder %s29, 4
      %s36 = sphi 0, %s48
      %s37 = sphi 0, %s44
      %s38 = sphi 0, %s36
      %s39 = sphi 0, %s37
      %s40 = sphi 0, %s38
      %s41 = sphi 0, %s39
      %s51 = sphi 0, %s53
      %s54 = sphi 0, %s51
      %s55 = sphi 0, %s54
      %s71 = sphi 0, %s55
      %s75 = sphi 0, %s75
      %s77 = sphi 0, %s75
      %s78 = sphi 0, %s77
      %s92 = sphi 0, %s78
      %s96 = sphi 0, %s96
      %s98 = sphi 0, %s96
      %s99 = sphi 0, %s98
      %s113 = sphi 0, %s99
      %s117 = sphi 0, %s117
      %s119 = sphi 0, %s117
      %s120 = sphi 0, %s119
      %s134 = sphi 0, %s120
      %s138 = sphi 0, %s138
      %s140 = sphi 0, %s138
      %s141 = sphi 0, %s140
      %s155 = sphi 0, %s141
      %s159 = sphi 0, %s159
      %s161 = sphi 0, %s159
      %s162 = sphi 0, %s161
      %s176 = sphi 0, %s162
      %s180 = sphi 0, %s180
      %s182 = sphi 0, %s180
      %s183 = sphi 0, %s182
      %s197 = sphi 0, %s183
      %s201 = sphi 0, %s201
      %s203 = sphi 0, %s201
      %s204 = sphi 0, %s203
      %s218 = sphi 0, %s204
      %s222 = sphi 0, %s222
      %s224 = sphi 0, %s222
      %s225 = sphi 0, %s224
      %s239 = sphi 0, %s225
      %s243 = sphi 0, %s243
      %s245 = sphi 0, %s243
      %s246 = sphi 0, %s245
      %s260 = sphi 0, %s246
      %s264 = sphi 0, %s264
      %s266 = sphi 0, %s264
      %s267 = sphi 0, %s266
      %s281 = sphi 0, %s267
      %s285 = sphi 0, %s285
      %s287 = sphi 0, %s285
      %s288 = sphi 0, %s287
      %s302 = sphi 0, %s288
      %s306 = sphi 0, %s306
      %s308 = sphi 0, %s306
      %s309 = sphi 0, %s308
      %s323 = sphi 0, %s309
      %s327 = sphi 0, %s327
      %s329 = sphi 0, %s327
      %s330 = sphi 0, %s329
      %s344 = sphi 0, %s330
      %s348 = sphi 0, %s348
      %s350 = sphi 0, %s348
      %s351 = sphi 0, %s350
      %s365 = sphi 0, %s351
      %s369 = sphi 0, %s369
      %s371 = sphi 0, %s369
      %s372 = sphi 0, %s371
      %s386 = sphi 0, %s372
      %s390 = sphi 0, %s390
      %s392 = sphi 0, %s390
      %s393 = sphi 0, %s392
      %s407 = sphi 0, %s393
      %s415 = sphi 0, %s417
      %s418 = sphi 0, %s415
      %s419 = sphi 0, %s418
      %s435 = sphi 0, %s419
    $region4: #{tpu_custom_call.1} parent=1 // loop_header_branch
      %32 = sbr.rel (%p30) target = $region8
    $region5: #{tpu_custom_call.1} parent=1 // loop_body
      %s34 = ssub.s32 %s29, 1
      %s35 = ssub.s32 %s29, 2
      %s42 = sadd.s32 1, %s37
      %p43 = scmp.ge.s32.totalorder %s42, 1
      %s44 = scalar_select %p43, 0, %s42
      %s45 = sadd.s32 1, %s36
      %s46 = scalar_select %p43, %s45, %s36
      %p47 = scmp.ge.s32.totalorder %s46, 2
      %s48 = scalar_select %p47, 0, %s46
      %s49 = ssub.s32 %s36, %s48
      %p50 = scmp.eq.s32.totalorder %s49, 0
      %s52 = sadd.s32 %s51, 1
      %s53 = scalar_select %p50, %s51, %s52
      %p56 = pneg %p50
      %p57 = scmp.eq.s32.totalorder %s29, 1
      %p58 = por %p56, %p57
      %p59 = scmp.ne.s32.totalorder %s51, %s54
      %p60 = scmp.eq.s32.totalorder %s29, 0
      %p61 = por %p59, %p60
      %p62 = scmp.ne.s32.totalorder %s51, %s54
      %p63 = scmp.eq.s32.totalorder %s34, 1
      %p64 = por %p62, %p63
      %p65 = scmp.ne.s32.totalorder %s54, %s55
      %p66 = scmp.eq.s32.totalorder %s34, 0
      %p67 = por %p65, %p66
      %p68 = scmp.ne.s32.totalorder %s54, %s55
      %p69 = scmp.eq.s32.totalorder %s35, 1
      %p70 = por %p68, %p69
      %p72 = scmp.ne.s32.totalorder %s55, %s71
      %p73 = scmp.eq.s32.totalorder %s35, 0
      %p74 = por %p72, %p73
      %s76 = sadd.s32 %s75, 1
      %p79 = scmp.eq.s32.totalorder %s29, 1
      %p80 = scmp.ne.s32.totalorder %s75, %s77
      %p81 = scmp.eq.s32.totalorder %s29, 0
      %p82 = por %p80, %p81
      %p83 = scmp.ne.s32.totalorder %s75, %s77
      %p84 = scmp.eq.s32.totalorder %s34, 1
      %p85 = por %p83, %p84
      %p86 = scmp.ne.s32.totalorder %s77, %s78
      %p87 = scmp.eq.s32.totalorder %s34, 0
      %p88 = por %p86, %p87
      %p89 = scmp.ne.s32.totalorder %s77, %s78
      %p90 = scmp.eq.s32.totalorder %s35, 1
      %p91 = por %p89, %p90
      %p93 = scmp.ne.s32.totalorder %s78, %s92
      %p94 = scmp.eq.s32.totalorder %s35, 0
      %p95 = por %p93, %p94
      %s97 = sadd.s32 %s96, 1
      %p100 = scmp.eq.s32.totalorder %s29, 1
      %p101 = scmp.ne.s32.totalorder %s96, %s98
      %p102 = scmp.eq.s32.totalorder %s29, 0
      %p103 = por %p101, %p102
      %p104 = scmp.ne.s32.totalorder %s96, %s98
      %p105 = scmp.eq.s32.totalorder %s34, 1
      %p106 = por %p104, %p105
      %p107 = scmp.ne.s32.totalorder %s98, %s99
      %p108 = scmp.eq.s32.totalorder %s34, 0
      %p109 = por %p107, %p108
      %p110 = scmp.ne.s32.totalorder %s98, %s99
      %p111 = scmp.eq.s32.totalorder %s35, 1
      %p112 = por %p110, %p111
      %p114 = scmp.ne.s32.totalorder %s99, %s113
      %p115 = scmp.eq.s32.totalorder %s35, 0
      %p116 = por %p114, %p115
      %s118 = sadd.s32 %s117, 1
      %p121 = scmp.eq.s32.totalorder %s29, 1
      %p122 = scmp.ne.s32.totalorder %s117, %s119
      %p123 = scmp.eq.s32.totalorder %s29, 0
      %p124 = por %p122, %p123
      %p125 = scmp.ne.s32.totalorder %s117, %s119
      %p126 = scmp.eq.s32.totalorder %s34, 1
      %p127 = por %p125, %p126
      %p128 = scmp.ne.s32.totalorder %s119, %s120
      %p129 = scmp.eq.s32.totalorder %s34, 0
      %p130 = por %p128, %p129
      %p131 = scmp.ne.s32.totalorder %s119, %s120
      %p132 = scmp.eq.s32.totalorder %s35, 1
      %p133 = por %p131, %p132
      %p135 = scmp.ne.s32.totalorder %s120, %s134
      %p136 = scmp.eq.s32.totalorder %s35, 0
      %p137 = por %p135, %p136
      %s139 = sadd.s32 %s138, 1
      %p142 = scmp.eq.s32.totalorder %s29, 1
      %p143 = scmp.ne.s32.totalorder %s138, %s140
      %p144 = scmp.eq.s32.totalorder %s29, 0
      %p145 = por %p143, %p144
      %p146 = scmp.ne.s32.totalorder %s138, %s140
      %p147 = scmp.eq.s32.totalorder %s34, 1
      %p148 = por %p146, %p147
      %p149 = scmp.ne.s32.totalorder %s140, %s141
      %p150 = scmp.eq.s32.totalorder %s34, 0
      %p151 = por %p149, %p150
      %p152 = scmp.ne.s32.totalorder %s140, %s141
      %p153 = scmp.eq.s32.totalorder %s35, 1
      %p154 = por %p152, %p153
      %p156 = scmp.ne.s32.totalorder %s141, %s155
      %p157 = scmp.eq.s32.totalorder %s35, 0
      %p158 = por %p156, %p157
      %s160 = sadd.s32 %s159, 1
      %p163 = scmp.eq.s32.totalorder %s29, 1
      %p164 = scmp.ne.s32.totalorder %s159, %s161
      %p165 = scmp.eq.s32.totalorder %s29, 0
      %p166 = por %p164, %p165
      %p167 = scmp.ne.s32.totalorder %s159, %s161
      %p168 = scmp.eq.s32.totalorder %s34, 1
      %p169 = por %p167, %p168
      %p170 = scmp.ne.s32.totalorder %s161, %s162
      %p171 = scmp.eq.s32.totalorder %s34, 0
      %p172 = por %p170, %p171
      %p173 = scmp.ne.s32.totalorder %s161, %s162
      %p174 = scmp.eq.s32.totalorder %s35, 1
      %p175 = por %p173, %p174
      %p177 = scmp.ne.s32.totalorder %s162, %s176
      %p178 = scmp.eq.s32.totalorder %s35, 0
      %p179 = por %p177, %p178
      %s181 = sadd.s32 %s180, 1
      %p184 = scmp.eq.s32.totalorder %s29, 1
      %p185 = scmp.ne.s32.totalorder %s180, %s182
      %p186 = scmp.eq.s32.totalorder %s29, 0
      %p187 = por %p185, %p186
      %p188 = scmp.ne.s32.totalorder %s180, %s182
      %p189 = scmp.eq.s32.totalorder %s34, 1
      %p190 = por %p188, %p189
      %p191 = scmp.ne.s32.totalorder %s182, %s183
      %p192 = scmp.eq.s32.totalorder %s34, 0
      %p193 = por %p191, %p192
      %p194 = scmp.ne.s32.totalorder %s182, %s183
      %p195 = scmp.eq.s32.totalorder %s35, 1
      %p196 = por %p194, %p195
      %p198 = scmp.ne.s32.totalorder %s183, %s197
      %p199 = scmp.eq.s32.totalorder %s35, 0
      %p200 = por %p198, %p199
      %s202 = sadd.s32 %s201, 1
      %p205 = scmp.eq.s32.totalorder %s29, 1
      %p206 = scmp.ne.s32.totalorder %s201, %s203
      %p207 = scmp.eq.s32.totalorder %s29, 0
      %p208 = por %p206, %p207
      %p209 = scmp.ne.s32.totalorder %s201, %s203
      %p210 = scmp.eq.s32.totalorder %s34, 1
      %p211 = por %p209, %p210
      %p212 = scmp.ne.s32.totalorder %s203, %s204
      %p213 = scmp.eq.s32.totalorder %s34, 0
      %p214 = por %p212, %p213
      %p215 = scmp.ne.s32.totalorder %s203, %s204
      %p216 = scmp.eq.s32.totalorder %s35, 1
      %p217 = por %p215, %p216
      %p219 = scmp.ne.s32.totalorder %s204, %s218
      %p220 = scmp.eq.s32.totalorder %s35, 0
      %p221 = por %p219, %p220
      %s223 = sadd.s32 %s222, 1
      %p226 = scmp.eq.s32.totalorder %s29, 1
      %p227 = scmp.ne.s32.totalorder %s222, %s224
      %p228 = scmp.eq.s32.totalorder %s29, 0
      %p229 = por %p227, %p228
      %p230 = scmp.ne.s32.totalorder %s222, %s224
      %p231 = scmp.eq.s32.totalorder %s34, 1
      %p232 = por %p230, %p231
      %p233 = scmp.ne.s32.totalorder %s224, %s225
      %p234 = scmp.eq.s32.totalorder %s34, 0
      %p235 = por %p233, %p234
      %p236 = scmp.ne.s32.totalorder %s224, %s225
      %p237 = scmp.eq.s32.totalorder %s35, 1
      %p238 = por %p236, %p237
      %p240 = scmp.ne.s32.totalorder %s225, %s239
      %p241 = scmp.eq.s32.totalorder %s35, 0
      %p242 = por %p240, %p241
      %s244 = sadd.s32 %s243, 1
      %p247 = scmp.eq.s32.totalorder %s29, 1
      %p248 = scmp.ne.s32.totalorder %s243, %s245
      %p249 = scmp.eq.s32.totalorder %s29, 0
      %p250 = por %p248, %p249
      %p251 = scmp.ne.s32.totalorder %s243, %s245
      %p252 = scmp.eq.s32.totalorder %s34, 1
      %p253 = por %p251, %p252
      %p254 = scmp.ne.s32.totalorder %s245, %s246
      %p255 = scmp.eq.s32.totalorder %s34, 0
      %p256 = por %p254, %p255
      %p257 = scmp.ne.s32.totalorder %s245, %s246
      %p258 = scmp.eq.s32.totalorder %s35, 1
      %p259 = por %p257, %p258
      %p261 = scmp.ne.s32.totalorder %s246, %s260
      %p262 = scmp.eq.s32.totalorder %s35, 0
      %p263 = por %p261, %p262
      %s265 = sadd.s32 %s264, 1
      %p268 = scmp.eq.s32.totalorder %s29, 1
      %p269 = scmp.ne.s32.totalorder %s264, %s266
      %p270 = scmp.eq.s32.totalorder %s29, 0
      %p271 = por %p269, %p270
      %p272 = scmp.ne.s32.totalorder %s264, %s266
      %p273 = scmp.eq.s32.totalorder %s34, 1
      %p274 = por %p272, %p273
      %p275 = scmp.ne.s32.totalorder %s266, %s267
      %p276 = scmp.eq.s32.totalorder %s34, 0
      %p277 = por %p275, %p276
      %p278 = scmp.ne.s32.totalorder %s266, %s267
      %p279 = scmp.eq.s32.totalorder %s35, 1
      %p280 = por %p278, %p279
      %p282 = scmp.ne.s32.totalorder %s267, %s281
      %p283 = scmp.eq.s32.totalorder %s35, 0
      %p284 = por %p282, %p283
      %s286 = sadd.s32 %s285, 1
      %p289 = scmp.eq.s32.totalorder %s29, 1
      %p290 = scmp.ne.s32.totalorder %s285, %s287
      %p291 = scmp.eq.s32.totalorder %s29, 0
      %p292 = por %p290, %p291
      %p293 = scmp.ne.s32.totalorder %s285, %s287
      %p294 = scmp.eq.s32.totalorder %s34, 1
      %p295 = por %p293, %p294
      %p296 = scmp.ne.s32.totalorder %s287, %s288
      %p297 = scmp.eq.s32.totalorder %s34, 0
      %p298 = por %p296, %p297
      %p299 = scmp.ne.s32.totalorder %s287, %s288
      %p300 = scmp.eq.s32.totalorder %s35, 1
      %p301 = por %p299, %p300
      %p303 = scmp.ne.s32.totalorder %s288, %s302
      %p304 = scmp.eq.s32.totalorder %s35, 0
      %p305 = por %p303, %p304
      %s307 = sadd.s32 %s306, 1
      %p310 = scmp.eq.s32.totalorder %s29, 1
      %p311 = scmp.ne.s32.totalorder %s306, %s308
      %p312 = scmp.eq.s32.totalorder %s29, 0
      %p313 = por %p311, %p312
      %p314 = scmp.ne.s32.totalorder %s306, %s308
      %p315 = scmp.eq.s32.totalorder %s34, 1
      %p316 = por %p314, %p315
      %p317 = scmp.ne.s32.totalorder %s308, %s309
      %p318 = scmp.eq.s32.totalorder %s34, 0
      %p319 = por %p317, %p318
      %p320 = scmp.ne.s32.totalorder %s308, %s309
      %p321 = scmp.eq.s32.totalorder %s35, 1
      %p322 = por %p320, %p321
      %p324 = scmp.ne.s32.totalorder %s309, %s323
      %p325 = scmp.eq.s32.totalorder %s35, 0
      %p326 = por %p324, %p325
      %s328 = sadd.s32 %s327, 1
      %p331 = scmp.eq.s32.totalorder %s29, 1
      %p332 = scmp.ne.s32.totalorder %s327, %s329
      %p333 = scmp.eq.s32.totalorder %s29, 0
      %p334 = por %p332, %p333
      %p335 = scmp.ne.s32.totalorder %s327, %s329
      %p336 = scmp.eq.s32.totalorder %s34, 1
      %p337 = por %p335, %p336
      %p338 = scmp.ne.s32.totalorder %s329, %s330
      %p339 = scmp.eq.s32.totalorder %s34, 0
      %p340 = por %p338, %p339
      %p341 = scmp.ne.s32.totalorder %s329, %s330
      %p342 = scmp.eq.s32.totalorder %s35, 1
      %p343 = por %p341, %p342
      %p345 = scmp.ne.s32.totalorder %s330, %s344
      %p346 = scmp.eq.s32.totalorder %s35, 0
      %p347 = por %p345, %p346
      %s349 = sadd.s32 %s348, 1
      %p352 = scmp.eq.s32.totalorder %s29, 1
      %p353 = scmp.ne.s32.totalorder %s348, %s350
      %p354 = scmp.eq.s32.totalorder %s29, 0
      %p355 = por %p353, %p354
      %p356 = scmp.ne.s32.totalorder %s348, %s350
      %p357 = scmp.eq.s32.totalorder %s34, 1
      %p358 = por %p356, %p357
      %p359 = scmp.ne.s32.totalorder %s350, %s351
      %p360 = scmp.eq.s32.totalorder %s34, 0
      %p361 = por %p359, %p360
      %p362 = scmp.ne.s32.totalorder %s350, %s351
      %p363 = scmp.eq.s32.totalorder %s35, 1
      %p364 = por %p362, %p363
      %p366 = scmp.ne.s32.totalorder %s351, %s365
      %p367 = scmp.eq.s32.totalorder %s35, 0
      %p368 = por %p366, %p367
      %s370 = sadd.s32 %s369, 1
      %p373 = scmp.eq.s32.totalorder %s29, 1
      %p374 = scmp.ne.s32.totalorder %s369, %s371
      %p375 = scmp.eq.s32.totalorder %s29, 0
      %p376 = por %p374, %p375
      %p377 = scmp.ne.s32.totalorder %s369, %s371
      %p378 = scmp.eq.s32.totalorder %s34, 1
      %p379 = por %p377, %p378
      %p380 = scmp.ne.s32.totalorder %s371, %s372
      %p381 = scmp.eq.s32.totalorder %s34, 0
      %p382 = por %p380, %p381
      %p383 = scmp.ne.s32.totalorder %s371, %s372
      %p384 = scmp.eq.s32.totalorder %s35, 1
      %p385 = por %p383, %p384
      %p387 = scmp.ne.s32.totalorder %s372, %s386
      %p388 = scmp.eq.s32.totalorder %s35, 0
      %p389 = por %p387, %p388
      %s391 = sadd.s32 %s390, 1
      %p394 = scmp.eq.s32.totalorder %s29, 1
      %p395 = scmp.ne.s32.totalorder %s390, %s392
      %p396 = scmp.eq.s32.totalorder %s29, 0
      %p397 = por %p395, %p396
      %p398 = scmp.ne.s32.totalorder %s390, %s392
      %p399 = scmp.eq.s32.totalorder %s34, 1
      %p400 = por %p398, %p399
      %p401 = scmp.ne.s32.totalorder %s392, %s393
      %p402 = scmp.eq.s32.totalorder %s34, 0
      %p403 = por %p401, %p402
      %p404 = scmp.ne.s32.totalorder %s392, %s393
      %p405 = scmp.eq.s32.totalorder %s35, 1
      %p406 = por %p404, %p405
      %p408 = scmp.ne.s32.totalorder %s393, %s407
      %p409 = scmp.eq.s32.totalorder %s35, 0
      %p410 = por %p408, %p409
      %s411 = ssub.s32 %s36, %s48
      %s412 = ssub.s32 %s37, %s44
      %s413 = sor.u32 %s411, %s412
      %p414 = scmp.eq.s32.totalorder %s413, 0
      %s416 = sadd.s32 %s415, 1
      %s417 = scalar_select %p414, %s415, %s416
      %p420 = pneg %p414
      %p421 = scmp.eq.s32.totalorder %s29, 1
      %p422 = por %p420, %p421
      %p423 = scmp.ne.s32.totalorder %s415, %s418
      %p424 = scmp.eq.s32.totalorder %s29, 0
      %p425 = por %p423, %p424
      %p426 = scmp.ne.s32.totalorder %s415, %s418
      %p427 = scmp.eq.s32.totalorder %s34, 1
      %p428 = por %p426, %p427
      %p429 = scmp.ne.s32.totalorder %s418, %s419
      %p430 = scmp.eq.s32.totalorder %s34, 0
      %p431 = por %p429, %p430
      %p432 = scmp.ne.s32.totalorder %s418, %s419
      %p433 = scmp.eq.s32.totalorder %s35, 1
      %p434 = por %p432, %p433
      %p436 = scmp.ne.s32.totalorder %s419, %s435
      %p437 = scmp.eq.s32.totalorder %s35, 0
      %p438 = por %p436, %p437
      %p439 = scmp.le.s32.totalorder 1, %s29
      %p440 = scmp.lt.s32.totalorder %s29, 3
      %p441 = pnand %p439, %p440
      %p442 = pneg %p441
      // Predicated region
      $region9: #{tpu_custom_call.1} parent=5 // pred_check
        _
      $region10: #{tpu_custom_call.1} parent=5 // pred_check_branch
        %444 = sbr.rel (%p441) target = $region12
      $region11: #{tpu_custom_call.1} parent=5 // pred_region
        %s445 = ssub.s32 %s29, 1
        // Predicated region
        $region13: #{tpu_custom_call.1} parent=11 // pred_check
          %p446 = pneg %p88
        $region14: #{tpu_custom_call.1} parent=11 // pred_check_branch
          %448 = sbr.rel (%p446) target = $region16
        $region15: #{tpu_custom_call.1} parent=11 // pred_region
          _
        $region16: #{tpu_custom_call.1} parent=11 // pred_fallthru
          _
        // Predicated region
        $region17: #{tpu_custom_call.1} parent=11 // pred_check
          %p449 = pneg %p109
        $region18: #{tpu_custom_call.1} parent=11 // pred_check_branch
          %451 = sbr.rel (%p449) target = $region20
        $region19: #{tpu_custom_call.1} parent=11 // pred_region
          _
        $region20: #{tpu_custom_call.1} parent=11 // pred_fallthru
          _
        // Predicated region
        $region21: #{tpu_custom_call.1} parent=11 // pred_check
          %p452 = pneg %p130
        $region22: #{tpu_custom_call.1} parent=11 // pred_check_branch
          %454 = sbr.rel (%p452) target = $region24
        $region23: #{tpu_custom_call.1} parent=11 // pred_region
          %s456 = ssub.s32 256, 256
          %457 = vsyncadd [#allocation5], %s456
          %s458 = sshll.u32 [#allocation4], 4
          %s459 = int_to_ptr.vmem [resolvable:$true] %s458
          %464 = dma.hbm_to_vmem [thread:$0]  %s3, 256, %s459, [#allocation5], 64, 64, 4
        $region24: #{tpu_custom_call.1} parent=11 // pred_fallthru
          _
        // Predicated region
        $region25: #{tpu_custom_call.1} parent=11 // pred_check
          %p465 = pneg %p151
        $region26: #{tpu_custom_call.1} parent=11 // pred_check_branch
          %467 = sbr.rel (%p465) target = $region28
        $region27: #{tpu_custom_call.1} parent=11 // pred_region
          _
        $region28: #{tpu_custom_call.1} parent=11 // pred_fallthru
          _
        // Predicated region
        $region29: #{tpu_custom_call.1} parent=11 // pred_check
          %p468 = pneg %p172
        $region30: #{tpu_custom_call.1} parent=11 // pred_check_branch
          %470 = sbr.rel (%p468) target = $region32
        $region31: #{tpu_custom_call.1} parent=11 // pred_region
          _
        $region32: #{tpu_custom_call.1} parent=11 // pred_fallthru
          _
        // Predicated region
        $region33: #{tpu_custom_call.1} parent=11 // pred_check
          %p471 = pneg %p193
        $region34: #{tpu_custom_call.1} parent=11 // pred_check_branch
          %473 = sbr.rel (%p471) target = $region36
        $region35: #{tpu_custom_call.1} parent=11 // pred_region
          %s475 = ssub.s32 16, 16
          %476 = vsyncadd [#allocation8], %s475
          %s478 = sshll.u32 [#allocation7], 4
          %s479 = int_to_ptr.vmem [resolvable:$true] %s478
          %481 = dma.hbm_to_vmem [thread:$0]  %s6, 16, %s479, [#allocation8]
        $region36: #{tpu_custom_call.1} parent=11 // pred_fallthru
          _
        // Predicated region
        $region37: #{tpu_custom_call.1} parent=11 // pred_check
          %p482 = pneg %p214
        $region38: #{tpu_custom_call.1} parent=11 // pred_check_branch
          %484 = sbr.rel (%p482) target = $region40
        $region39: #{tpu_custom_call.1} parent=11 // pred_region
          %s486 = ssub.s32 256, 256
          %487 = vsyncadd [#allocation8], %s486
          %s488 = sshll.u32 [#allocation9], 4
          %s489 = int_to_ptr.vmem [resolvable:$true] %s488
          %494 = dma.hbm_to_vmem [thread:$0]  %s7, 256, %s489, [#allocation8], 64, 64, 4
        $region40: #{tpu_custom_call.1} parent=11 // pred_fallthru
          _
        // Predicated region
        $region41: #{tpu_custom_call.1} parent=11 // pred_check
          %p495 = pneg %p235
        $region42: #{tpu_custom_call.1} parent=11 // pred_check_branch
          %497 = sbr.rel (%p495) target = $region44
        $region43: #{tpu_custom_call.1} parent=11 // pred_region
          %s499 = ssub.s32 16, 16
          %500 = vsyncadd [#allocation11], %s499
          %s502 = sshll.u32 [#allocation10], 4
          %s503 = int_to_ptr.vmem [resolvable:$true] %s502
          %505 = dma.hbm_to_vmem [thread:$0]  %s8, 16, %s503, [#allocation11]
        $region44: #{tpu_custom_call.1} parent=11 // pred_fallthru
          _
        // Predicated region
        $region45: #{tpu_custom_call.1} parent=11 // pred_check
          %p506 = pneg %p256
        $region46: #{tpu_custom_call.1} parent=11 // pred_check_branch
          %508 = sbr.rel (%p506) target = $region48
        $region47: #{tpu_custom_call.1} parent=11 // pred_region
          %s510 = ssub.s32 16, 16
          %511 = vsyncadd [#allocation11], %s510
          %s513 = sshll.u32 [#allocation12], 4
          %s514 = int_to_ptr.vmem [resolvable:$true] %s513
          %516 = dma.hbm_to_vmem [thread:$0]  %s9, 16, %s514, [#allocation11]
        $region48: #{tpu_custom_call.1} parent=11 // pred_fallthru
          _
        // Predicated region
        $region49: #{tpu_custom_call.1} parent=11 // pred_check
          %p517 = pneg %p277
        $region50: #{tpu_custom_call.1} parent=11 // pred_check_branch
          %519 = sbr.rel (%p517) target = $region52
        $region51: #{tpu_custom_call.1} parent=11 // pred_region
          _
        $region52: #{tpu_custom_call.1} parent=11 // pred_fallthru
          _
        // Predicated region
        $region53: #{tpu_custom_call.1} parent=11 // pred_check
          %p520 = pneg %p298
        $region54: #{tpu_custom_call.1} parent=11 // pred_check_branch
          %522 = sbr.rel (%p520) target = $region56
        $region55: #{tpu_custom_call.1} parent=11 // pred_region
          _
        $region56: #{tpu_custom_call.1} parent=11 // pred_fallthru
          _
        // Predicated region
        $region57: #{tpu_custom_call.1} parent=11 // pred_check
          %p523 = pneg %p319
        $region58: #{tpu_custom_call.1} parent=11 // pred_check_branch
          %525 = sbr.rel (%p523) target = $region60
        $region59: #{tpu_custom_call.1} parent=11 // pred_region
          _
        $region60: #{tpu_custom_call.1} parent=11 // pred_fallthru
          _
        // Predicated region
        $region61: #{tpu_custom_call.1} parent=11 // pred_check
          %p526 = pneg %p340
        $region62: #{tpu_custom_call.1} parent=11 // pred_check_branch
          %528 = sbr.rel (%p526) target = $region64
        $region63: #{tpu_custom_call.1} parent=11 // pred_region
          _
        $region64: #{tpu_custom_call.1} parent=11 // pred_fallthru
          _
        // Predicated region
        $region65: #{tpu_custom_call.1} parent=11 // pred_check
          %p529 = pneg %p361
        $region66: #{tpu_custom_call.1} parent=11 // pred_check_branch
          %531 = sbr.rel (%p529) target = $region68
        $region67: #{tpu_custom_call.1} parent=11 // pred_region
          _
        $region68: #{tpu_custom_call.1} parent=11 // pred_fallthru
          _
        // Predicated region
        $region69: #{tpu_custom_call.1} parent=11 // pred_check
          %p532 = pneg %p382
        $region70: #{tpu_custom_call.1} parent=11 // pred_check_branch
          %534 = sbr.rel (%p532) target = $region72
        $region71: #{tpu_custom_call.1} parent=11 // pred_region
          _
        $region72: #{tpu_custom_call.1} parent=11 // pred_fallthru
          _
        // Predicated region
        $region73: #{tpu_custom_call.1} parent=11 // pred_check
          %p535 = pneg %p403
        $region74: #{tpu_custom_call.1} parent=11 // pred_check_branch
          %537 = sbr.rel (%p535) target = $region76
        $region75: #{tpu_custom_call.1} parent=11 // pred_region
          _
        $region76: #{tpu_custom_call.1} parent=11 // pred_fallthru
          _
      $region12: #{tpu_custom_call.1} parent=5 // pred_fallthru
        _
      %p538 = scmp.lt.s32.totalorder %s29, 2
      // Predicated region
      $region77: #{tpu_custom_call.1} parent=5 // pred_check
        %p539 = pneg %p538
      $region78: #{tpu_custom_call.1} parent=5 // pred_check_branch
        %541 = sbr.rel (%p539) target = $region80
      $region79: #{tpu_custom_call.1} parent=5 // pred_region
        // Predicated region
        $region81: #{tpu_custom_call.1} parent=79 // pred_check
          %p542 = pneg %p61
        $region82: #{tpu_custom_call.1} parent=79 // pred_check_branch
          %544 = sbr.rel (%p542) target = $region84
        $region83: #{tpu_custom_call.1} parent=79 // pred_region
          %p545 = scmp.lt.s32.totalorder %s36, 1
          %s546 = scalar_select %p545, %s36, 1
          %s547 = smul.addr %s546, 8
          %s548 = scalar_lea.vmem %s0, %s547
        $region84: #{tpu_custom_call.1} parent=79 // pred_fallthru
          _
      $region80: #{tpu_custom_call.1} parent=5 // pred_fallthru
        _
      %p549 = scmp.le.s32.totalorder 1, %s29
      %p550 = scmp.lt.s32.totalorder %s29, 3
      %p551 = pnand %p549, %p550
      %p552 = pneg %p551
      // Predicated region
      $region85: #{tpu_custom_call.1} parent=5 // pred_check
        _
      $region86: #{tpu_custom_call.1} parent=5 // pred_check_branch
        %554 = sbr.rel (%p551) target = $region88
      $region87: #{tpu_custom_call.1} parent=5 // pred_region
        %s555 = ssub.s32 %s29, 1
        // Predicated region
        $region89: #{tpu_custom_call.1} parent=87 // pred_check
          %p556 = pneg %p130
        $region90: #{tpu_custom_call.1} parent=87 // pred_check_branch
          %558 = sbr.rel (%p556) target = $region92
        $region91: #{tpu_custom_call.1} parent=87 // pred_region
          %559 = dma.done [#allocation5], 256
        $region92: #{tpu_custom_call.1} parent=87 // pred_fallthru
          _
        // Predicated region
        $region93: #{tpu_custom_call.1} parent=87 // pred_check
          %p560 = pneg %p193
        $region94: #{tpu_custom_call.1} parent=87 // pred_check_branch
          %562 = sbr.rel (%p560) target = $region96
        $region95: #{tpu_custom_call.1} parent=87 // pred_region
          %563 = dma.done [#allocation8], 16
        $region96: #{tpu_custom_call.1} parent=87 // pred_fallthru
          _
        // Predicated region
        $region97: #{tpu_custom_call.1} parent=87 // pred_check
          %p564 = pneg %p214
        $region98: #{tpu_custom_call.1} parent=87 // pred_check_branch
          %566 = sbr.rel (%p564) target = $region100
        $region99: #{tpu_custom_call.1} parent=87 // pred_region
          %567 = dma.done [#allocation8], 256
        $region100: #{tpu_custom_call.1} parent=87 // pred_fallthru
          _
        // Predicated region
        $region101: #{tpu_custom_call.1} parent=87 // pred_check
          %p568 = pneg %p235
        $region102: #{tpu_custom_call.1} parent=87 // pred_check_branch
          %570 = sbr.rel (%p568) target = $region104
        $region103: #{tpu_custom_call.1} parent=87 // pred_region
          %571 = dma.done [#allocation11], 16
        $region104: #{tpu_custom_call.1} parent=87 // pred_fallthru
          _
        // Predicated region
        $region105: #{tpu_custom_call.1} parent=87 // pred_check
          %p572 = pneg %p256
        $region106: #{tpu_custom_call.1} parent=87 // pred_check_branch
          %574 = sbr.rel (%p572) target = $region108
        $region107: #{tpu_custom_call.1} parent=87 // pred_region
          %575 = dma.done [#allocation11], 16
        $region108: #{tpu_custom_call.1} parent=87 // pred_fallthru
          _
        %p576 = scmp.lt.s32.totalorder %s38, 1
        %s577 = scalar_select %p576, %s38, 1
        %s578 = smul.addr %s577, 8
        %s579 = scalar_lea.vmem %s0, %s578
        %p580 = pneg %p67
        %p581 = pneg %p64
        %p582 = pneg %p88
        %p583 = pneg %p85
        %p584 = pneg %p109
        %p585 = pneg %p106
        %p586 = pneg %p130
        %p587 = pneg %p127
        %p588 = pneg %p151
        %p589 = pneg %p148
        %p590 = pneg %p172
        %p591 = pneg %p169
        %p592 = pneg %p193
        %p593 = pneg %p190
        %p594 = pneg %p214
        %p595 = pneg %p211
        %p596 = pneg %p235
        %p597 = pneg %p232
        %p598 = pneg %p256
        %p599 = pneg %p253
        %p600 = pneg %p277
        %p601 = pneg %p274
        %p602 = pneg %p298
        %p603 = pneg %p295
        %p604 = pneg %p319
        %p605 = pneg %p316
        %p606 = pneg %p340
        %p607 = pneg %p337
        %p608 = pneg %p361
        %p609 = pneg %p358
        %p610 = pneg %p382
        %p611 = pneg %p379
        %p612 = pneg %p403
        %p613 = pneg %p400
        %p614 = pneg %p431
        %p615 = pneg %p428
        %s616 = sand.u32 %s418, 1
        %s617 = scalar_lea.sflag [#allocation6], %s616
        %s618 = sand.u32 %s418, 1
        %s619 = smul.addr %s618, 8
        %s620 = scalar_lea.vmem [#allocation13], %s619
        %p621 = scmp.lt.s32.totalorder %s38, 1
        %s622 = scalar_select %p621, %s38, 1
        %s623 = smul.addr %s622, 8
        %s624 = scalar_lea.vmem %s0, %s623
        %p626 = scmp.eq.s32.totalorder %s39, 0
        // Predicated region
        $region109: #{tpu_custom_call.1} parent=87 // pred_check
          %p627 = pneg %p626
        $region110: #{tpu_custom_call.1} parent=87 // pred_check_branch
          %629 = sbr.rel (%p627) target = $region112
        $region111: #{tpu_custom_call.1} parent=87 // pred_region
          %v630 = vld [vmem:[%s624] sm:$0xff]
          %v631 = vpack.c.bf16 %v630, %v630
          %v632 = vld [vmem:[%s2] sm:$0xf]
          %v633 = vld [vmem:[%s2 + $0x4] sm:$0xf]
          %v634 = vld [vmem:[%s2 + $0x8] sm:$0xf]
          %v635 = vld [vmem:[%s2 + $0xc] sm:$0xf]
          %v636 = vld [vmem:[%s5] sm:$0x1]
          %v638 = vlaneseq
          %v639 = vshrl.u32 %v638, 7
          %v640 = vsub.s32 0, %v639
          %v641 = vrot.slane %v636, %v640
          %v647 = vunpack.c.l.b16 %v632
          %v648 = vunpack.c.l.b16 %v633
          %v649 = vunpack.c.l.b16 %v634
          %v650 = vunpack.c.l.b16 %v635
          %v651 = vpack.c.b16 %v648, %v647
          %v652 = vpack.c.b16 %v650, %v649
          %vm655 = vcmask 261120
          %v657 = vsel %vm655, %v631, 0
          %659 = vmatprep.subr.bf16.mxu0 0
          %660 = vmatpush1.bf16.msra.mxu0 %v651
          %661 = vmatprep.subr.bf16.mxu0 0
          %662 = vmatpush1.bf16.msra.mxu0 %v652
          %663 = vmatprep.subr.bf16.mxu0 0
          %664 = vmatpush1.bf16.msra.mxu0 0
          %665 = vmatprep.subr.bf16.mxu0 0
          %666 = vmatpush1.bf16.msra.mxu0 0
          %667 = vmatprep.subr.bf16.mxu0 0
          %668 = vmatpush1.bf16.msra.mxu0 0
          %669 = vmatprep.subr.bf16.mxu0 0
          %670 = vmatpush1.bf16.msra.mxu0 0
          %671 = vmatprep.subr.bf16.mxu0 0
          %672 = vmatpush1.bf16.msra.mxu0 0
          %673 = vmatprep.subr.bf16.mxu0 0
          %674 = vmatpush1.bf16.msra.mxu0 0
          %675 = vmatprep.subr.bf16.mxu0 0
          %676 = vmatpush1.bf16.msra.mxu0 0
          %677 = vmatprep.subr.bf16.mxu0 0
          %678 = vmatpush1.bf16.msra.mxu0 0
          %679 = vmatprep.subr.bf16.mxu0 0
          %680 = vmatpush1.bf16.msra.mxu0 0
          %681 = vmatprep.subr.bf16.mxu0 0
          %682 = vmatpush1.bf16.msra.mxu0 0
          %683 = vmatprep.subr.bf16.mxu0 0
          %684 = vmatpush1.bf16.msra.mxu0 0
          %685 = vmatprep.subr.bf16.mxu0 0
          %686 = vmatpush1.bf16.msra.mxu0 0
          %687 = vmatprep.subr.bf16.mxu0 0
          %688 = vmatpush1.bf16.msra.mxu0 0
          %689 = vmatprep.subr.bf16.mxu0 0
          %690 = vmatpush1.bf16.msra.mxu0 0
          %691 = vmatprep.mubr.bf16.mxu0 0
          %692 = vmatmul.mubr.bf16.gmra.mrb[0].mxu0 %v657
          %v693 = vpop.f32.mrb[0].mxu0
          %v694 = vadd.f32 %v641, %v693
          %v695 = vpop.f32.mrb[0].mxu0
          %v696 = vpop.f32.mrb[0].mxu0
          %v697 = vpop.f32.mrb[0].mxu0
          %698 = vdwg.mxu0
          %v699 = vld [vmem:[#allocation4] sm:$0xf]
          %v700 = vld [vmem:[#allocation4 + $0x4] sm:$0xf]
          %v701 = vld [vmem:[#allocation4 + $0x8] sm:$0xf]
          %v702 = vld [vmem:[#allocation4 + $0xc] sm:$0xf]
          %v703 = vld [vmem:[#allocation7] sm:$0x1]
          %v705 = vlaneseq
          %v706 = vshrl.u32 %v705, 7
          %v707 = vsub.s32 0, %v706
          %v708 = vrot.slane %v703, %v707
          %v714 = vunpack.c.l.b16 %v699
          %v715 = vunpack.c.l.b16 %v700
          %v716 = vunpack.c.l.b16 %v701
          %v717 = vunpack.c.l.b16 %v702
          %v718 = vpack.c.b16 %v715, %v714
          %v719 = vpack.c.b16 %v717, %v716
          %722 = vmatprep.subr.bf16.mxu0 0
          %723 = vmatpush1.bf16.msra.mxu0 %v718
          %724 = vmatprep.subr.bf16.mxu0 0
          %725 = vmatpush1.bf16.msra.mxu0 %v719
          %726 = vmatprep.subr.bf16.mxu0 0
          %727 = vmatpush1.bf16.msra.mxu0 0
          %728 = vmatprep.subr.bf16.mxu0 0
          %729 = vmatpush1.bf16.msra.mxu0 0
          %730 = vmatprep.subr.bf16.mxu0 0
          %731 = vmatpush1.bf16.msra.mxu0 0
          %732 = vmatprep.subr.bf16.mxu0 0
          %733 = vmatpush1.bf16.msra.mxu0 0
          %734 = vmatprep.subr.bf16.mxu0 0
          %735 = vmatpush1.bf16.msra.mxu0 0
          %736 = vmatprep.subr.bf16.mxu0 0
          %737 = vmatpush1.bf16.msra.mxu0 0
          %738 = vmatprep.subr.bf16.mxu0 0
          %739 = vmatpush1.bf16.msra.mxu0 0
          %740 = vmatprep.subr.bf16.mxu0 0
          %741 = vmatpush1.bf16.msra.mxu0 0
          %742 = vmatprep.subr.bf16.mxu0 0
          %743 = vmatpush1.bf16.msra.mxu0 0
          %744 = vmatprep.subr.bf16.mxu0 0
          %745 = vmatpush1.bf16.msra.mxu0 0
          %746 = vmatprep.subr.bf16.mxu0 0
          %747 = vmatpush1.bf16.msra.mxu0 0
          %748 = vmatprep.subr.bf16.mxu0 0
          %749 = vmatpush1.bf16.msra.mxu0 0
          %750 = vmatprep.subr.bf16.mxu0 0
          %751 = vmatpush1.bf16.msra.mxu0 0
          %752 = vmatprep.subr.bf16.mxu0 0
          %753 = vmatpush1.bf16.msra.mxu0 0
          %754 = vmatprep.mubr.bf16.mxu0 0
          %755 = vmatmul.mubr.bf16.gmra.mrb[0].mxu0 %v657
          %v756 = vpop.f32.mrb[0].mxu0
          %v757 = vadd.f32 %v708, %v756
          %v758 = vpop.f32.mrb[0].mxu0
          %v759 = vpop.f32.mrb[0].mxu0
          %v760 = vpop.f32.mrb[0].mxu0
          %761 = vdwg.mxu0
          %v762 = vpack.c.bf16 %v694, %v694
          %764 = vrot.lane.b32.xlu0 %v762, 120
          %v765 = vpop.permute.xlu0 %764
          %766 = vrot.lane.b32.xlu0 %v762, 112
          %v767 = vpop.permute.xlu0 %766
          %768 = vrot.lane.b32.xlu0 %v762, 104
          %v769 = vpop.permute.xlu0 %768
          %v771 = vunpack.c.l.s4 1983009808
          %v772 = vunpack.c.0.s8 %v771
          %v773 = vlaneseq
          %v774 = vshrl.u32 %v773, 7
          %v775 = vsub.s32 %v772, %v774
          %v776 = vrot.slane %v762, %v775
          %v779 = vunpack.c.l.s4 1983009808
          %v780 = vunpack.c.0.s8 %v779
          %v781 = vlaneseq
          %v782 = vshrl.u32 %v781, 7
          %v783 = vsub.s32 %v780, %v782
          %v784 = vrot.slane %v767, %v783
          %v785 = vcombine.low %v776, %v784
          %v786 = vcombine.high %v776, %v784
          %v788 = vunpack.c.l.s4 1934713408
          %v789 = vunpack.c.0.s8 %v788
          %v790 = vlaneseq
          %v791 = vshrl.u32 %v790, 7
          %v792 = vsub.s32 %v789, %v791
          %v793 = vrot.slane %v785, %v792
          %v795 = vunpack.c.l.s4 1934713408
          %v796 = vunpack.c.0.s8 %v795
          %v797 = vlaneseq
          %v798 = vshrl.u32 %v797, 7
          %v799 = vsub.s32 %v796, %v798
          %v800 = vrot.slane %v786, %v799
          %v801 = vcombine.high %v793, 0
          %v802 = vcombine.high %v800, 0
          %v805 = vunpack.c.l.s4 1983009808
          %v806 = vunpack.c.0.s8 %v805
          %v807 = vlaneseq
          %v808 = vshrl.u32 %v807, 7
          %v809 = vsub.s32 %v806, %v808
          %v810 = vrot.slane %v765, %v809
          %v813 = vunpack.c.l.s4 1983009808
          %v814 = vunpack.c.0.s8 %v813
          %v815 = vlaneseq
          %v816 = vshrl.u32 %v815, 7
          %v817 = vsub.s32 %v814, %v816
          %v818 = vrot.slane %v769, %v817
          %v819 = vcombine.low %v810, %v818
          %v820 = vcombine.high %v810, %v818
          %v822 = vunpack.c.l.s4 1934713408
          %v823 = vunpack.c.0.s8 %v822
          %v824 = vlaneseq
          %v825 = vshrl.u32 %v824, 7
          %v826 = vsub.s32 %v823, %v825
          %v827 = vrot.slane %v819, %v826
          %v829 = vunpack.c.l.s4 1934713408
          %v830 = vunpack.c.0.s8 %v829
          %v831 = vlaneseq
          %v832 = vshrl.u32 %v831, 7
          %v833 = vsub.s32 %v830, %v832
          %v834 = vrot.slane %v820, %v833
          %v835 = vcombine.high %v827, 0
          %v836 = vcombine.high %v834, 0
          %v839 = vpack.i.b16 %v827, %v793
          %v841 = vshrl.u32 %v793, 16
          %v842 = vshrl.u32 %v827, 16
          %v843 = vpack.i.b16 %v842, %v841
          %v847 = vpack.i.b16 %v835, %v801
          %v849 = vshrl.u32 %v801, 16
          %v850 = vshrl.u32 %v835, 16
          %v851 = vpack.i.b16 %v850, %v849
          %v855 = vpack.i.b16 %v834, %v800
          %v857 = vshrl.u32 %v800, 16
          %v858 = vshrl.u32 %v834, 16
          %v859 = vpack.i.b16 %v858, %v857
          %v863 = vpack.i.b16 %v836, %v802
          %v865 = vshrl.u32 %v802, 16
          %v866 = vshrl.u32 %v836, 16
          %v867 = vpack.i.b16 %v866, %v865
          %v869 = vcombine.low %v839, %v855
          %v871 = vunpack.c.l.s4 1983009808
          %v872 = vunpack.c.0.s8 %v871
          %v873 = vlaneseq
          %v874 = vshrl.u32 %v873, 7
          %v875 = vsub.s32 %v872, %v874
          %v876 = vrot.slane %v869, %v875
          %v877 = vcombine.low %v847, %v863
          %v879 = vunpack.c.l.s4 1983009808
          %v880 = vunpack.c.0.s8 %v879
          %v881 = vlaneseq
          %v882 = vshrl.u32 %v881, 7
          %v883 = vsub.s32 %v880, %v882
          %v884 = vrot.slane %v877, %v883
          %v885 = vcombine.low %v876, %v884
          %v887 = vunpack.c.l.s4 1934713408
          %v888 = vunpack.c.0.s8 %v887
          %v889 = vlaneseq
          %v890 = vshrl.u32 %v889, 7
          %v891 = vsub.s32 %v888, %v890
          %v892 = vrot.slane %v885, %v891
          %v893 = vcombine.high %v892, 0
          %v894 = vcombine.low %v843, %v859
          %v896 = vunpack.c.l.s4 1983009808
          %v897 = vunpack.c.0.s8 %v896
          %v898 = vlaneseq
          %v899 = vshrl.u32 %v898, 7
          %v900 = vsub.s32 %v897, %v899
          %v901 = vrot.slane %v894, %v900
          %v902 = vcombine.low %v851, %v867
          %v904 = vunpack.c.l.s4 1983009808
          %v905 = vunpack.c.0.s8 %v904
          %v906 = vlaneseq
          %v907 = vshrl.u32 %v906, 7
          %v908 = vsub.s32 %v905, %v907
          %v909 = vrot.slane %v902, %v908
          %v910 = vcombine.low %v901, %v909
          %v912 = vunpack.c.l.s4 1934713408
          %v913 = vunpack.c.0.s8 %v912
          %v914 = vlaneseq
          %v915 = vshrl.u32 %v914, 7
          %v916 = vsub.s32 %v913, %v915
          %v917 = vrot.slane %v910, %v916
          %v918 = vcombine.high %v917, 0
          %v921 = vpack.i.b16 %v917, %v892
          %v923 = vshrl.u32 %v892, 16
          %v924 = vshrl.u32 %v917, 16
          %v925 = vpack.i.b16 %v924, %v923
          %v929 = vpack.i.b16 %v918, %v893
          %v931 = vshrl.u32 %v893, 16
          %v932 = vshrl.u32 %v918, 16
          %v933 = vpack.i.b16 %v932, %v931
          %vm935 = vcmask 60416
          %936 = vst.msk [vmem:[#allocation2] sm:$0xf] %vm935, %v921
          %937 = vst.msk [vmem:[#allocation2 + $0x4] sm:$0xf] %vm935, %v925
          %938 = vst.msk [vmem:[#allocation2 + $0x8] sm:$0xf] %vm935, %v929
          %939 = vst.msk [vmem:[#allocation2 + $0xc] sm:$0xf] %vm935, %v933
          %v940 = vpack.c.bf16 %v757, %v757
          %942 = vrot.lane.b32.xlu0 %v940, 120
          %v943 = vpop.permute.xlu0 %942
          %944 = vrot.lane.b32.xlu0 %v940, 112
          %v945 = vpop.permute.xlu0 %944
          %946 = vrot.lane.b32.xlu0 %v940, 104
          %v947 = vpop.permute.xlu0 %946
          %v949 = vunpack.c.l.s4 1983009808
          %v950 = vunpack.c.0.s8 %v949
          %v951 = vlaneseq
          %v952 = vshrl.u32 %v951, 7
          %v953 = vsub.s32 %v950, %v952
          %v954 = vrot.slane %v940, %v953
          %v957 = vunpack.c.l.s4 1983009808
          %v958 = vunpack.c.0.s8 %v957
          %v959 = vlaneseq
          %v960 = vshrl.u32 %v959, 7
          %v961 = vsub.s32 %v958, %v960
          %v962 = vrot.slane %v945, %v961
          %v963 = vcombine.low %v954, %v962
          %v964 = vcombine.high %v954, %v962
          %v966 = vunpack.c.l.s4 1934713408
          %v967 = vunpack.c.0.s8 %v966
          %v968 = vlaneseq
          %v969 = vshrl.u32 %v968, 7
          %v970 = vsub.s32 %v967, %v969
          %v971 = vrot.slane %v963, %v970
          %v973 = vunpack.c.l.s4 1934713408
          %v974 = vunpack.c.0.s8 %v973
          %v975 = vlaneseq
          %v976 = vshrl.u32 %v975, 7
          %v977 = vsub.s32 %v974, %v976
          %v978 = vrot.slane %v964, %v977
          %v979 = vcombine.high %v971, 0
          %v980 = vcombine.high %v978, 0
          %v983 = vunpack.c.l.s4 1983009808
          %v984 = vunpack.c.0.s8 %v983
          %v985 = vlaneseq
          %v986 = vshrl.u32 %v985, 7
          %v987 = vsub.s32 %v984, %v986
          %v988 = vrot.slane %v943, %v987
          %v991 = vunpack.c.l.s4 1983009808
          %v992 = vunpack.c.0.s8 %v991
          %v993 = vlaneseq
          %v994 = vshrl.u32 %v993, 7
          %v995 = vsub.s32 %v992, %v994
          %v996 = vrot.slane %v947, %v995
          %v997 = vcombine.low %v988, %v996
          %v998 = vcombine.high %v988, %v996
          %v1000 = vunpack.c.l.s4 1934713408
          %v1001 = vunpack.c.0.s8 %v1000
          %v1002 = vlaneseq
          %v1003 = vshrl.u32 %v1002, 7
          %v1004 = vsub.s32 %v1001, %v1003
          %v1005 = vrot.slane %v997, %v1004
          %v1007 = vunpack.c.l.s4 1934713408
          %v1008 = vunpack.c.0.s8 %v1007
          %v1009 = vlaneseq
          %v1010 = vshrl.u32 %v1009, 7
          %v1011 = vsub.s32 %v1008, %v1010
          %v1012 = vrot.slane %v998, %v1011
          %v1013 = vcombine.high %v1005, 0
          %v1014 = vcombine.high %v1012, 0
          %v1017 = vpack.i.b16 %v1005, %v971
          %v1019 = vshrl.u32 %v971, 16
          %v1020 = vshrl.u32 %v1005, 16
          %v1021 = vpack.i.b16 %v1020, %v1019
          %v1025 = vpack.i.b16 %v1013, %v979
          %v1027 = vshrl.u32 %v979, 16
          %v1028 = vshrl.u32 %v1013, 16
          %v1029 = vpack.i.b16 %v1028, %v1027
          %v1033 = vpack.i.b16 %v1012, %v978
          %v1035 = vshrl.u32 %v978, 16
          %v1036 = vshrl.u32 %v1012, 16
          %v1037 = vpack.i.b16 %v1036, %v1035
          %v1041 = vpack.i.b16 %v1014, %v980
          %v1043 = vshrl.u32 %v980, 16
          %v1044 = vshrl.u32 %v1014, 16
          %v1045 = vpack.i.b16 %v1044, %v1043
          %v1047 = vcombine.low %v1017, %v1033
          %v1049 = vunpack.c.l.s4 1983009808
          %v1050 = vunpack.c.0.s8 %v1049
          %v1051 = vlaneseq
          %v1052 = vshrl.u32 %v1051, 7
          %v1053 = vsub.s32 %v1050, %v1052
          %v1054 = vrot.slane %v1047, %v1053
          %v1055 = vcombine.low %v1025, %v1041
          %v1057 = vunpack.c.l.s4 1983009808
          %v1058 = vunpack.c.0.s8 %v1057
          %v1059 = vlaneseq
          %v1060 = vshrl.u32 %v1059, 7
          %v1061 = vsub.s32 %v1058, %v1060
          %v1062 = vrot.slane %v1055, %v1061
          %v1063 = vcombine.low %v1054, %v1062
          %v1065 = vunpack.c.l.s4 1934713408
          %v1066 = vunpack.c.0.s8 %v1065
          %v1067 = vlaneseq
          %v1068 = vshrl.u32 %v1067, 7
          %v1069 = vsub.s32 %v1066, %v1068
          %v1070 = vrot.slane %v1063, %v1069
          %v1071 = vcombine.high %v1070, 0
          %v1072 = vcombine.low %v1021, %v1037
          %v1074 = vunpack.c.l.s4 1983009808
          %v1075 = vunpack.c.0.s8 %v1074
          %v1076 = vlaneseq
          %v1077 = vshrl.u32 %v1076, 7
          %v1078 = vsub.s32 %v1075, %v1077
          %v1079 = vrot.slane %v1072, %v1078
          %v1080 = vcombine.low %v1029, %v1045
          %v1082 = vunpack.c.l.s4 1983009808
          %v1083 = vunpack.c.0.s8 %v1082
          %v1084 = vlaneseq
          %v1085 = vshrl.u32 %v1084, 7
          %v1086 = vsub.s32 %v1083, %v1085
          %v1087 = vrot.slane %v1080, %v1086
          %v1088 = vcombine.low %v1079, %v1087
          %v1090 = vunpack.c.l.s4 1934713408
          %v1091 = vunpack.c.0.s8 %v1090
          %v1092 = vlaneseq
          %v1093 = vshrl.u32 %v1092, 7
          %v1094 = vsub.s32 %v1091, %v1093
          %v1095 = vrot.slane %v1088, %v1094
          %v1096 = vcombine.high %v1095, 0
          %v1099 = vpack.i.b16 %v1095, %v1070
          %v1101 = vshrl.u32 %v1070, 16
          %v1102 = vshrl.u32 %v1095, 16
          %v1103 = vpack.i.b16 %v1102, %v1101
          %v1107 = vpack.i.b16 %v1096, %v1071
          %v1109 = vshrl.u32 %v1071, 16
          %v1110 = vshrl.u32 %v1096, 16
          %v1111 = vpack.i.b16 %v1110, %v1109
          %1113 = vst.msk [vmem:[#allocation3] sm:$0xf] %vm935, %v1099
          %1114 = vst.msk [vmem:[#allocation3 + $0x4] sm:$0xf] %vm935, %v1103
          %1115 = vst.msk [vmem:[#allocation3 + $0x8] sm:$0xf] %vm935, %v1107
          %1116 = vst.msk [vmem:[#allocation3 + $0xc] sm:$0xf] %vm935, %v1111
        $region112: #{tpu_custom_call.1} parent=87 // pred_fallthru
          _
        %s1117 = smul.u32 %s39, 8
        %s1118 = scalar_lea.vmem %s624, %s1117
        %v1119 = vld [vmem:[%s1118] sm:$0xff]
        %v1120 = vpack.c.bf16 %v1119, %v1119
        %v1121 = vld [vmem:[%s1] sm:$0xf]
        %v1122 = vld [vmem:[%s1 + $0x4] sm:$0xf]
        %v1123 = vld [vmem:[%s1 + $0x8] sm:$0xf]
        %v1124 = vld [vmem:[%s1 + $0xc] sm:$0xf]
        %v1125 = vld [vmem:[%s4] sm:$0x1]
        %v1127 = vlaneseq
        %v1128 = vshrl.u32 %v1127, 7
        %v1129 = vsub.s32 0, %v1128
        %v1130 = vrot.slane %v1125, %v1129
        %v1136 = vunpack.c.l.b16 %v1121
        %v1137 = vunpack.c.l.b16 %v1122
        %v1138 = vunpack.c.l.b16 %v1123
        %v1139 = vunpack.c.l.b16 %v1124
        %v1140 = vpack.c.b16 %v1137, %v1136
        %v1141 = vpack.c.b16 %v1139, %v1138
        %vm1144 = vcmask 261120
        %v1146 = vsel %vm1144, %v1120, 0
        %1148 = vmatprep.subr.bf16.mxu0 0
        %1149 = vmatpush1.bf16.msra.mxu0 %v1140
        %1150 = vmatprep.subr.bf16.mxu0 0
        %1151 = vmatpush1.bf16.msra.mxu0 %v1141
        %1152 = vmatprep.subr.bf16.mxu0 0
        %1153 = vmatpush1.bf16.msra.mxu0 0
        %1154 = vmatprep.subr.bf16.mxu0 0
        %1155 = vmatpush1.bf16.msra.mxu0 0
        %1156 = vmatprep.subr.bf16.mxu0 0
        %1157 = vmatpush1.bf16.msra.mxu0 0
        %1158 = vmatprep.subr.bf16.mxu0 0
        %1159 = vmatpush1.bf16.msra.mxu0 0
        %1160 = vmatprep.subr.bf16.mxu0 0
        %1161 = vmatpush1.bf16.msra.mxu0 0
        %1162 = vmatprep.subr.bf16.mxu0 0
        %1163 = vmatpush1.bf16.msra.mxu0 0
        %1164 = vmatprep.subr.bf16.mxu0 0
        %1165 = vmatpush1.bf16.msra.mxu0 0
        %1166 = vmatprep.subr.bf16.mxu0 0
        %1167 = vmatpush1.bf16.msra.mxu0 0
        %1168 = vmatprep.subr.bf16.mxu0 0
        %1169 = vmatpush1.bf16.msra.mxu0 0
        %1170 = vmatprep.subr.bf16.mxu0 0
        %1171 = vmatpush1.bf16.msra.mxu0 0
        %1172 = vmatprep.subr.bf16.mxu0 0
        %1173 = vmatpush1.bf16.msra.mxu0 0
        %1174 = vmatprep.subr.bf16.mxu0 0
        %1175 = vmatpush1.bf16.msra.mxu0 0
        %1176 = vmatprep.subr.bf16.mxu0 0
        %1177 = vmatpush1.bf16.msra.mxu0 0
        %1178 = vmatprep.subr.bf16.mxu0 0
        %1179 = vmatpush1.bf16.msra.mxu0 0
        %1180 = vmatprep.mubr.bf16.mxu0 0
        %1181 = vmatmul.mubr.bf16.gmra.mrb[0].mxu0 %v1146
        %v1182 = vpop.f32.mrb[0].mxu0
        %v1183 = vadd.f32 %v1130, %v1182
        %v1184 = vpop.f32.mrb[0].mxu0
        %v1185 = vpop.f32.mrb[0].mxu0
        %v1186 = vpop.f32.mrb[0].mxu0
        %1187 = vdwg.mxu0
        %v1188 = vpack.c.bf16 %v1183, %v1183
        %1190 = vrot.lane.b32.xlu0 %v1188, 120
        %v1191 = vpop.permute.xlu0 %1190
        %1192 = vrot.lane.b32.xlu0 %v1188, 112
        %v1193 = vpop.permute.xlu0 %1192
        %1194 = vrot.lane.b32.xlu0 %v1188, 104
        %v1195 = vpop.permute.xlu0 %1194
        %v1197 = vunpack.c.l.s4 1983009808
        %v1198 = vunpack.c.0.s8 %v1197
        %v1199 = vlaneseq
        %v1200 = vshrl.u32 %v1199, 7
        %v1201 = vsub.s32 %v1198, %v1200
        %v1202 = vrot.slane %v1188, %v1201
        %v1205 = vunpack.c.l.s4 1983009808
        %v1206 = vunpack.c.0.s8 %v1205
        %v1207 = vlaneseq
        %v1208 = vshrl.u32 %v1207, 7
        %v1209 = vsub.s32 %v1206, %v1208
        %v1210 = vrot.slane %v1193, %v1209
        %v1211 = vcombine.low %v1202, %v1210
        %v1212 = vcombine.high %v1202, %v1210
        %v1214 = vunpack.c.l.s4 1934713408
        %v1215 = vunpack.c.0.s8 %v1214
        %v1216 = vlaneseq
        %v1217 = vshrl.u32 %v1216, 7
        %v1218 = vsub.s32 %v1215, %v1217
        %v1219 = vrot.slane %v1211, %v1218
        %v1221 = vunpack.c.l.s4 1934713408
        %v1222 = vunpack.c.0.s8 %v1221
        %v1223 = vlaneseq
        %v1224 = vshrl.u32 %v1223, 7
        %v1225 = vsub.s32 %v1222, %v1224
        %v1226 = vrot.slane %v1212, %v1225
        %v1227 = vcombine.high %v1219, 0
        %v1228 = vcombine.high %v1226, 0
        %v1231 = vunpack.c.l.s4 1983009808
        %v1232 = vunpack.c.0.s8 %v1231
        %v1233 = vlaneseq
        %v1234 = vshrl.u32 %v1233, 7
        %v1235 = vsub.s32 %v1232, %v1234
        %v1236 = vrot.slane %v1191, %v1235
        %v1239 = vunpack.c.l.s4 1983009808
        %v1240 = vunpack.c.0.s8 %v1239
        %v1241 = vlaneseq
        %v1242 = vshrl.u32 %v1241, 7
        %v1243 = vsub.s32 %v1240, %v1242
        %v1244 = vrot.slane %v1195, %v1243
        %v1245 = vcombine.low %v1236, %v1244
        %v1246 = vcombine.high %v1236, %v1244
        %v1248 = vunpack.c.l.s4 1934713408
        %v1249 = vunpack.c.0.s8 %v1248
        %v1250 = vlaneseq
        %v1251 = vshrl.u32 %v1250, 7
        %v1252 = vsub.s32 %v1249, %v1251
        %v1253 = vrot.slane %v1245, %v1252
        %v1255 = vunpack.c.l.s4 1934713408
        %v1256 = vunpack.c.0.s8 %v1255
        %v1257 = vlaneseq
        %v1258 = vshrl.u32 %v1257, 7
        %v1259 = vsub.s32 %v1256, %v1258
        %v1260 = vrot.slane %v1246, %v1259
        %v1261 = vcombine.high %v1253, 0
        %v1262 = vcombine.high %v1260, 0
        %v1265 = vpack.i.b16 %v1253, %v1219
        %v1267 = vshrl.u32 %v1219, 16
        %v1268 = vshrl.u32 %v1253, 16
        %v1269 = vpack.i.b16 %v1268, %v1267
        %v1273 = vpack.i.b16 %v1261, %v1227
        %v1275 = vshrl.u32 %v1227, 16
        %v1276 = vshrl.u32 %v1261, 16
        %v1277 = vpack.i.b16 %v1276, %v1275
        %v1281 = vpack.i.b16 %v1260, %v1226
        %v1283 = vshrl.u32 %v1226, 16
        %v1284 = vshrl.u32 %v1260, 16
        %v1285 = vpack.i.b16 %v1284, %v1283
        %v1289 = vpack.i.b16 %v1262, %v1228
        %v1291 = vshrl.u32 %v1228, 16
        %v1292 = vshrl.u32 %v1262, 16
        %v1293 = vpack.i.b16 %v1292, %v1291
        %v1295 = vcombine.low %v1265, %v1281
        %v1297 = vunpack.c.l.s4 1983009808
        %v1298 = vunpack.c.0.s8 %v1297
        %v1299 = vlaneseq
        %v1300 = vshrl.u32 %v1299, 7
        %v1301 = vsub.s32 %v1298, %v1300
        %v1302 = vrot.slane %v1295, %v1301
        %v1303 = vcombine.low %v1273, %v1289
        %v1305 = vunpack.c.l.s4 1983009808
        %v1306 = vunpack.c.0.s8 %v1305
        %v1307 = vlaneseq
        %v1308 = vshrl.u32 %v1307, 7
        %v1309 = vsub.s32 %v1306, %v1308
        %v1310 = vrot.slane %v1303, %v1309
        %v1311 = vcombine.low %v1302, %v1310
        %v1313 = vunpack.c.l.s4 1934713408
        %v1314 = vunpack.c.0.s8 %v1313
        %v1315 = vlaneseq
        %v1316 = vshrl.u32 %v1315, 7
        %v1317 = vsub.s32 %v1314, %v1316
        %v1318 = vrot.slane %v1311, %v1317
        %v1319 = vcombine.high %v1318, 0
        %v1320 = vcombine.low %v1269, %v1285
        %v1322 = vunpack.c.l.s4 1983009808
        %v1323 = vunpack.c.0.s8 %v1322
        %v1324 = vlaneseq
        %v1325 = vshrl.u32 %v1324, 7
        %v1326 = vsub.s32 %v1323, %v1325
        %v1327 = vrot.slane %v1320, %v1326
        %v1328 = vcombine.low %v1277, %v1293
        %v1330 = vunpack.c.l.s4 1983009808
        %v1331 = vunpack.c.0.s8 %v1330
        %v1332 = vlaneseq
        %v1333 = vshrl.u32 %v1332, 7
        %v1334 = vsub.s32 %v1331, %v1333
        %v1335 = vrot.slane %v1328, %v1334
        %v1336 = vcombine.low %v1327, %v1335
        %v1338 = vunpack.c.l.s4 1934713408
        %v1339 = vunpack.c.0.s8 %v1338
        %v1340 = vlaneseq
        %v1341 = vshrl.u32 %v1340, 7
        %v1342 = vsub.s32 %v1339, %v1341
        %v1343 = vrot.slane %v1336, %v1342
        %v1344 = vcombine.high %v1343, 0
        %v1347 = vpack.i.b16 %v1343, %v1318
        %v1348 = vshrl.u32 %v1318, 16
        %v1349 = vshrl.u32 %v1343, 16
        %v1350 = vpack.i.b16 %v1349, %v1348
        %v1353 = vpack.i.b16 %v1344, %v1319
        %v1354 = vshrl.u32 %v1319, 16
        %v1355 = vshrl.u32 %v1344, 16
        %v1356 = vpack.i.b16 %v1355, %v1354
        %v1357 = vld [vmem:[#allocation2] sm:$0xf]
        %v1358 = vld [vmem:[#allocation2 + $0x4] sm:$0xf]
        %v1359 = vld [vmem:[#allocation2 + $0x8] sm:$0xf]
        %v1360 = vld [vmem:[#allocation2 + $0xc] sm:$0xf]
        %v1361 = vld [vmem:[#allocation3] sm:$0xf]
        %v1362 = vld [vmem:[#allocation3 + $0x4] sm:$0xf]
        %v1363 = vld [vmem:[#allocation3 + $0x8] sm:$0xf]
        %v1364 = vld [vmem:[#allocation3 + $0xc] sm:$0xf]
        %vm1365 = vcmask 64512
        %v1367 = vsel %vm1365, %v1347, 0
        %v1370 = vsel %vm1365, %v1357, 0
        %1372 = vmatprep.subr.bf16.mxu0 0
        %1373 = vmatpush1.bf16.xpose.msra.mxu0 %v1370
        %1374 = vmatprep.subr.bf16.mxu0 0
        %1375 = vmatpush1.bf16.xpose.msra.mxu0 0
        %1376 = vmatprep.subr.bf16.mxu0 0
        %1377 = vmatpush1.bf16.xpose.msra.mxu0 0
        %1378 = vmatprep.subr.bf16.mxu0 0
        %1379 = vmatpush1.bf16.xpose.msra.mxu0 0
        %1380 = vmatprep.subr.bf16.mxu0 0
        %1381 = vmatpush1.bf16.xpose.msra.mxu0 0
        %1382 = vmatprep.subr.bf16.mxu0 0
        %1383 = vmatpush1.bf16.xpose.msra.mxu0 0
        %1384 = vmatprep.subr.bf16.mxu0 0
        %1385 = vmatpush1.bf16.xpose.msra.mxu0 0
        %1386 = vmatprep.subr.bf16.mxu0 0
        %1387 = vmatpush1.bf16.xpose.msra.mxu0 0
        %1388 = vmatprep.subr.bf16.mxu0 0
        %1389 = vmatpush1.bf16.xpose.msra.mxu0 0
        %1390 = vmatprep.subr.bf16.mxu0 0
        %1391 = vmatpush1.bf16.xpose.msra.mxu0 0
        %1392 = vmatprep.subr.bf16.mxu0 0
        %1393 = vmatpush1.bf16.xpose.msra.mxu0 0
        %1394 = vmatprep.subr.bf16.mxu0 0
        %1395 = vmatpush1.bf16.xpose.msra.mxu0 0
        %1396 = vmatprep.subr.bf16.mxu0 0
        %1397 = vmatpush1.bf16.xpose.msra.mxu0 0
        %1398 = vmatprep.subr.bf16.mxu0 0
        %1399 = vmatpush1.bf16.xpose.msra.mxu0 0
        %1400 = vmatprep.subr.bf16.mxu0 0
        %1401 = vmatpush1.bf16.xpose.msra.mxu0 0
        %1402 = vmatprep.subr.bf16.mxu0 0
        %1403 = vmatpush1.bf16.xpose.msra.mxu0 0
        %1404 = vmatprep.mubr.bf16.mxu0 0
        %1405 = vmatmul.mubr.bf16.gmra.mrb[0].mxu0 %v1367
        %v1406 = vpop.f32.mrb[0].mxu0
        %v1407 = vadd.f32 0.0, %v1406
        %v1408 = vpop.f32.mrb[0].mxu0
        %v1409 = vpop.f32.mrb[0].mxu0
        %v1410 = vpop.f32.mrb[0].mxu0
        %1411 = vdwg.mxu0
        %v1413 = vsel %vm1365, %v1350, 0
        %v1416 = vsel %vm1365, %v1358, 0
        %1418 = vmatprep.subr.bf16.mxu0 0
        %1419 = vmatpush1.bf16.xpose.msra.mxu0 %v1416
        %1420 = vmatprep.subr.bf16.mxu0 0
        %1421 = vmatpush1.bf16.xpose.msra.mxu0 0
        %1422 = vmatprep.subr.bf16.mxu0 0
        %1423 = vmatpush1.bf16.xpose.msra.mxu0 0
        %1424 = vmatprep.subr.bf16.mxu0 0
        %1425 = vmatpush1.bf16.xpose.msra.mxu0 0
        %1426 = vmatprep.subr.bf16.mxu0 0
        %1427 = vmatpush1.bf16.xpose.msra.mxu0 0
        %1428 = vmatprep.subr.bf16.mxu0 0
        %1429 = vmatpush1.bf16.xpose.msra.mxu0 0
        %1430 = vmatprep.subr.bf16.mxu0 0
        %1431 = vmatpush1.bf16.xpose.msra.mxu0 0
        %1432 = vmatprep.subr.bf16.mxu0 0
        %1433 = vmatpush1.bf16.xpose.msra.mxu0 0
        %1434 = vmatprep.subr.bf16.mxu0 0
        %1435 = vmatpush1.bf16.xpose.msra.mxu0 0
        %1436 = vmatprep.subr.bf16.mxu0 0
        %1437 = vmatpush1.bf16.xpose.msra.mxu0 0
        %1438 = vmatprep.subr.bf16.mxu0 0
        %1439 = vmatpush1.bf16.xpose.msra.mxu0 0
        %1440 = vmatprep.subr.bf16.mxu0 0
        %1441 = vmatpush1.bf16.xpose.msra.mxu0 0
        %1442 = vmatprep.subr.bf16.mxu0 0
        %1443 = vmatpush1.bf16.xpose.msra.mxu0 0
        %1444 = vmatprep.subr.bf16.mxu0 0
        %1445 = vmatpush1.bf16.xpose.msra.mxu0 0
        %1446 = vmatprep.subr.bf16.mxu0 0
        %1447 = vmatpush1.bf16.xpose.msra.mxu0 0
        %1448 = vmatprep.subr.bf16.mxu0 0
        %1449 = vmatpush1.bf16.xpose.msra.mxu0 0
        %1450 = vmatprep.mubr.bf16.mxu0 0
        %1451 = vmatmul.mubr.bf16.gmra.mrb[0].mxu0 %v1413
        %v1452 = vpop.f32.mrb[0].mxu0
        %v1453 = vadd.f32 0.0, %v1452
        %v1454 = vpop.f32.mrb[0].mxu0
        %v1455 = vpop.f32.mrb[0].mxu0
        %v1456 = vpop.f32.mrb[0].mxu0
        %1457 = vdwg.mxu0
        %v1459 = vsel %vm1365, %v1353, 0
        %v1462 = vsel %vm1365, %v1359, 0
        %1464 = vmatprep.subr.bf16.mxu0 0
        %1465 = vmatpush1.bf16.xpose.msra.mxu0 %v1462
        %1466 = vmatprep.subr.bf16.mxu0 0
        %1467 = vmatpush1.bf16.xpose.msra.mxu0 0
        %1468 = vmatprep.subr.bf16.mxu0 0
        %1469 = vmatpush1.bf16.xpose.msra.mxu0 0
        %1470 = vmatprep.subr.bf16.mxu0 0
        %1471 = vmatpush1.bf16.xpose.msra.mxu0 0
        %1472 = vmatprep.subr.bf16.mxu0 0
        %1473 = vmatpush1.bf16.xpose.msra.mxu0 0
        %1474 = vmatprep.subr.bf16.mxu0 0
        %1475 = vmatpush1.bf16.xpose.msra.mxu0 0
        %1476 = vmatprep.subr.bf16.mxu0 0
        %1477 = vmatpush1.bf16.xpose.msra.mxu0 0
        %1478 = vmatprep.subr.bf16.mxu0 0
        %1479 = vmatpush1.bf16.xpose.msra.mxu0 0
        %1480 = vmatprep.subr.bf16.mxu0 0
        %1481 = vmatpush1.bf16.xpose.msra.mxu0 0
        %1482 = vmatprep.subr.bf16.mxu0 0
        %1483 = vmatpush1.bf16.xpose.msra.mxu0 0
        %1484 = vmatprep.subr.bf16.mxu0 0
        %1485 = vmatpush1.bf16.xpose.msra.mxu0 0
        %1486 = vmatprep.subr.bf16.mxu0 0
        %1487 = vmatpush1.bf16.xpose.msra.mxu0 0
        %1488 = vmatprep.subr.bf16.mxu0 0
        %1489 = vmatpush1.bf16.xpose.msra.mxu0 0
        %1490 = vmatprep.subr.bf16.mxu0 0
        %1491 = vmatpush1.bf16.xpose.msra.mxu0 0
        %1492 = vmatprep.subr.bf16.mxu0 0
        %1493 = vmatpush1.bf16.xpose.msra.mxu0 0
        %1494 = vmatprep.subr.bf16.mxu0 0
        %1495 = vmatpush1.bf16.xpose.msra.mxu0 0
        %1496 = vmatprep.mubr.bf16.mxu0 0
        %1497 = vmatmul.mubr.bf16.gmra.mrb[0].mxu0 %v1459
        %v1498 = vpop.f32.mrb[0].mxu0
        %v1499 = vadd.f32 0.0, %v1498
        %v1500 = vpop.f32.mrb[0].mxu0
        %v1501 = vpop.f32.mrb[0].mxu0
        %v1502 = vpop.f32.mrb[0].mxu0
        %1503 = vdwg.mxu0
        %v1505 = vsel %vm1365, %v1356, 0
        %v1508 = vsel %vm1365, %v1360, 0
        %1510 = vmatprep.subr.bf16.mxu0 0
        %1511 = vmatpush1.bf16.xpose.msra.mxu0 %v1508
        %1512 = vmatprep.subr.bf16.mxu0 0
        %1513 = vmatpush1.bf16.xpose.msra.mxu0 0
        %1514 = vmatprep.subr.bf16.mxu0 0
        %1515 = vmatpush1.bf16.xpose.msra.mxu0 0
        %1516 = vmatprep.subr.bf16.mxu0 0
        %1517 = vmatpush1.bf16.xpose.msra.mxu0 0
        %1518 = vmatprep.subr.bf16.mxu0 0
        %1519 = vmatpush1.bf16.xpose.msra.mxu0 0
        %1520 = vmatprep.subr.bf16.mxu0 0
        %1521 = vmatpush1.bf16.xpose.msra.mxu0 0
        %1522 = vmatprep.subr.bf16.mxu0 0
        %1523 = vmatpush1.bf16.xpose.msra.mxu0 0
        %1524 = vmatprep.subr.bf16.mxu0 0
        %1525 = vmatpush1.bf16.xpose.msra.mxu0 0
        %1526 = vmatprep.subr.bf16.mxu0 0
        %1527 = vmatpush1.bf16.xpose.msra.mxu0 0
        %1528 = vmatprep.subr.bf16.mxu0 0
        %1529 = vmatpush1.bf16.xpose.msra.mxu0 0
        %1530 = vmatprep.subr.bf16.mxu0 0
        %1531 = vmatpush1.bf16.xpose.msra.mxu0 0
        %1532 = vmatprep.subr.bf16.mxu0 0
        %1533 = vmatpush1.bf16.xpose.msra.mxu0 0
        %1534 = vmatprep.subr.bf16.mxu0 0
        %1535 = vmatpush1.bf16.xpose.msra.mxu0 0
        %1536 = vmatprep.subr.bf16.mxu0 0
        %1537 = vmatpush1.bf16.xpose.msra.mxu0 0
        %1538 = vmatprep.subr.bf16.mxu0 0
        %1539 = vmatpush1.bf16.xpose.msra.mxu0 0
        %1540 = vmatprep.subr.bf16.mxu0 0
        %1541 = vmatpush1.bf16.xpose.msra.mxu0 0
        %1542 = vmatprep.mubr.bf16.mxu0 0
        %1543 = vmatmul.mubr.bf16.gmra.mrb[0].mxu0 %v1505
        %v1544 = vpop.f32.mrb[0].mxu0
        %v1545 = vadd.f32 0.0, %v1544
        %v1546 = vpop.f32.mrb[0].mxu0
        %v1547 = vpop.f32.mrb[0].mxu0
        %v1548 = vpop.f32.mrb[0].mxu0
        %1549 = vdwg.mxu0
        %v1550 = vsel %vm1365, %v1407, -inf
        %1551 = vmax.xlane.f32.xlu0 %v1550
        %v1552 = vpop.xlane.xlu0 %1551
        %v1553 = vsel %vm1365, %v1453, -inf
        %1554 = vmax.xlane.f32.xlu0 %v1553
        %v1555 = vpop.xlane.xlu0 %1554
        %v1556 = vsel %vm1365, %v1499, -inf
        %1557 = vmax.xlane.f32.xlu0 %v1556
        %v1558 = vpop.xlane.xlu0 %1557
        %v1559 = vsel %vm1365, %v1545, -inf
        %1560 = vmax.xlane.f32.xlu0 %v1559
        %v1561 = vpop.xlane.xlu0 %1560
        %v1562 = vsub.f32 %v1407, %v1552
        %v1563 = vsub.f32 %v1453, %v1555
        %v1564 = vsub.f32 %v1499, %v1558
        %v1565 = vsub.f32 %v1545, %v1561
        %v1566 = vmul.f32 %v1562, 1.442695
        %v1567 = vpow.pop %v1566
        %v1568 = vmul.f32 %v1563, 1.442695
        %v1569 = vpow.pop %v1568
        %v1570 = vmul.f32 %v1564, 1.442695
        %v1571 = vpow.pop %v1570
        %v1572 = vmul.f32 %v1565, 1.442695
        %v1573 = vpow.pop %v1572
        %v1574 = vsel %vm1365, %v1567, 0.0
        %1575 = vadd.xlane.f32.xlu0 %v1574
        %v1576 = vpop.xlane.xlu0 %1575
        %v1577 = vsel %vm1365, %v1569, 0.0
        %1578 = vadd.xlane.f32.xlu0 %v1577
        %v1579 = vpop.xlane.xlu0 %1578
        %v1580 = vsel %vm1365, %v1571, 0.0
        %1581 = vadd.xlane.f32.xlu0 %v1580
        %v1582 = vpop.xlane.xlu0 %1581
        %v1583 = vsel %vm1365, %v1573, 0.0
        %1584 = vadd.xlane.f32.xlu0 %v1583
        %v1585 = vpop.xlane.xlu0 %1584
        %v1586 = vrcp.pop %v1576
        %v1587 = vrcp.pop %v1579
        %v1588 = vrcp.pop %v1582
        %v1589 = vrcp.pop %v1585
        %v1590 = vpack.c.bf16 %v1567, %v1567
        %v1591 = vpack.c.bf16 %v1569, %v1569
        %v1592 = vpack.c.bf16 %v1571, %v1571
        %v1593 = vpack.c.bf16 %v1573, %v1573
        %v1594 = vpack.c.bf16 %v1586, %v1586
        %v1595 = vpack.c.bf16 %v1587, %v1587
        %v1596 = vpack.c.bf16 %v1588, %v1588
        %v1597 = vpack.c.bf16 %v1589, %v1589
        %v1598 = vmul.bf16 %v1590, %v1594
        %v1599 = vmul.bf16 %v1591, %v1595
        %v1600 = vmul.bf16 %v1592, %v1596
        %v1601 = vmul.bf16 %v1593, %v1597
        %v1603 = vsel %vm1365, %v1598, 0
        %vm1605 = vcmask 1043456
        %v1607 = vsel %vm1605, %v1361, 0
        %1609 = vmatprep.subr.bf16.mxu0 0
        %1610 = vmatpush1.bf16.msra.mxu0 %v1607
        %1611 = vmatprep.subr.bf16.mxu0 0
        %1612 = vmatpush1.bf16.msra.mxu0 0
        %1613 = vmatprep.subr.bf16.mxu0 0
        %1614 = vmatpush1.bf16.msra.mxu0 0
        %1615 = vmatprep.subr.bf16.mxu0 0
        %1616 = vmatpush1.bf16.msra.mxu0 0
        %1617 = vmatprep.subr.bf16.mxu0 0
        %1618 = vmatpush1.bf16.msra.mxu0 0
        %1619 = vmatprep.subr.bf16.mxu0 0
        %1620 = vmatpush1.bf16.msra.mxu0 0
        %1621 = vmatprep.subr.bf16.mxu0 0
        %1622 = vmatpush1.bf16.msra.mxu0 0
        %1623 = vmatprep.subr.bf16.mxu0 0
        %1624 = vmatpush1.bf16.msra.mxu0 0
        %1625 = vmatprep.subr.bf16.mxu0 0
        %1626 = vmatpush1.bf16.msra.mxu0 0
        %1627 = vmatprep.subr.bf16.mxu0 0
        %1628 = vmatpush1.bf16.msra.mxu0 0
        %1629 = vmatprep.subr.bf16.mxu0 0
        %1630 = vmatpush1.bf16.msra.mxu0 0
        %1631 = vmatprep.subr.bf16.mxu0 0
        %1632 = vmatpush1.bf16.msra.mxu0 0
        %1633 = vmatprep.subr.bf16.mxu0 0
        %1634 = vmatpush1.bf16.msra.mxu0 0
        %1635 = vmatprep.subr.bf16.mxu0 0
        %1636 = vmatpush1.bf16.msra.mxu0 0
        %1637 = vmatprep.subr.bf16.mxu0 0
        %1638 = vmatpush1.bf16.msra.mxu0 0
        %1639 = vmatprep.subr.bf16.mxu0 0
        %1640 = vmatpush1.bf16.msra.mxu0 0
        %1641 = vmatprep.mubr.bf16.mxu0 0
        %1642 = vmatmul.mubr.bf16.gmra.mrb[0].mxu0 %v1603
        %v1643 = vpop.f32.mrb[0].mxu0
        %v1644 = vadd.f32 0.0, %v1643
        %v1645 = vpop.f32.mrb[0].mxu0
        %v1646 = vpop.f32.mrb[0].mxu0
        %v1647 = vpop.f32.mrb[0].mxu0
        %1648 = vdwg.mxu0
        %v1650 = vsel %vm1365, %v1599, 0
        %v1653 = vsel %vm1605, %v1362, 0
        %1655 = vmatprep.subr.bf16.mxu0 0
        %1656 = vmatpush1.bf16.msra.mxu0 %v1653
        %1657 = vmatprep.subr.bf16.mxu0 0
        %1658 = vmatpush1.bf16.msra.mxu0 0
        %1659 = vmatprep.subr.bf16.mxu0 0
        %1660 = vmatpush1.bf16.msra.mxu0 0
        %1661 = vmatprep.subr.bf16.mxu0 0
        %1662 = vmatpush1.bf16.msra.mxu0 0
        %1663 = vmatprep.subr.bf16.mxu0 0
        %1664 = vmatpush1.bf16.msra.mxu0 0
        %1665 = vmatprep.subr.bf16.mxu0 0
        %1666 = vmatpush1.bf16.msra.mxu0 0
        %1667 = vmatprep.subr.bf16.mxu0 0
        %1668 = vmatpush1.bf16.msra.mxu0 0
        %1669 = vmatprep.subr.bf16.mxu0 0
        %1670 = vmatpush1.bf16.msra.mxu0 0
        %1671 = vmatprep.subr.bf16.mxu0 0
        %1672 = vmatpush1.bf16.msra.mxu0 0
        %1673 = vmatprep.subr.bf16.mxu0 0
        %1674 = vmatpush1.bf16.msra.mxu0 0
        %1675 = vmatprep.subr.bf16.mxu0 0
        %1676 = vmatpush1.bf16.msra.mxu0 0
        %1677 = vmatprep.subr.bf16.mxu0 0
        %1678 = vmatpush1.bf16.msra.mxu0 0
        %1679 = vmatprep.subr.bf16.mxu0 0
        %1680 = vmatpush1.bf16.msra.mxu0 0
        %1681 = vmatprep.subr.bf16.mxu0 0
        %1682 = vmatpush1.bf16.msra.mxu0 0
        %1683 = vmatprep.subr.bf16.mxu0 0
        %1684 = vmatpush1.bf16.msra.mxu0 0
        %1685 = vmatprep.subr.bf16.mxu0 0
        %1686 = vmatpush1.bf16.msra.mxu0 0
        %1687 = vmatprep.mubr.bf16.mxu0 0
        %1688 = vmatmul.mubr.bf16.gmra.mrb[0].mxu0 %v1650
        %v1689 = vpop.f32.mrb[0].mxu0
        %v1690 = vadd.f32 0.0, %v1689
        %v1691 = vpop.f32.mrb[0].mxu0
        %v1692 = vpop.f32.mrb[0].mxu0
        %v1693 = vpop.f32.mrb[0].mxu0
        %1694 = vdwg.mxu0
        %v1696 = vsel %vm1365, %v1600, 0
        %v1699 = vsel %vm1605, %v1363, 0
        %1701 = vmatprep.subr.bf16.mxu0 0
        %1702 = vmatpush1.bf16.msra.mxu0 %v1699
        %1703 = vmatprep.subr.bf16.mxu0 0
        %1704 = vmatpush1.bf16.msra.mxu0 0
        %1705 = vmatprep.subr.bf16.mxu0 0
        %1706 = vmatpush1.bf16.msra.mxu0 0
        %1707 = vmatprep.subr.bf16.mxu0 0
        %1708 = vmatpush1.bf16.msra.mxu0 0
        %1709 = vmatprep.subr.bf16.mxu0 0
        %1710 = vmatpush1.bf16.msra.mxu0 0
        %1711 = vmatprep.subr.bf16.mxu0 0
        %1712 = vmatpush1.bf16.msra.mxu0 0
        %1713 = vmatprep.subr.bf16.mxu0 0
        %1714 = vmatpush1.bf16.msra.mxu0 0
        %1715 = vmatprep.subr.bf16.mxu0 0
        %1716 = vmatpush1.bf16.msra.mxu0 0
        %1717 = vmatprep.subr.bf16.mxu0 0
        %1718 = vmatpush1.bf16.msra.mxu0 0
        %1719 = vmatprep.subr.bf16.mxu0 0
        %1720 = vmatpush1.bf16.msra.mxu0 0
        %1721 = vmatprep.subr.bf16.mxu0 0
        %1722 = vmatpush1.bf16.msra.mxu0 0
        %1723 = vmatprep.subr.bf16.mxu0 0
        %1724 = vmatpush1.bf16.msra.mxu0 0
        %1725 = vmatprep.subr.bf16.mxu0 0
        %1726 = vmatpush1.bf16.msra.mxu0 0
        %1727 = vmatprep.subr.bf16.mxu0 0
        %1728 = vmatpush1.bf16.msra.mxu0 0
        %1729 = vmatprep.subr.bf16.mxu0 0
        %1730 = vmatpush1.bf16.msra.mxu0 0
        %1731 = vmatprep.subr.bf16.mxu0 0
        %1732 = vmatpush1.bf16.msra.mxu0 0
        %1733 = vmatprep.mubr.bf16.mxu0 0
        %1734 = vmatmul.mubr.bf16.gmra.mrb[0].mxu0 %v1696
        %v1735 = vpop.f32.mrb[0].mxu0
        %v1736 = vadd.f32 0.0, %v1735
        %v1737 = vpop.f32.mrb[0].mxu0
        %v1738 = vpop.f32.mrb[0].mxu0
        %v1739 = vpop.f32.mrb[0].mxu0
        %1740 = vdwg.mxu0
        %v1742 = vsel %vm1365, %v1601, 0
        %v1745 = vsel %vm1605, %v1364, 0
        %1747 = vmatprep.subr.bf16.mxu0 0
        %1748 = vmatpush1.bf16.msra.mxu0 %v1745
        %1749 = vmatprep.subr.bf16.mxu0 0
        %1750 = vmatpush1.bf16.msra.mxu0 0
        %1751 = vmatprep.subr.bf16.mxu0 0
        %1752 = vmatpush1.bf16.msra.mxu0 0
        %1753 = vmatprep.subr.bf16.mxu0 0
        %1754 = vmatpush1.bf16.msra.mxu0 0
        %1755 = vmatprep.subr.bf16.mxu0 0
        %1756 = vmatpush1.bf16.msra.mxu0 0
        %1757 = vmatprep.subr.bf16.mxu0 0
        %1758 = vmatpush1.bf16.msra.mxu0 0
        %1759 = vmatprep.subr.bf16.mxu0 0
        %1760 = vmatpush1.bf16.msra.mxu0 0
        %1761 = vmatprep.subr.bf16.mxu0 0
        %1762 = vmatpush1.bf16.msra.mxu0 0
        %1763 = vmatprep.subr.bf16.mxu0 0
        %1764 = vmatpush1.bf16.msra.mxu0 0
        %1765 = vmatprep.subr.bf16.mxu0 0
        %1766 = vmatpush1.bf16.msra.mxu0 0
        %1767 = vmatprep.subr.bf16.mxu0 0
        %1768 = vmatpush1.bf16.msra.mxu0 0
        %1769 = vmatprep.subr.bf16.mxu0 0
        %1770 = vmatpush1.bf16.msra.mxu0 0
        %1771 = vmatprep.subr.bf16.mxu0 0
        %1772 = vmatpush1.bf16.msra.mxu0 0
        %1773 = vmatprep.subr.bf16.mxu0 0
        %1774 = vmatpush1.bf16.msra.mxu0 0
        %1775 = vmatprep.subr.bf16.mxu0 0
        %1776 = vmatpush1.bf16.msra.mxu0 0
        %1777 = vmatprep.subr.bf16.mxu0 0
        %1778 = vmatpush1.bf16.msra.mxu0 0
        %1779 = vmatprep.mubr.bf16.mxu0 0
        %1780 = vmatmul.mubr.bf16.gmra.mrb[0].mxu0 %v1742
        %v1781 = vpop.f32.mrb[0].mxu0
        %v1782 = vadd.f32 0.0, %v1781
        %v1783 = vpop.f32.mrb[0].mxu0
        %v1784 = vpop.f32.mrb[0].mxu0
        %v1785 = vpop.f32.mrb[0].mxu0
        %1786 = vdwg.mxu0
        %v1787 = vcombine.low %v1644, %v1736
        %v1788 = vcombine.high %v1644, %v1736
        %v1790 = vunpack.c.l.s4 1983009808
        %v1791 = vunpack.c.0.s8 %v1790
        %v1792 = vlaneseq
        %v1793 = vshrl.u32 %v1792, 7
        %v1794 = vsub.s32 %v1791, %v1793
        %v1795 = vrot.slane %v1787, %v1794
        %v1797 = vunpack.c.l.s4 1983009808
        %v1798 = vunpack.c.0.s8 %v1797
        %v1799 = vlaneseq
        %v1800 = vshrl.u32 %v1799, 7
        %v1801 = vsub.s32 %v1798, %v1800
        %v1802 = vrot.slane %v1788, %v1801
        %v1803 = vcombine.low %v1690, %v1782
        %v1804 = vcombine.high %v1690, %v1782
        %v1806 = vunpack.c.l.s4 1983009808
        %v1807 = vunpack.c.0.s8 %v1806
        %v1808 = vlaneseq
        %v1809 = vshrl.u32 %v1808, 7
        %v1810 = vsub.s32 %v1807, %v1809
        %v1811 = vrot.slane %v1803, %v1810
        %v1813 = vunpack.c.l.s4 1983009808
        %v1814 = vunpack.c.0.s8 %v1813
        %v1815 = vlaneseq
        %v1816 = vshrl.u32 %v1815, 7
        %v1817 = vsub.s32 %v1814, %v1816
        %v1818 = vrot.slane %v1804, %v1817
        %v1819 = vcombine.low %v1795, %v1811
        %v1820 = vcombine.high %v1795, %v1811
        %v1822 = vunpack.c.l.s4 1934713408
        %v1823 = vunpack.c.0.s8 %v1822
        %v1824 = vlaneseq
        %v1825 = vshrl.u32 %v1824, 7
        %v1826 = vsub.s32 %v1823, %v1825
        %v1827 = vrot.slane %v1819, %v1826
        %v1829 = vunpack.c.l.s4 1934713408
        %v1830 = vunpack.c.0.s8 %v1829
        %v1831 = vlaneseq
        %v1832 = vshrl.u32 %v1831, 7
        %v1833 = vsub.s32 %v1830, %v1832
        %v1834 = vrot.slane %v1820, %v1833
        %v1835 = vcombine.low %v1802, %v1818
        %v1836 = vcombine.high %v1802, %v1818
        %v1838 = vunpack.c.l.s4 1934713408
        %v1839 = vunpack.c.0.s8 %v1838
        %v1840 = vlaneseq
        %v1841 = vshrl.u32 %v1840, 7
        %v1842 = vsub.s32 %v1839, %v1841
        %v1843 = vrot.slane %v1835, %v1842
        %v1845 = vunpack.c.l.s4 1934713408
        %v1846 = vunpack.c.0.s8 %v1845
        %v1847 = vlaneseq
        %v1848 = vshrl.u32 %v1847, 7
        %v1849 = vsub.s32 %v1846, %v1848
        %v1850 = vrot.slane %v1836, %v1849
        %v1851 = vcombine.high %v1827, 0.0
        %v1852 = vcombine.high %v1834, 0.0
        %v1853 = vcombine.high %v1843, 0.0
        %v1854 = vcombine.high %v1850, 0.0
        %v1855 = vcombine.low %v1827, %v1834
        %v1857 = vunpack.c.l.s4 1983009808
        %v1858 = vunpack.c.0.s8 %v1857
        %v1859 = vlaneseq
        %v1860 = vshrl.u32 %v1859, 7
        %v1861 = vsub.s32 %v1858, %v1860
        %v1862 = vrot.slane %v1855, %v1861
        %v1863 = vcombine.low %v1851, %v1852
        %v1865 = vunpack.c.l.s4 1983009808
        %v1866 = vunpack.c.0.s8 %v1865
        %v1867 = vlaneseq
        %v1868 = vshrl.u32 %v1867, 7
        %v1869 = vsub.s32 %v1866, %v1868
        %v1870 = vrot.slane %v1863, %v1869
        %v1871 = vcombine.low %v1843, %v1850
        %v1873 = vunpack.c.l.s4 1983009808
        %v1874 = vunpack.c.0.s8 %v1873
        %v1875 = vlaneseq
        %v1876 = vshrl.u32 %v1875, 7
        %v1877 = vsub.s32 %v1874, %v1876
        %v1878 = vrot.slane %v1871, %v1877
        %v1879 = vcombine.low %v1853, %v1854
        %v1881 = vunpack.c.l.s4 1983009808
        %v1882 = vunpack.c.0.s8 %v1881
        %v1883 = vlaneseq
        %v1884 = vshrl.u32 %v1883, 7
        %v1885 = vsub.s32 %v1882, %v1884
        %v1886 = vrot.slane %v1879, %v1885
        %v1887 = vcombine.low %v1862, %v1870
        %v1888 = vcombine.high %v1862, %v1870
        %v1890 = vunpack.c.l.s4 1934713408
        %v1891 = vunpack.c.0.s8 %v1890
        %v1892 = vlaneseq
        %v1893 = vshrl.u32 %v1892, 7
        %v1894 = vsub.s32 %v1891, %v1893
        %v1895 = vrot.slane %v1887, %v1894
        %v1897 = vunpack.c.l.s4 1934713408
        %v1898 = vunpack.c.0.s8 %v1897
        %v1899 = vlaneseq
        %v1900 = vshrl.u32 %v1899, 7
        %v1901 = vsub.s32 %v1898, %v1900
        %v1902 = vrot.slane %v1888, %v1901
        %v1903 = vcombine.low %v1878, %v1886
        %v1904 = vcombine.high %v1878, %v1886
        %v1906 = vunpack.c.l.s4 1934713408
        %v1907 = vunpack.c.0.s8 %v1906
        %v1908 = vlaneseq
        %v1909 = vshrl.u32 %v1908, 7
        %v1910 = vsub.s32 %v1907, %v1909
        %v1911 = vrot.slane %v1903, %v1910
        %v1913 = vunpack.c.l.s4 1934713408
        %v1914 = vunpack.c.0.s8 %v1913
        %v1915 = vlaneseq
        %v1916 = vshrl.u32 %v1915, 7
        %v1917 = vsub.s32 %v1914, %v1916
        %v1918 = vrot.slane %v1904, %v1917
        %v1919 = vcombine.low %v1895, %v1911
        %v1920 = vcombine.high %v1895, %v1911
        %v1921 = vcombine.low %v1902, %v1918
        %v1922 = vcombine.high %v1902, %v1918
        %1924 = vrot.lane.b32.xlu0 %v1920, 8
        %v1925 = vpop.permute.xlu0 %1924
        %1928 = vrot.lane.b32.xlu0 %v1921, 16
        %v1929 = vpop.permute.xlu0 %1928
        %1932 = vrot.lane.b32.xlu0 %v1922, 24
        %v1933 = vpop.permute.xlu0 %1932
        %v1935 = vsel %vm1365, %v1919, %v1925
        %vm1936 = vcmask 130048
        %v1937 = vsel %vm1936, %v1935, %v1929
        %vm1938 = vcmask 195584
        %v1939 = vsel %vm1938, %v1937, %v1933
        %v1940 = vpack.c.bf16 %v1939, %v1939
        %v1941 = vld [vmem:[#allocation9] sm:$0xf]
        %v1942 = vld [vmem:[#allocation9 + $0x4] sm:$0xf]
        %v1943 = vld [vmem:[#allocation9 + $0x8] sm:$0xf]
        %v1944 = vld [vmem:[#allocation9 + $0xc] sm:$0xf]
        %v1945 = vld [vmem:[#allocation10] sm:$0x1]
        %v1947 = vlaneseq
        %v1948 = vshrl.u32 %v1947, 7
        %v1949 = vsub.s32 0, %v1948
        %v1950 = vrot.slane %v1945, %v1949
        %v1956 = vunpack.c.l.b16 %v1941
        %v1957 = vunpack.c.l.b16 %v1942
        %v1958 = vunpack.c.l.b16 %v1943
        %v1959 = vunpack.c.l.b16 %v1944
        %v1960 = vpack.c.b16 %v1957, %v1956
        %v1961 = vpack.c.b16 %v1959, %v1958
        %v1965 = vsel %vm1144, %v1940, 0
        %1967 = vmatprep.subr.bf16.mxu0 0
        %1968 = vmatpush1.bf16.msra.mxu0 %v1960
        %1969 = vmatprep.subr.bf16.mxu0 0
        %1970 = vmatpush1.bf16.msra.mxu0 %v1961
        %1971 = vmatprep.subr.bf16.mxu0 0
        %1972 = vmatpush1.bf16.msra.mxu0 0
        %1973 = vmatprep.subr.bf16.mxu0 0
        %1974 = vmatpush1.bf16.msra.mxu0 0
        %1975 = vmatprep.subr.bf16.mxu0 0
        %1976 = vmatpush1.bf16.msra.mxu0 0
        %1977 = vmatprep.subr.bf16.mxu0 0
        %1978 = vmatpush1.bf16.msra.mxu0 0
        %1979 = vmatprep.subr.bf16.mxu0 0
        %1980 = vmatpush1.bf16.msra.mxu0 0
        %1981 = vmatprep.subr.bf16.mxu0 0
        %1982 = vmatpush1.bf16.msra.mxu0 0
        %1983 = vmatprep.subr.bf16.mxu0 0
        %1984 = vmatpush1.bf16.msra.mxu0 0
        %1985 = vmatprep.subr.bf16.mxu0 0
        %1986 = vmatpush1.bf16.msra.mxu0 0
        %1987 = vmatprep.subr.bf16.mxu0 0
        %1988 = vmatpush1.bf16.msra.mxu0 0
        %1989 = vmatprep.subr.bf16.mxu0 0
        %1990 = vmatpush1.bf16.msra.mxu0 0
        %1991 = vmatprep.subr.bf16.mxu0 0
        %1992 = vmatpush1.bf16.msra.mxu0 0
        %1993 = vmatprep.subr.bf16.mxu0 0
        %1994 = vmatpush1.bf16.msra.mxu0 0
        %1995 = vmatprep.subr.bf16.mxu0 0
        %1996 = vmatpush1.bf16.msra.mxu0 0
        %1997 = vmatprep.subr.bf16.mxu0 0
        %1998 = vmatpush1.bf16.msra.mxu0 0
        %1999 = vmatprep.mubr.bf16.mxu0 0
        %2000 = vmatmul.mubr.bf16.gmra.mrb[0].mxu0 %v1965
        %v2001 = vpop.f32.mrb[0].mxu0
        %v2002 = vadd.f32 %v1950, %v2001
        %v2003 = vpop.f32.mrb[0].mxu0
        %v2004 = vpop.f32.mrb[0].mxu0
        %v2005 = vpop.f32.mrb[0].mxu0
        %2006 = vdwg.mxu0
        %v2007 = vadd.f32 %v2002, %v1119
        %v2008 = vld [vmem:[#allocation12] sm:$0x1]
        %v2009 = vld [vmem:[%s10] sm:$0x1]
        %v2010 = vsel %vm1144, %v2007, 0.0
        %2011 = vadd.xlane.f32.xlu0 %v2010
        %v2012 = vpop.xlane.xlu0 %2011
        %v2013 = vrcp.pop 32.0
        %v2014 = vmul.f32 %v2012, %v2013
        %v2015 = vsub.f32 %v2007, %v2014
        %v2016 = vmul.f32 %v2015, %v2015
        %v2017 = vsel %vm1144, %v2016, 0.0
        %2018 = vadd.xlane.f32.xlu0 %v2017
        %v2019 = vpop.xlane.xlu0 %2018
        %v2020 = vmul.f32 %v2019, %v2013
        %v2021 = vadd.f32 %v2020, 1e-05
        %v2022 = vrsqrt.pop %v2021
        %v2023 = vmul.f32 %v2015, %v2022
        %v2025 = vlaneseq
        %v2026 = vshrl.u32 %v2025, 7
        %v2027 = vsub.s32 0, %v2026
        %v2028 = vrot.slane %v2008, %v2027
        %v2030 = vmul.f32 %v2023, %v2028
        %v2032 = vlaneseq
        %v2033 = vshrl.u32 %v2032, 7
        %v2034 = vsub.s32 0, %v2033
        %v2035 = vrot.slane %v2009, %v2034
        %v2037 = vadd.f32 %v2030, %v2035
        %v2038 = vpack.c.bf16 %v2037, %v2037
        %v2039 = vld [vmem:[%s11] sm:$0xf]
        %v2040 = vld [vmem:[%s11 + $0x4] sm:$0xf]
        %v2041 = vld [vmem:[%s11 + $0x8] sm:$0xf]
        %v2042 = vld [vmem:[%s11 + $0xc] sm:$0xf]
        %v2043 = vld [vmem:[%s12] sm:$0x1]
        %v2045 = vlaneseq
        %v2046 = vshrl.u32 %v2045, 7
        %v2047 = vsub.s32 0, %v2046
        %v2048 = vrot.slane %v2043, %v2047
        %v2054 = vunpack.c.l.b16 %v2039
        %v2055 = vunpack.c.l.b16 %v2040
        %v2056 = vunpack.c.l.b16 %v2041
        %v2057 = vunpack.c.l.b16 %v2042
        %v2058 = vpack.c.b16 %v2055, %v2054
        %v2059 = vpack.c.b16 %v2057, %v2056
        %v2063 = vsel %vm1144, %v2038, 0
        %2065 = vmatprep.subr.bf16.mxu0 0
        %2066 = vmatpush1.bf16.msra.mxu0 %v2058
        %2067 = vmatprep.subr.bf16.mxu0 0
        %2068 = vmatpush1.bf16.msra.mxu0 %v2059
        %2069 = vmatprep.subr.bf16.mxu0 0
        %2070 = vmatpush1.bf16.msra.mxu0 0
        %2071 = vmatprep.subr.bf16.mxu0 0
        %2072 = vmatpush1.bf16.msra.mxu0 0
        %2073 = vmatprep.subr.bf16.mxu0 0
        %2074 = vmatpush1.bf16.msra.mxu0 0
        %2075 = vmatprep.subr.bf16.mxu0 0
        %2076 = vmatpush1.bf16.msra.mxu0 0
        %2077 = vmatprep.subr.bf16.mxu0 0
        %2078 = vmatpush1.bf16.msra.mxu0 0
        %2079 = vmatprep.subr.bf16.mxu0 0
        %2080 = vmatpush1.bf16.msra.mxu0 0
        %2081 = vmatprep.subr.bf16.mxu0 0
        %2082 = vmatpush1.bf16.msra.mxu0 0
        %2083 = vmatprep.subr.bf16.mxu0 0
        %2084 = vmatpush1.bf16.msra.mxu0 0
        %2085 = vmatprep.subr.bf16.mxu0 0
        %2086 = vmatpush1.bf16.msra.mxu0 0
        %2087 = vmatprep.subr.bf16.mxu0 0
        %2088 = vmatpush1.bf16.msra.mxu0 0
        %2089 = vmatprep.subr.bf16.mxu0 0
        %2090 = vmatpush1.bf16.msra.mxu0 0
        %2091 = vmatprep.subr.bf16.mxu0 0
        %2092 = vmatpush1.bf16.msra.mxu0 0
        %2093 = vmatprep.subr.bf16.mxu0 0
        %2094 = vmatpush1.bf16.msra.mxu0 0
        %2095 = vmatprep.subr.bf16.mxu0 0
        %2096 = vmatpush1.bf16.msra.mxu0 0
        %2097 = vmatprep.mubr.bf16.mxu0 0
        %2098 = vmatmul.mubr.bf16.gmra.mrb[0].mxu0 %v2063
        %v2099 = vpop.f32.mrb[0].mxu0
        %v2100 = vadd.f32 %v2048, %v2099
        %v2101 = vpop.f32.mrb[0].mxu0
        %v2102 = vpop.f32.mrb[0].mxu0
        %v2103 = vpop.f32.mrb[0].mxu0
        %2104 = vdwg.mxu0
        %v2105 = vmul.f32 %v2100, %v2100
        %v2106 = vmul.f32 %v2100, %v2105
        %v2107 = vmul.f32 %v2106, 0.044715
        %v2108 = vadd.f32 %v2100, %v2107
        %v2109 = vmul.f32 %v2108, 0.7978846
        %v2110 = vtanh.pop %v2109
        %v2111 = vadd.f32 %v2110, 1.0
        %v2112 = vmul.f32 %v2111, 0.5
        %v2113 = vmul.f32 %v2100, %v2112
        %v2114 = vpack.c.bf16 %v2113, %v2113
        %v2115 = vld [vmem:[%s13] sm:$0xf]
        %v2116 = vld [vmem:[%s13 + $0x4] sm:$0xf]
        %v2117 = vld [vmem:[%s13 + $0x8] sm:$0xf]
        %v2118 = vld [vmem:[%s13 + $0xc] sm:$0xf]
        %v2119 = vld [vmem:[%s13 + $0x10] sm:$0xf]
        %v2120 = vld [vmem:[%s13 + $0x14] sm:$0xf]
        %v2121 = vld [vmem:[%s13 + $0x18] sm:$0xf]
        %v2122 = vld [vmem:[%s13 + $0x1c] sm:$0xf]
        %v2123 = vld [vmem:[%s14] sm:$0x1]
        %v2125 = vlaneseq
        %v2126 = vshrl.u32 %v2125, 7
        %v2127 = vsub.s32 0, %v2126
        %v2128 = vrot.slane %v2123, %v2127
        %v2138 = vunpack.c.l.b16 %v2115
        %v2139 = vunpack.c.l.b16 %v2116
        %v2140 = vunpack.c.l.b16 %v2117
        %v2141 = vunpack.c.l.b16 %v2118
        %v2142 = vunpack.c.l.b16 %v2119
        %v2143 = vunpack.c.l.b16 %v2120
        %v2144 = vunpack.c.l.b16 %v2121
        %v2145 = vunpack.c.l.b16 %v2122
        %v2146 = vpack.c.b16 %v2139, %v2138
        %v2147 = vpack.c.b16 %v2141, %v2140
        %v2148 = vpack.c.b16 %v2143, %v2142
        %v2149 = vpack.c.b16 %v2145, %v2144
        %vm2154 = vcmask 523264
        %v2156 = vsel %vm2154, %v2114, 0
        %2158 = vmatprep.subr.bf16.mxu0 0
        %2159 = vmatpush1.bf16.msra.mxu0 %v2146
        %2160 = vmatprep.subr.bf16.mxu0 0
        %2161 = vmatpush1.bf16.msra.mxu0 %v2147
        %2162 = vmatprep.subr.bf16.mxu0 0
        %2163 = vmatpush1.bf16.msra.mxu0 %v2148
        %2164 = vmatprep.subr.bf16.mxu0 0
        %2165 = vmatpush1.bf16.msra.mxu0 %v2149
        %2166 = vmatprep.subr.bf16.mxu0 0
        %2167 = vmatpush1.bf16.msra.mxu0 0
        %2168 = vmatprep.subr.bf16.mxu0 0
        %2169 = vmatpush1.bf16.msra.mxu0 0
        %2170 = vmatprep.subr.bf16.mxu0 0
        %2171 = vmatpush1.bf16.msra.mxu0 0
        %2172 = vmatprep.subr.bf16.mxu0 0
        %2173 = vmatpush1.bf16.msra.mxu0 0
        %2174 = vmatprep.subr.bf16.mxu0 0
        %2175 = vmatpush1.bf16.msra.mxu0 0
        %2176 = vmatprep.subr.bf16.mxu0 0
        %2177 = vmatpush1.bf16.msra.mxu0 0
        %2178 = vmatprep.subr.bf16.mxu0 0
        %2179 = vmatpush1.bf16.msra.mxu0 0
        %2180 = vmatprep.subr.bf16.mxu0 0
        %2181 = vmatpush1.bf16.msra.mxu0 0
        %2182 = vmatprep.subr.bf16.mxu0 0
        %2183 = vmatpush1.bf16.msra.mxu0 0
        %2184 = vmatprep.subr.bf16.mxu0 0
        %2185 = vmatpush1.bf16.msra.mxu0 0
        %2186 = vmatprep.subr.bf16.mxu0 0
        %2187 = vmatpush1.bf16.msra.mxu0 0
        %2188 = vmatprep.subr.bf16.mxu0 0
        %2189 = vmatpush1.bf16.msra.mxu0 0
        %2190 = vmatprep.mubr.bf16.mxu0 0
        %2191 = vmatmul.mubr.bf16.gmra.mrb[0].mxu0 %v2156
        %v2192 = vpop.f32.mrb[0].mxu0
        %v2193 = vadd.f32 %v2128, %v2192
        %v2194 = vpop.f32.mrb[0].mxu0
        %v2195 = vpop.f32.mrb[0].mxu0
        %v2196 = vpop.f32.mrb[0].mxu0
        %2197 = vdwg.mxu0
        %v2198 = vadd.f32 %v2193, %v2037
        %v2199 = vld [vmem:[%s15] sm:$0x1]
        %v2200 = vld [vmem:[%s16] sm:$0x1]
        %v2201 = vsel %vm1144, %v2198, 0.0
        %2202 = vadd.xlane.f32.xlu0 %v2201
        %v2203 = vpop.xlane.xlu0 %2202
        %v2204 = vmul.f32 %v2203, %v2013
        %v2205 = vsub.f32 %v2198, %v2204
        %v2206 = vmul.f32 %v2205, %v2205
        %v2207 = vsel %vm1144, %v2206, 0.0
        %2208 = vadd.xlane.f32.xlu0 %v2207
        %v2209 = vpop.xlane.xlu0 %2208
        %v2210 = vmul.f32 %v2209, %v2013
        %v2211 = vadd.f32 %v2210, 1e-05
        %v2212 = vrsqrt.pop %v2211
        %v2213 = vmul.f32 %v2205, %v2212
        %v2215 = vlaneseq
        %v2216 = vshrl.u32 %v2215, 7
        %v2217 = vsub.s32 0, %v2216
        %v2218 = vrot.slane %v2199, %v2217
        %v2220 = vmul.f32 %v2213, %v2218
        %v2222 = vlaneseq
        %v2223 = vshrl.u32 %v2222, 7
        %v2224 = vsub.s32 0, %v2223
        %v2225 = vrot.slane %v2200, %v2224
        %v2227 = vadd.f32 %v2220, %v2225
        %2228 = vst.msk [vmem:[%s620] sm:$0xff] %vm1144, %v2227
        %s2229 = sand.u32 %s418, 1
        %s2230 = scalar_lea.sflag [#allocation6], %s2229
        %s2231 = sand.u32 %s418, 1
        %s2232 = smul.addr %s2231, 8
        %s2233 = scalar_lea.vmem [#allocation13], %s2232
        // Predicated region
        $region113: #{tpu_custom_call.1} parent=87 // pred_check
          %p2234 = pneg %p428
        $region114: #{tpu_custom_call.1} parent=87 // pred_check_branch
          %2236 = sbr.rel (%p2234) target = $region116
        $region115: #{tpu_custom_call.1} parent=87 // pred_region
          %s2238 = ssub.s32 128, 128
          %2239 = vsyncadd %s2230, %s2238
          %s2240 = sadd.s32 %s39, %s38
          %s2241 = smul.addr %s2240, 128
          %s2242 = scalar_lea.hbm %s17, %s2241
          %s2244 = sshll.u32 %s2233, 4
          %s2245 = int_to_ptr.vmem [resolvable:$true] %s2244
          %2247 = dma.vmem_to_hbm [thread:$0]  %s2245, 128, %s2242, %s2230
        $region116: #{tpu_custom_call.1} parent=87 // pred_fallthru
          _
      $region88: #{tpu_custom_call.1} parent=5 // pred_fallthru
        _
      %p2248 = scmp.le.s32.totalorder 2, %s29
      // Predicated region
      $region117: #{tpu_custom_call.1} parent=5 // pred_check
        %p2249 = pneg %p2248
      $region118: #{tpu_custom_call.1} parent=5 // pred_check_branch
        %2251 = sbr.rel (%p2249) target = $region120
      $region119: #{tpu_custom_call.1} parent=5 // pred_region
        %s2252 = ssub.s32 %s29, 2
        // Predicated region
        $region121: #{tpu_custom_call.1} parent=119 // pred_check
          %p2253 = pneg %p434
        $region122: #{tpu_custom_call.1} parent=119 // pred_check_branch
          %2255 = sbr.rel (%p2253) target = $region124
        $region123: #{tpu_custom_call.1} parent=119 // pred_region
          %s2256 = sand.u32 %s419, 1
          %s2257 = scalar_lea.sflag [#allocation6], %s2256
          %s2258 = sand.u32 %s419, 1
          %s2259 = smul.addr %s2258, 8
          %s2260 = scalar_lea.vmem [#allocation13], %s2259
          %2261 = dma.done %s2257, 128
        $region124: #{tpu_custom_call.1} parent=119 // pred_fallthru
          _
      $region120: #{tpu_custom_call.1} parent=5 // pred_fallthru
        _
    $region6: #{tpu_custom_call.1} parent=1 // loop_footer
      %s33 = sadd.s32 1, %s29
    $region7: #{tpu_custom_call.1} parent=1 // loop_footer_branch
      %28 = sbr.rel target = $region3
    $region8: #{tpu_custom_call.1} parent=1 // loop_exit
      _
    %2262 = vsyncpa [#allocation5], 1
    %s2263 = scalar_lea.sflag [#allocation5], 1
    %2264 = vsyncpa %s2263, 1
    %2265 = vsyncpa [#allocation8], 1
    %2266 = vsyncpa [#allocation11], 1
    %2267 = vsyncpa [#allocation6], 1
    %s2268 = scalar_lea.sflag [#allocation6], 1
    %2269 = vsyncpa %s2268, 1

</llo_original>
